<compile_context>
chip_gen: v5e
topology: v5e:2x2
jax: 0.10.0
libtpu: 0.0.40
codegen_flags: <defaults>
</compile_context>

<pallas_src>
import functools
import numpy as np
import jax
import jax.numpy as jnp
from jax.experimental import pallas as pl
from jax.experimental.pallas import tpu as pltpu


def wf_kernel(fw_ref, x_ref, res_ref, wpre_ref, wk_ref, shift_ref,
              out_ref, pad_ref, *, ew_dtype):
    """One batch item: 2x upsample -> 1x1 conv -> weighted fusion -> 3x3 conv
    -> BatchNorm(eval) -> ReLU6, in a W-parity-split NHWC layout."""
    _, H, W, Cin = x_ref.shape
    _, Ho, _, C2 = res_ref.shape            # C2  = 2*Cd   (W-parity-split channels)
    C2p = out_ref.shape[-1]                  # C2p = 2*Cdp  (padded to lane multiple)
    Cd = C2 // 2
    K3 = 3 * C2

    # ---- fusion weights: ReLU + normalize (tiny scalar work on SMEM values) --
    w0 = jnp.maximum(fw_ref[0], 0.0)
    w1 = jnp.maximum(fw_ref[1], 0.0)
    inv = 1.0 / (w0 + w1 + 1e-8)
    fw_res = (w0 * inv).astype(ew_dtype)
    fw_x = (w1 * inv).astype(ew_dtype)

    # ---- zero the 1-pixel halo of the persistent padded scratch --------------
    # (cheap strips, redone every step so it stays correct even when the batch
    #  grid axis is split across TensorCores and a core never runs step 0)
    pad_ref[0:1] = jnp.zeros((1, W + 2, C2), pad_ref.dtype)
    pad_ref[Ho + 1:Ho + 2] = jnp.zeros((1, W + 2, C2), pad_ref.dtype)
    pad_ref[:, 0:1] = jnp.zeros((Ho + 2, 1, C2), pad_ref.dtype)
    pad_ref[:, W + 1:W + 2] = jnp.zeros((Ho + 2, 1, C2), pad_ref.dtype)

    # ---- 1x1 conv (pre_conv2) at LOW resolution (MXU, f32 accumulate) --------
    x_rows = x_ref[0].reshape(H * W, Cin).astype(jnp.bfloat16)
    p = jnp.dot(x_rows, wpre_ref[...], preferred_element_type=jnp.float32)
    p = p.reshape(H, W, Cd)

    # ---- bilinear 2x upsample along W (align_corners=False) ------------------
    # even output col 2w   = 0.75*p[w] + 0.25*p[w-1]   (edge clamp)
    # odd  output col 2w+1 = 0.75*p[w] + 0.25*p[w+1]   (edge clamp)
    # prev/next shifts go through the XLU (pltpu.roll) + one-column edge fixup.
    col = jax.lax.broadcasted_iota(jnp.int32, (H, W, 1), 1)
    p_prev = jnp.where(col == 0, p, pltpu.roll(p, 1, axis=1))
    p_next = jnp.where(col == W - 1, p, pltpu.roll(p, W - 1, axis=1))
    even_w = 0.75 * p + 0.25 * p_prev
    odd_w = 0.75 * p + 0.25 * p_next
    up_w = jnp.concatenate([even_w, odd_w], axis=-1).astype(ew_dtype)   # (H, W, C2)

    # ---- bilinear 2x upsample along H + weighted fusion with res -------------
    u_prev = jnp.concatenate([up_w[:1], up_w[:H - 1]], axis=0)
    u_next = jnp.concatenate([up_w[1:], up_w[H - 1:]], axis=0)
    even_h = 0.75 * up_w + 0.25 * u_prev
    odd_h = 0.75 * up_w + 0.25 * u_next
    up = jnp.stack([even_h, odd_h], axis=1).reshape(Ho, W, C2)          # row interleave

    fused = fw_res * res_ref[0].astype(ew_dtype) + fw_x * up
    # single cast point: the 3x3 conv reads the padded scratch in bf16
    pad_ref[1:Ho + 1, 1:W + 1, :] = fused.astype(pad_ref.dtype)

    # ---- 3x3 conv (pad 1): per-ky tap accumulation, K = 3*C2 per matmul ------
    acc = jnp.zeros((Ho * W, C2p), jnp.float32)
    for ky in range(3):                       # static unroll, 3 MXU calls
        slab = jnp.concatenate(
            [pad_ref[ky:ky + Ho, dw:dw + W, :] for dw in range(3)], axis=-1)
        acc = acc + jnp.dot(slab.reshape(Ho * W, K3), wk_ref[ky],
                            preferred_element_type=jnp.float32)

    # ---- BatchNorm shift (scale folded into wk) + ReLU6, lane-dense store ----
    y = jnp.clip(acc + shift_ref[...], 0.0, 6.0)
    out_ref[0] = y.reshape(Ho, W, C2p)


def _split_conv_weight(w_post, bn_scale, Cdp):
    """Assemble the 3x3 conv weight for the W-parity-split layout, per ky tap.

    w_post: (3, 3, Cd, Cd) as (kh, kw, Cin, Cout); bn_scale (Cd,) folded into
    Cout.  Returns (3, 3*2*Cd, 2*Cdp): for each ky, rows are ordered
    (dw, parity*Cd + cin) matching the in-kernel concat of the three dw
    windows; output columns are the [even-col outputs | odd-col outputs] blocks.
    """
    w = np.asarray(w_post, np.float32) * np.asarray(bn_scale, np.float32)[None, None, None, :]
    Cd = w.shape[2]
    ws = np.zeros((3, 3, 2 * Cd, 2 * Cdp), np.float32)
    for ky in range(3):
        # even output column x=2w:
        #   kx=-1 -> split col w-1 (dw=0), odd-parity input
        #   kx= 0 -> split col w   (dw=1), even-parity input
        #   kx=+1 -> split col w   (dw=1), odd-parity input
        ws[ky, 0, Cd:, :Cd] = w[ky, 0]
        ws[ky, 1, :Cd, :Cd] = w[ky, 1]
        ws[ky, 1, Cd:, :Cd] = w[ky, 2]
        # odd output column x=2w+1:
        #   kx=-1 -> split col w   (dw=1), even-parity input
        #   kx= 0 -> split col w   (dw=1), odd-parity input
        #   kx=+1 -> split col w+1 (dw=2), even-parity input
        ws[ky, 1, :Cd, Cdp:Cdp + Cd] = w[ky, 0]
        ws[ky, 1, Cd:, Cdp:Cdp + Cd] = w[ky, 1]
        ws[ky, 2, :Cd, Cdp:Cdp + Cd] = w[ky, 2]
    return ws.reshape(3, 6 * Cd, 2 * Cdp)


def wf_forward(x, res, weights, w_pre, w_post,
               bn_gamma, bn_beta, bn_mean, bn_var, bn_eps=1e-5):
    B, H, W, Cin = x.shape
    _, Ho, Wo, Cd = res.shape
    assert Ho == 2 * H and Wo == 2 * W

    # Eval-mode BatchNorm folded into per-channel scale (into the conv weight)
    # and shift.  TODO(synk): training-mode batch statistics not implemented.
    bn_scale = np.asarray(bn_gamma, np.float32) / np.sqrt(np.asarray(bn_var, np.float32) + bn_eps)
    bn_shift = np.asarray(bn_beta, np.float32) - np.asarray(bn_mean, np.float32) * bn_scale

    # Pad output channels so the parity-split store width 2*Cdp is a multiple
    # of 128 lanes; Cdp == Cd whenever Cd is a multiple of 64 (no padding, no
    # post-kernel unpad pass).  The Decoder uses Cd = 64.
    Cdp = -(-Cd // 64) * 64
    C2, C2p = 2 * Cd, 2 * Cdp

    wpre_bf = jnp.asarray(w_pre, jnp.bfloat16)                                   # (Cin, Cd)
    wk = jnp.asarray(_split_conv_weight(w_post, bn_scale, Cdp), jnp.bfloat16)    # (3, 3*C2, C2p)
    shift_split = np.zeros((1, C2p), np.float32)
    shift_split[0, :Cd] = bn_shift
    shift_split[0, Cdp:Cdp + Cd] = bn_shift
    shift_split = jnp.asarray(shift_split)

    # Parity-split view of res along W: pure metadata reshape of contiguous NHWC.
    res_split = res.reshape(B, Ho, W, C2)

    # Generation-aware knobs: f32 elementwise on v5e (no bf16 VALU), bf16 on
    # v6e/v7x; VMEM headroom on v7x (64 MiB physical per TensorCore).
    try:
        kind = jax.devices()[0].device_kind.lower()
    except Exception:
        kind = ""
    ew_dtype = jnp.float32 if "v5" in kind else jnp.bfloat16
    cp_kwargs = dict(dimension_semantics=("parallel",))
    if "v7" in kind:
        cp_kwargs["vmem_limit_bytes"] = 48 * 1024 * 1024
    elif "v5" in kind or "v6" in kind:
        cp_kwargs["vmem_limit_bytes"] = 96 * 1024 * 1024

    cost = pl.CostEstimate(
        flops=int(2 * B * Ho * W * (9 * C2) * C2p + 2 * B * H * W * Cin * Cd),
        transcendentals=0,
        bytes_accessed=int(x.size * x.dtype.itemsize + res.size * res.dtype.itemsize
                           + B * Ho * W * C2p * 4 + wk.size * 2 + wpre_bf.size * 2),
    )

    # TODO(synk): for much larger images add a row-tile grid axis with a 1-row
    # fused halo (manual DMA of the res halo rows); at this Decoder's WF sizes
    # (<= 64x64 output) whole-image per-batch blocks are ~1-2 MiB, fit every
    # generation's VMEM, and the parallel batch axis already feeds both v7x TCs.
    out = pl.pallas_call(
        functools.partial(wf_kernel, ew_dtype=ew_dtype),
        out_shape=jax.ShapeDtypeStruct((B, Ho, W, C2p), jnp.float32),
        grid_spec=pltpu.PrefetchScalarGridSpec(
            num_scalar_prefetch=0,
            grid=(B,),
            in_specs=[
                pl.BlockSpec(memory_space=pltpu.MemorySpace.SMEM),        # fusion weights (2,)
                pl.BlockSpec((1, H, W, Cin), lambda b: (b, 0, 0, 0)),     # x
                pl.BlockSpec((1, Ho, W, C2), lambda b: (b, 0, 0, 0)),     # res (parity split)
                pl.BlockSpec((Cin, Cd), lambda b: (0, 0)),                # 1x1 weight (resident)
                pl.BlockSpec((3, 3 * C2, C2p), lambda b: (0, 0, 0)),      # 3x3 weight (resident)
                pl.BlockSpec((1, C2p), lambda b: (0, 0)),                 # BN shift (resident)
            ],
            out_specs=pl.BlockSpec((1, Ho, W, C2p), lambda b: (b, 0, 0, 0)),
            scratch_shapes=[pltpu.VMEM((Ho + 2, W + 2, C2), jnp.bfloat16)],
        ),
        compiler_params=pltpu.CompilerParams(**cp_kwargs),
        cost_estimate=cost,
    )(weights, x, res_split, wpre_bf, wk, shift_split)

    if Cdp == Cd:
        return out.reshape(B, Ho, Wo, Cd)
    # TODO(synk): Cd not a multiple of 64 costs one extra HBM pass to drop the
    # channel padding; keep Cd % 64 == 0 (as in the Decoder) to avoid it.
    return out.reshape(B, Ho, W, 2, Cdp)[..., :Cd].reshape(B, Ho, Wo, Cd)


# ---------------------------- pure-JAX reference ----------------------------

def _bilinear_up2x_ref(x):
    """Bilinear 2x upsample, align_corners=False (PyTorch semantics), f32."""
    B, H, W, C = x.shape

    def taps(n):
        src = (np.arange(2 * n, dtype=np.float64) + 0.5) * 0.5 - 0.5
        src = np.maximum(src, 0.0)
        i0 = np.floor(src).astype(np.int32)
        frac = (src - i0).astype(np.float32)
        i0 = np.clip(i0, 0, n - 1)
        i1 = np.clip(i0 + 1, 0, n - 1)
        return i0, i1, frac

    h0, h1, fh = taps(H)
    w0, w1, fw = taps(W)
    xh = x[:, h0] * (1.0 - fh)[None, :, None, None] + x[:, h1] * fh[None, :, None, None]
    return (xh[:, :, w0] * (1.0 - fw)[None, None, :, None]
            + xh[:, :, w1] * fw[None, None, :, None])


def wf_reference(x, res, weights, w_pre, w_post, gamma, beta, mean, var, eps=1e-5):
    """f32 reference with the PyTorch WF.forward op order."""
    up = _bilinear_up2x_ref(x)
    w = jnp.maximum(weights, 0.0)
    fw = w / (jnp.sum(w) + 1e-8)
    p = jnp.einsum("bhwc,cd->bhwd", up, w_pre)
    fused = fw[0] * res + fw[1] * p
    y = jax.lax.conv_general_dilated(
        fused, w_post, window_strides=(1, 1), padding="SAME",
        dimension_numbers=("NHWC", "HWIO", "NHWC"))
    scale = gamma / jnp.sqrt(var + eps)
    y = y * scale + (beta - mean * scale)
    return jnp.clip(y, 0.0, 6.0)


if __name__ == "__main__":
    key = jax.random.PRNGKey(0)
    B, H, W = 2, 8, 8
    Cin, Cd = 128, 64   # matches Decoder: WF(encoder_channels[-3]=128, decode_channels=64)

    k1, k2, k3, k4, k5, k6, k7, k8 = jax.random.split(key, 8)
    x = jax.random.normal(k1, (B, H, W, Cin), jnp.float32)              # NHWC
    res = jax.random.normal(k2, (B, 2 * H, 2 * W, Cd), jnp.float32)     # NHWC

    weights = jnp.asarray([1.5, 0.5], jnp.float32)                      # fusion weights param
    w_pre = jax.random.normal(k3, (Cin, Cd), jnp.float32) * 0.05        # 1x1 conv, (Cin, Cout)
    w_post = jax.random.normal(k4, (3, 3, Cd, Cd), jnp.float32) * 0.05  # 3x3 conv, (kh, kw, Cin, Cout)

    gamma = 1.0 + 0.1 * jax.random.normal(k5, (Cd,), jnp.float32)
    beta = 0.1 * jax.random.normal(k6, (Cd,), jnp.float32)
    run_mean = 0.1 * jax.random.normal(k7, (Cd,), jnp.float32)
    run_var = jnp.abs(jax.random.normal(k8, (Cd,), jnp.float32)) * 0.1 + 1.0

    out = wf_forward(x, res, weights, w_pre, w_post, gamma, beta, run_mean, run_var)
    jax.block_until_ready(out)
    assert out.shape == (B, 2 * H, 2 * W, Cd)

    ref = wf_reference(x, res, weights, w_pre, w_post, gamma, beta, run_mean, run_var)
    np.testing.assert_allclose(np.asarray(out), np.asarray(ref), rtol=5e-2, atol=5e-2)
    print("KERNEL_OK")
</pallas_src>

<mosaic_0001>
module attributes {stable_mosaic.version = 11 : i64} {
  func.func @wf_kernel(%arg0: i32, %arg1: memref<2xf32, #tpu.memory_space<smem>>, %arg2: memref<1x8x8x128xf32, #tpu.memory_space<vmem>>, %arg3: memref<1x16x8x128xf32, #tpu.memory_space<vmem>>, %arg4: memref<128x64xbf16, #tpu.memory_space<vmem>>, %arg5: memref<3x384x128xbf16, #tpu.memory_space<vmem>>, %arg6: memref<1x128xf32, #tpu.memory_space<vmem>>, %arg7: memref<1x16x8x128xf32, #tpu.memory_space<vmem>>, %arg8: memref<18x10x128xbf16, #tpu.memory_space<vmem>>) attributes {dimension_semantics = [#tpu.dimension_semantics<parallel>], iteration_bounds = array<i64: 2>, scalar_prefetch = 0 : i64, scratch_operands = 1 : i64, tpu.core_type = #tpu.core_type<tc>, window_params = [{transform_indices = @transform_0, window_bounds = array<i64: 2>}, {transform_indices = @transform_1, window_bounds = array<i64: 1, 8, 8, 128>}, {transform_indices = @transform_2, window_bounds = array<i64: 1, 16, 8, 128>}, {pipeline_mode = #tpu.pipeline_mode<synchronous>, transform_indices = @transform_3, window_bounds = array<i64: 128, 64>}, {pipeline_mode = #tpu.pipeline_mode<synchronous>, transform_indices = @transform_4, window_bounds = array<i64: 3, 384, 128>}, {pipeline_mode = #tpu.pipeline_mode<synchronous>, transform_indices = @transform_5, window_bounds = array<i64: 1, 128>}, {transform_indices = @transform_6, window_bounds = array<i64: 1, 16, 8, 128>}]} {
    %c0 = arith.constant 0 : index
    %0 = memref.load %arg1[%c0] : memref<2xf32, #tpu.memory_space<smem>>
    %cst = arith.constant 0.000000e+00 : f32
    %1 = arith.maximumf %0, %cst : f32
    %c1 = arith.constant 1 : index
    %2 = memref.load %arg1[%c1] : memref<2xf32, #tpu.memory_space<smem>>
    %cst_0 = arith.constant 0.000000e+00 : f32
    %3 = arith.maximumf %2, %cst_0 : f32
    %4 = arith.addf %1, %3 : f32
    %cst_1 = arith.constant 9.99999993E-9 : f32
    %5 = arith.addf %4, %cst_1 : f32
    %cst_2 = arith.constant 1.000000e+00 : f32
    %6 = arith.divf %cst_2, %5 : f32
    %7 = arith.mulf %1, %6 : f32
    %8 = arith.truncf %7 : f32 to bf16
    %9 = arith.mulf %3, %6 : f32
    %10 = arith.truncf %9 : f32 to bf16
    %cst_3 = arith.constant 0.000000e+00 : bf16
    %11 = vector.broadcast %cst_3 : bf16 to vector<1x10x128xbf16>
    %c0_4 = arith.constant 0 : index
    %c0_5 = arith.constant 0 : index
    %c0_6 = arith.constant 0 : index
    %12 = vector.load %arg8[%c0_4, %c0_5, %c0_6] : memref<18x10x128xbf16, #tpu.memory_space<vmem>>, vector<1x10x128xbf16>
    tpu.vector_store %arg8[%c0_4, %c0_5, %c0_6], %11 {strides = array<i32>} : memref<18x10x128xbf16, #tpu.memory_space<vmem>>, vector<1x10x128xbf16>,
    %cst_7 = arith.constant 0.000000e+00 : bf16
    %13 = vector.broadcast %cst_7 : bf16 to vector<1x10x128xbf16>
    %c17 = arith.constant 17 : index
    %c0_8 = arith.constant 0 : index
    %c0_9 = arith.constant 0 : index
    %14 = vector.load %arg8[%c17, %c0_8, %c0_9] : memref<18x10x128xbf16, #tpu.memory_space<vmem>>, vector<1x10x128xbf16>
    tpu.vector_store %arg8[%c17, %c0_8, %c0_9], %13 {strides = array<i32>} : memref<18x10x128xbf16, #tpu.memory_space<vmem>>, vector<1x10x128xbf16>,
    %cst_10 = arith.constant 0.000000e+00 : bf16
    %15 = vector.broadcast %cst_10 : bf16 to vector<18x1x128xbf16>
    %c0_11 = arith.constant 0 : index
    %c0_12 = arith.constant 0 : index
    %c0_13 = arith.constant 0 : index
    %16 = vector.load %arg8[%c0_11, %c0_12, %c0_13] : memref<18x10x128xbf16, #tpu.memory_space<vmem>>, vector<18x1x128xbf16>
    tpu.vector_store %arg8[%c0_11, %c0_12, %c0_13], %15 {strides = array<i32>} : memref<18x10x128xbf16, #tpu.memory_space<vmem>>, vector<18x1x128xbf16>,
    %cst_14 = arith.constant 0.000000e+00 : bf16
    %17 = vector.broadcast %cst_14 : bf16 to vector<18x1x128xbf16>
    %c0_15 = arith.constant 0 : index
    %c9 = arith.constant 9 : index
    %c0_16 = arith.constant 0 : index
    %18 = vector.load %arg8[%c0_15, %c9, %c0_16] : memref<18x10x128xbf16, #tpu.memory_space<vmem>>, vector<18x1x128xbf16>
    tpu.vector_store %arg8[%c0_15, %c9, %c0_16], %17 {strides = array<i32>} : memref<18x10x128xbf16, #tpu.memory_space<vmem>>, vector<18x1x128xbf16>,
    %c0_17 = arith.constant 0 : index
    %c0_18 = arith.constant 0 : index
    %c0_19 = arith.constant 0 : index
    %c0_20 = arith.constant 0 : index
    %19 = vector.load %arg2[%c0_17, %c0_18, %c0_19, %c0_20] : memref<1x8x8x128xf32, #tpu.memory_space<vmem>>, vector<1x8x8x128xf32>
    %20 = vector.shape_cast %19 : vector<1x8x8x128xf32> to vector<8x8x128xf32>
    %21 = vector.shape_cast %20 : vector<8x8x128xf32> to vector<64x128xf32>
    %22 = arith.truncf %21 : vector<64x128xf32> to vector<64x128xbf16>
    %c0_21 = arith.constant 0 : index
    %c0_22 = arith.constant 0 : index
    %23 = vector.load %arg4[%c0_21, %c0_22] : memref<128x64xbf16, #tpu.memory_space<vmem>>, vector<128x64xbf16>
    %cst_23 = arith.constant dense<0.000000e+00> : vector<64x64xf32>
    %24 = tpu.matmul %22, %23, %cst_23 {dimension_numbers = #tpu.dot_dimension_numbers<[1], [0], [0], [1], [0, 0, 1, 1], [], []>} : vector<64x128xbf16>, vector<128x64xbf16>, vector<64x64xf32> -> vector<64x64xf32>
    %25 = vector.shape_cast %24 : vector<64x64xf32> to vector<8x8x64xf32>
    %26 = tpu.iota {dimensions = array<i32: 1>} : vector<8x8x1xi32>
    %c0_i32 = arith.constant 0 : i32
    %27 = vector.broadcast %c0_i32 : i32 to vector<8x8x1xi32>
    %28 = arith.cmpi eq, %26, %27 : vector<8x8x1xi32>
    %c1_i32 = arith.constant 1 : i32
    %29 = tpu.dynamic_rotate %25 by %c1_i32 dim 1 : vector<8x8x64xf32>, i32 -> vector<8x8x64xf32>
    %30 = vector.shape_cast %28 : vector<8x8x1xi1> to vector<8x8x1xi1>
    %31 = vector.broadcast %30 : vector<8x8x1xi1> to vector<8x8x64xi1>
    %32 = arith.select %31, %25, %29 : vector<8x8x64xi1>, vector<8x8x64xf32>
    %c7_i32 = arith.constant 7 : i32
    %33 = vector.broadcast %c7_i32 : i32 to vector<8x8x1xi32>
    %34 = arith.cmpi eq, %26, %33 : vector<8x8x1xi32>
    %c7_i32_24 = arith.constant 7 : i32
    %35 = tpu.dynamic_rotate %25 by %c7_i32_24 dim 1 : vector<8x8x64xf32>, i32 -> vector<8x8x64xf32>
    %36 = vector.shape_cast %34 : vector<8x8x1xi1> to vector<8x8x1xi1>
    %37 = vector.broadcast %36 : vector<8x8x1xi1> to vector<8x8x64xi1>
    %38 = arith.select %37, %25, %35 : vector<8x8x64xi1>, vector<8x8x64xf32>
    %cst_25 = arith.constant 7.500000e-01 : f32
    %39 = vector.broadcast %cst_25 : f32 to vector<8x8x64xf32>
    %40 = arith.mulf %39, %25 : vector<8x8x64xf32>
    %cst_26 = arith.constant 2.500000e-01 : f32
    %41 = vector.broadcast %cst_26 : f32 to vector<8x8x64xf32>
    %42 = arith.mulf %41, %32 : vector<8x8x64xf32>
    %43 = arith.addf %40, %42 : vector<8x8x64xf32>
    %cst_27 = arith.constant 7.500000e-01 : f32
    %44 = vector.broadcast %cst_27 : f32 to vector<8x8x64xf32>
    %45 = arith.mulf %44, %25 : vector<8x8x64xf32>
    %cst_28 = arith.constant 2.500000e-01 : f32
    %46 = vector.broadcast %cst_28 : f32 to vector<8x8x64xf32>
    %47 = arith.mulf %46, %38 : vector<8x8x64xf32>
    %48 = arith.addf %45, %47 : vector<8x8x64xf32>
    %49 = tpu.concatenate %43, %48 in 2 : vector<8x8x64xf32>, vector<8x8x64xf32> -> vector<8x8x128xf32>
    %50 = arith.truncf %49 : vector<8x8x128xf32> to vector<8x8x128xbf16>
    %51 = vector.extract_strided_slice %50 {offsets = [0, 0, 0], sizes = [1, 8, 128], strides = [1, 1, 1]} : vector<8x8x128xbf16> to vector<1x8x128xbf16>
    %52 = vector.extract_strided_slice %50 {offsets = [0, 0, 0], sizes = [7, 8, 128], strides = [1, 1, 1]} : vector<8x8x128xbf16> to vector<7x8x128xbf16>
    %53 = tpu.concatenate %51, %52 in 0 : vector<1x8x128xbf16>, vector<7x8x128xbf16> -> vector<8x8x128xbf16>
    %54 = vector.extract_strided_slice %50 {offsets = [1, 0, 0], sizes = [7, 8, 128], strides = [1, 1, 1]} : vector<8x8x128xbf16> to vector<7x8x128xbf16>
    %55 = vector.extract_strided_slice %50 {offsets = [7, 0, 0], sizes = [1, 8, 128], strides = [1, 1, 1]} : vector<8x8x128xbf16> to vector<1x8x128xbf16>
    %56 = tpu.concatenate %54, %55 in 0 : vector<7x8x128xbf16>, vector<1x8x128xbf16> -> vector<8x8x128xbf16>
    %cst_29 = arith.constant 7.500000e-01 : bf16
    %57 = vector.broadcast %cst_29 : bf16 to vector<8x8x128xbf16>
    %58 = arith.mulf %57, %50 : vector<8x8x128xbf16>
    %cst_30 = arith.constant 2.500000e-01 : bf16
    %59 = vector.broadcast %cst_30 : bf16 to vector<8x8x128xbf16>
    %60 = arith.mulf %59, %53 : vector<8x8x128xbf16>
    %61 = arith.addf %58, %60 : vector<8x8x128xbf16>
    %cst_31 = arith.constant 7.500000e-01 : bf16
    %62 = vector.broadcast %cst_31 : bf16 to vector<8x8x128xbf16>
    %63 = arith.mulf %62, %50 : vector<8x8x128xbf16>
    %cst_32 = arith.constant 2.500000e-01 : bf16
    %64 = vector.broadcast %cst_32 : bf16 to vector<8x8x128xbf16>
    %65 = arith.mulf %64, %56 : vector<8x8x128xbf16>
    %66 = arith.addf %63, %65 : vector<8x8x128xbf16>
    %67 = vector.shape_cast %61 : vector<8x8x128xbf16> to vector<8x1x8x128xbf16>
    %68 = vector.shape_cast %66 : vector<8x8x128xbf16> to vector<8x1x8x128xbf16>
    %69 = tpu.concatenate %67, %68 in 1 : vector<8x1x8x128xbf16>, vector<8x1x8x128xbf16> -> vector<8x2x8x128xbf16>
    %70 = vector.shape_cast %69 : vector<8x2x8x128xbf16> to vector<16x8x128xbf16>
    %c0_33 = arith.constant 0 : index
    %c0_34 = arith.constant 0 : index
    %c0_35 = arith.constant 0 : index
    %c0_36 = arith.constant 0 : index
    %71 = vector.load %arg3[%c0_33, %c0_34, %c0_35, %c0_36] : memref<1x16x8x128xf32, #tpu.memory_space<vmem>>, vector<1x16x8x128xf32>
    %72 = vector.shape_cast %71 : vector<1x16x8x128xf32> to vector<16x8x128xf32>
    %73 = arith.truncf %72 : vector<16x8x128xf32> to vector<16x8x128xbf16>
    %74 = vector.broadcast %8 : bf16 to vector<16x8x128xbf16>
    %75 = arith.mulf %74, %73 : vector<16x8x128xbf16>
    %76 = vector.broadcast %10 : bf16 to vector<16x8x128xbf16>
    %77 = arith.mulf %76, %70 : vector<16x8x128xbf16>
    %78 = arith.addf %75, %77 : vector<16x8x128xbf16>
    %c1_37 = arith.constant 1 : index
    %c1_38 = arith.constant 1 : index
    %c0_39 = arith.constant 0 : index
    %79 = vector.load %arg8[%c1_37, %c1_38, %c0_39] : memref<18x10x128xbf16, #tpu.memory_space<vmem>>, vector<16x8x128xbf16>
    tpu.vector_store %arg8[%c1_37, %c1_38, %c0_39], %78 {strides = array<i32>} : memref<18x10x128xbf16, #tpu.memory_space<vmem>>, vector<16x8x128xbf16>,
    %cst_40 = arith.constant 0.000000e+00 : f32
    %80 = vector.broadcast %cst_40 : f32 to vector<128x128xf32>
    %c0_41 = arith.constant 0 : index
    %c0_42 = arith.constant 0 : index
    %c0_43 = arith.constant 0 : index
    %81 = vector.load %arg8[%c0_41, %c0_42, %c0_43] : memref<18x10x128xbf16, #tpu.memory_space<vmem>>, vector<16x8x128xbf16>
    %c0_44 = arith.constant 0 : index
    %c1_45 = arith.constant 1 : index
    %c0_46 = arith.constant 0 : index
    %82 = vector.load %arg8[%c0_44, %c1_45, %c0_46] : memref<18x10x128xbf16, #tpu.memory_space<vmem>>, vector<16x8x128xbf16>
    %c0_47 = arith.constant 0 : index
    %c2 = arith.constant 2 : index
    %c0_48 = arith.constant 0 : index
    %83 = vector.load %arg8[%c0_47, %c2, %c0_48] : memref<18x10x128xbf16, #tpu.memory_space<vmem>>, vector<16x8x128xbf16>
    %84 = tpu.concatenate %81, %82, %83 in 2 : vector<16x8x128xbf16>, vector<16x8x128xbf16>, vector<16x8x128xbf16> -> vector<16x8x384xbf16>
    %85 = vector.shape_cast %84 : vector<16x8x384xbf16> to vector<128x384xbf16>
    %c0_49 = arith.constant 0 : index
    %c0_50 = arith.constant 0 : index
    %c0_51 = arith.constant 0 : index
    %86 = vector.load %arg5[%c0_49, %c0_50, %c0_51] : memref<3x384x128xbf16, #tpu.memory_space<vmem>>, vector<1x384x128xbf16>
    %87 = vector.shape_cast %86 : vector<1x384x128xbf16> to vector<384x128xbf16>
    %cst_52 = arith.constant dense<0.000000e+00> : vector<128x128xf32>
    %88 = tpu.matmul %85, %87, %cst_52 {dimension_numbers = #tpu.dot_dimension_numbers<[1], [0], [0], [1], [0, 0, 1, 1], [], []>} : vector<128x384xbf16>, vector<384x128xbf16>, vector<128x128xf32> -> vector<128x128xf32>
    %89 = arith.addf %80, %88 : vector<128x128xf32>
    %c1_53 = arith.constant 1 : index
    %c0_54 = arith.constant 0 : index
    %c0_55 = arith.constant 0 : index
    %90 = vector.load %arg8[%c1_53, %c0_54, %c0_55] : memref<18x10x128xbf16, #tpu.memory_space<vmem>>, vector<16x8x128xbf16>
    %c1_56 = arith.constant 1 : index
    %c1_57 = arith.constant 1 : index
    %c0_58 = arith.constant 0 : index
    %91 = vector.load %arg8[%c1_56, %c1_57, %c0_58] : memref<18x10x128xbf16, #tpu.memory_space<vmem>>, vector<16x8x128xbf16>
    %c1_59 = arith.constant 1 : index
    %c2_60 = arith.constant 2 : index
    %c0_61 = arith.constant 0 : index
    %92 = vector.load %arg8[%c1_59, %c2_60, %c0_61] : memref<18x10x128xbf16, #tpu.memory_space<vmem>>, vector<16x8x128xbf16>
    %93 = tpu.concatenate %90, %91, %92 in 2 : vector<16x8x128xbf16>, vector<16x8x128xbf16>, vector<16x8x128xbf16> -> vector<16x8x384xbf16>
    %94 = vector.shape_cast %93 : vector<16x8x384xbf16> to vector<128x384xbf16>
    %c1_62 = arith.constant 1 : index
    %c0_63 = arith.constant 0 : index
    %c0_64 = arith.constant 0 : index
    %95 = vector.load %arg5[%c1_62, %c0_63, %c0_64] : memref<3x384x128xbf16, #tpu.memory_space<vmem>>, vector<1x384x128xbf16>
    %96 = vector.shape_cast %95 : vector<1x384x128xbf16> to vector<384x128xbf16>
    %cst_65 = arith.constant dense<0.000000e+00> : vector<128x128xf32>
    %97 = tpu.matmul %94, %96, %cst_65 {dimension_numbers = #tpu.dot_dimension_numbers<[1], [0], [0], [1], [0, 0, 1, 1], [], []>} : vector<128x384xbf16>, vector<384x128xbf16>, vector<128x128xf32> -> vector<128x128xf32>
    %98 = arith.addf %89, %97 : vector<128x128xf32>
    %c2_66 = arith.constant 2 : index
    %c0_67 = arith.constant 0 : index
    %c0_68 = arith.constant 0 : index
    %99 = vector.load %arg8[%c2_66, %c0_67, %c0_68] : memref<18x10x128xbf16, #tpu.memory_space<vmem>>, vector<16x8x128xbf16>
    %c2_69 = arith.constant 2 : index
    %c1_70 = arith.constant 1 : index
    %c0_71 = arith.constant 0 : index
    %100 = vector.load %arg8[%c2_69, %c1_70, %c0_71] : memref<18x10x128xbf16, #tpu.memory_space<vmem>>, vector<16x8x128xbf16>
    %c2_72 = arith.constant 2 : index
    %c2_73 = arith.constant 2 : index
    %c0_74 = arith.constant 0 : index
    %101 = vector.load %arg8[%c2_72, %c2_73, %c0_74] : memref<18x10x128xbf16, #tpu.memory_space<vmem>>, vector<16x8x128xbf16>
    %102 = tpu.concatenate %99, %100, %101 in 2 : vector<16x8x128xbf16>, vector<16x8x128xbf16>, vector<16x8x128xbf16> -> vector<16x8x384xbf16>
    %103 = vector.shape_cast %102 : vector<16x8x384xbf16> to vector<128x384xbf16>
    %c2_75 = arith.constant 2 : index
    %c0_76 = arith.constant 0 : index
    %c0_77 = arith.constant 0 : index
    %104 = vector.load %arg5[%c2_75, %c0_76, %c0_77] : memref<3x384x128xbf16, #tpu.memory_space<vmem>>, vector<1x384x128xbf16>
    %105 = vector.shape_cast %104 : vector<1x384x128xbf16> to vector<384x128xbf16>
    %cst_78 = arith.constant dense<0.000000e+00> : vector<128x128xf32>
    %106 = tpu.matmul %103, %105, %cst_78 {dimension_numbers = #tpu.dot_dimension_numbers<[1], [0], [0], [1], [0, 0, 1, 1], [], []>} : vector<128x384xbf16>, vector<384x128xbf16>, vector<128x128xf32> -> vector<128x128xf32>
    %107 = arith.addf %98, %106 : vector<128x128xf32>
    %c0_79 = arith.constant 0 : index
    %c0_80 = arith.constant 0 : index
    %108 = vector.load %arg6[%c0_79, %c0_80] : memref<1x128xf32, #tpu.memory_space<vmem>>, vector<1x128xf32>
    %109 = vector.broadcast %108 : vector<1x128xf32> to vector<128x128xf32>
    %110 = arith.addf %107, %109 : vector<128x128xf32>
    %cst_81 = arith.constant 0.000000e+00 : f32
    %cst_82 = arith.constant 6.000000e+00 : f32
    %111 = vector.broadcast %cst_81 : f32 to vector<128x128xf32>
    %112 = arith.maximumf %111, %110 : vector<128x128xf32>
    %113 = vector.broadcast %cst_82 : f32 to vector<128x128xf32>
    %114 = arith.minimumf %113, %112 : vector<128x128xf32>
    %115 = vector.shape_cast %114 : vector<128x128xf32> to vector<16x8x128xf32>
    %c0_83 = arith.constant 0 : index
    %c0_84 = arith.constant 0 : index
    %c0_85 = arith.constant 0 : index
    %c0_86 = arith.constant 0 : index
    %116 = vector.load %arg7[%c0_83, %c0_84, %c0_85, %c0_86] : memref<1x16x8x128xf32, #tpu.memory_space<vmem>>, vector<1x16x8x128xf32>
    %117 = vector.shape_cast %116 : vector<1x16x8x128xf32> to vector<16x8x128xf32>
    %118 = vector.shape_cast %115 : vector<16x8x128xf32> to vector<1x16x8x128xf32>
    tpu.vector_store %arg7[%c0_83, %c0_84, %c0_85, %c0_86], %118 {strides = array<i32>} : memref<1x16x8x128xf32, #tpu.memory_space<vmem>>, vector<1x16x8x128xf32>,
    return
  }
  func.func @transform_0(%arg0: i32) -> i32 {
    %c0_i32 = arith.constant 0 : i32
    %c0_i32_0 = arith.constant 0 : i32
    return %c0_i32 : i32
  }
  func.func @transform_1(%arg0: i32) -> (i32, i32, i32, i32) {
    %c0_i32 = arith.constant 0 : i32
    %c0_i32_0 = arith.constant 0 : i32
    %c0_i32_1 = arith.constant 0 : i32
    %c0_i32_2 = arith.constant 0 : i32
    return %arg0, %c0_i32, %c0_i32_0, %c0_i32_1 : i32, i32, i32, i32
  }
  func.func @transform_2(%arg0: i32) -> (i32, i32, i32, i32) {
    %c0_i32 = arith.constant 0 : i32
    %c0_i32_0 = arith.constant 0 : i32
    %c0_i32_1 = arith.constant 0 : i32
    %c0_i32_2 = arith.constant 0 : i32
    return %arg0, %c0_i32, %c0_i32_0, %c0_i32_1 : i32, i32, i32, i32
  }
  func.func @transform_3(%arg0: i32) -> (i32, i32) {
    %c0_i32 = arith.constant 0 : i32
    %c0_i32_0 = arith.constant 0 : i32
    %c0_i32_1 = arith.constant 0 : i32
    return %c0_i32, %c0_i32_0 : i32, i32
  }
  func.func @transform_4(%arg0: i32) -> (i32, i32, i32) {
    %c0_i32 = arith.constant 0 : i32
    %c0_i32_0 = arith.constant 0 : i32
    %c0_i32_1 = arith.constant 0 : i32
    %c0_i32_2 = arith.constant 0 : i32
    return %c0_i32, %c0_i32_0, %c0_i32_1 : i32, i32, i32
  }
  func.func @transform_5(%arg0: i32) -> (i32, i32) {
    %c0_i32 = arith.constant 0 : i32
    %c0_i32_0 = arith.constant 0 : i32
    %c0_i32_1 = arith.constant 0 : i32
    return %c0_i32, %c0_i32_0 : i32, i32
  }
  func.func @transform_6(%arg0: i32) -> (i32, i32, i32, i32) {
    %c0_i32 = arith.constant 0 : i32
    %c0_i32_0 = arith.constant 0 : i32
    %c0_i32_1 = arith.constant 0 : i32
    %c0_i32_2 = arith.constant 0 : i32
    return %arg0, %c0_i32, %c0_i32_0, %c0_i32_1 : i32, i32, i32, i32
  }
}

</mosaic_0001>

<llo_original>
// kernel: tpu_custom_call.1
$region0: #{tpu_custom_call.1}
  #allocation0 [shape = 'u32[]', space=smem, size = 0x4, offset = 0x4, fixed_abs, tag = 'smem constant byte address 0x4 - core index']
  #allocation1 [shape = 'u32[72,128]{1,0:T(1,128)}', space=vmem, size = 0x9000, scoped, tag = 'internal scratch']
  #allocation2 [shape = 'bf16[18,10,128]{2,1,0:T(8,128)(2,1)}', space=vmem, size = 0x12000, scoped, tag = 'scratch operand']
  %s0 = inlined_call_operand.vmem [shape: f32[2], index: 0, kind: input, shape index: {}]
  %s1 = inlined_call_operand.hbm [shape: f32[2,8,8,128], index: 1, kind: input, shape index: {}]
  %s2 = inlined_call_operand.hbm [shape: f32[2,16,8,128], index: 2, kind: input, shape index: {}]
  %s3 = inlined_call_operand.vmem [shape: bf16[128,64], index: 3, kind: input, shape index: {}]
  %s4 = inlined_call_operand.hbm [shape: bf16[3,384,128], index: 4, kind: input, shape index: {}]
  %s5 = inlined_call_operand.vmem [shape: f32[1,128], index: 5, kind: input, shape index: {}]
  %s6 = inlined_call_operand.hbm [shape: f32[2,16,8,128], index: 6, kind: output, shape index: {}]
  %s7 = sld [smem:[#allocation0]]
  $region73: #{tpu_custom_call.1} parent=0
    _
  %s9 = ssub.s32 1, %s7
  %s10 = scalar_select 0, %s9, %s7
  $region1: #{tpu_custom_call.1} parent=0
    #allocation3 [shape = 'u8[512]{0}', space=smem, size = 0x200, scoped, tag = 'input window, operand 0, single buffered']
    #allocation4 [shape = 's32[2]{0}', space=sflag, size = 0x8, scoped, tag = 'scoped memory for tpu_custom_call.1']
    #allocation5 [shape = 's32[2]{0}', space=sflag, size = 0x8, scoped, tag = 'scoped memory for tpu_custom_call.1']
    #allocation6 [shape = 's32[2]{0}', space=sflag, size = 0x8, scoped, tag = 'scoped memory for tpu_custom_call.1']
    #allocation7 [shape = 'u8[65536]{0}', space=vmem, size = 0x10000, scoped, tag = 'input window, operand 1']
    #allocation8 [shape = 'u8[131072]{0}', space=vmem, size = 0x20000, scoped, tag = 'input window, operand 2']
    #allocation9 [shape = 's32[2]{0}', space=sflag, size = 0x8, scoped, tag = 'scoped memory for tpu_custom_call.1']
    #allocation10 [shape = 'u8[294912]{0}', space=vmem, size = 0x48000, scoped, tag = 'input window, operand 4, single buffered']
    #allocation11 [shape = 'u8[131072]{0}', space=vmem, size = 0x20000, scoped, tag = 'output window, operand 0']
    %11 = vsyncpa [#allocation6], 0
    %12 = vsyncpa [#allocation4], 0
    %s13 = scalar_lea.sflag [#allocation4], 1
    %14 = vsyncpa %s13, 0
    %15 = vsyncpa [#allocation9], 0
    %s16 = scalar_lea.sflag [#allocation9], 1
    %17 = vsyncpa %s16, 0
    %18 = vsyncpa [#allocation5], 0
    %s19 = scalar_lea.sflag [#allocation5], 1
    %20 = vsyncpa %s19, 0
    loop: start=0, step=1, limit=4
    $region2: #{tpu_custom_call.1} parent=1 // loop_pre_header
      _
    $region3: #{tpu_custom_call.1} parent=1 // loop_header
      %s22 = sphi 0, %s26
      %p23 = scmp.ge.s32.totalorder %s22, 4
      %s30 = sphi 0, %s30
      %s32 = sphi 0, %s30
      %s33 = sphi 0, %s32
      %s47 = sphi 0, %s33
      %s53 = sphi 0, %s55
      %s56 = sphi 0, %s53
      %s57 = sphi 0, %s56
      %s73 = sphi 0, %s57
      %s79 = sphi 0, %s81
      %s82 = sphi 0, %s79
      %s83 = sphi 0, %s82
      %s99 = sphi 0, %s83
      %s103 = sphi 0, %s103
      %s105 = sphi 0, %s103
      %s106 = sphi 0, %s105
      %s120 = sphi 0, %s106
      %s124 = sphi 0, %s124
      %s126 = sphi 0, %s124
      %s127 = sphi 0, %s126
      %s141 = sphi 0, %s127
      %s145 = sphi 0, %s145
      %s147 = sphi 0, %s145
      %s148 = sphi 0, %s147
      %s162 = sphi 0, %s148
      %s168 = sphi 0, %s170
      %s171 = sphi 0, %s168
      %s172 = sphi 0, %s171
      %s188 = sphi 0, %s172
    $region4: #{tpu_custom_call.1} parent=1 // loop_header_branch
      %25 = sbr.rel (%p23) target = $region8
    $region5: #{tpu_custom_call.1} parent=1 // loop_body
      %s27 = ssub.s32 %s22, 1
      %s28 = ssub.s32 %s22, 2
      %s29 = sadd.s32 %s22, 1
      %s31 = sadd.s32 %s30, 1
      %p34 = scmp.eq.s32.totalorder %s22, 1
      %p35 = scmp.ne.s32.totalorder %s30, %s32
      %p36 = scmp.eq.s32.totalorder %s22, 0
      %p37 = por %p35, %p36
      %p38 = scmp.ne.s32.totalorder %s30, %s32
      %p39 = scmp.eq.s32.totalorder %s27, 1
      %p40 = por %p38, %p39
      %p41 = scmp.ne.s32.totalorder %s32, %s33
      %p42 = scmp.eq.s32.totalorder %s27, 0
      %p43 = por %p41, %p42
      %p44 = scmp.ne.s32.totalorder %s32, %s33
      %p45 = scmp.eq.s32.totalorder %s28, 1
      %p46 = por %p44, %p45
      %p48 = scmp.ne.s32.totalorder %s33, %s47
      %p49 = scmp.eq.s32.totalorder %s28, 0
      %p50 = por %p48, %p49
      %s51 = ssub.s32 %s22, %s29
      %p52 = scmp.eq.s32.totalorder %s51, 0
      %s54 = sadd.s32 %s53, 1
      %s55 = scalar_select %p52, %s53, %s54
      %p58 = pneg %p52
      %p59 = scmp.eq.s32.totalorder %s22, 1
      %p60 = por %p58, %p59
      %p61 = scmp.ne.s32.totalorder %s53, %s56
      %p62 = scmp.eq.s32.totalorder %s22, 0
      %p63 = por %p61, %p62
      %p64 = scmp.ne.s32.totalorder %s53, %s56
      %p65 = scmp.eq.s32.totalorder %s27, 1
      %p66 = por %p64, %p65
      %p67 = scmp.ne.s32.totalorder %s56, %s57
      %p68 = scmp.eq.s32.totalorder %s27, 0
      %p69 = por %p67, %p68
      %p70 = scmp.ne.s32.totalorder %s56, %s57
      %p71 = scmp.eq.s32.totalorder %s28, 1
      %p72 = por %p70, %p71
      %p74 = scmp.ne.s32.totalorder %s57, %s73
      %p75 = scmp.eq.s32.totalorder %s28, 0
      %p76 = por %p74, %p75
      %s77 = ssub.s32 %s22, %s29
      %p78 = scmp.eq.s32.totalorder %s77, 0
      %s80 = sadd.s32 %s79, 1
      %s81 = scalar_select %p78, %s79, %s80
      %p84 = pneg %p78
      %p85 = scmp.eq.s32.totalorder %s22, 1
      %p86 = por %p84, %p85
      %p87 = scmp.ne.s32.totalorder %s79, %s82
      %p88 = scmp.eq.s32.totalorder %s22, 0
      %p89 = por %p87, %p88
      %p90 = scmp.ne.s32.totalorder %s79, %s82
      %p91 = scmp.eq.s32.totalorder %s27, 1
      %p92 = por %p90, %p91
      %p93 = scmp.ne.s32.totalorder %s82, %s83
      %p94 = scmp.eq.s32.totalorder %s27, 0
      %p95 = por %p93, %p94
      %p96 = scmp.ne.s32.totalorder %s82, %s83
      %p97 = scmp.eq.s32.totalorder %s28, 1
      %p98 = por %p96, %p97
      %p100 = scmp.ne.s32.totalorder %s83, %s99
      %p101 = scmp.eq.s32.totalorder %s28, 0
      %p102 = por %p100, %p101
      %s104 = sadd.s32 %s103, 1
      %p107 = scmp.eq.s32.totalorder %s22, 1
      %p108 = scmp.ne.s32.totalorder %s103, %s105
      %p109 = scmp.eq.s32.totalorder %s22, 0
      %p110 = por %p108, %p109
      %p111 = scmp.ne.s32.totalorder %s103, %s105
      %p112 = scmp.eq.s32.totalorder %s27, 1
      %p113 = por %p111, %p112
      %p114 = scmp.ne.s32.totalorder %s105, %s106
      %p115 = scmp.eq.s32.totalorder %s27, 0
      %p116 = por %p114, %p115
      %p117 = scmp.ne.s32.totalorder %s105, %s106
      %p118 = scmp.eq.s32.totalorder %s28, 1
      %p119 = por %p117, %p118
      %p121 = scmp.ne.s32.totalorder %s106, %s120
      %p122 = scmp.eq.s32.totalorder %s28, 0
      %p123 = por %p121, %p122
      %s125 = sadd.s32 %s124, 1
      %p128 = scmp.eq.s32.totalorder %s22, 1
      %p129 = scmp.ne.s32.totalorder %s124, %s126
      %p130 = scmp.eq.s32.totalorder %s22, 0
      %p131 = por %p129, %p130
      %p132 = scmp.ne.s32.totalorder %s124, %s126
      %p133 = scmp.eq.s32.totalorder %s27, 1
      %p134 = por %p132, %p133
      %p135 = scmp.ne.s32.totalorder %s126, %s127
      %p136 = scmp.eq.s32.totalorder %s27, 0
      %p137 = por %p135, %p136
      %p138 = scmp.ne.s32.totalorder %s126, %s127
      %p139 = scmp.eq.s32.totalorder %s28, 1
      %p140 = por %p138, %p139
      %p142 = scmp.ne.s32.totalorder %s127, %s141
      %p143 = scmp.eq.s32.totalorder %s28, 0
      %p144 = por %p142, %p143
      %s146 = sadd.s32 %s145, 1
      %p149 = scmp.eq.s32.totalorder %s22, 1
      %p150 = scmp.ne.s32.totalorder %s145, %s147
      %p151 = scmp.eq.s32.totalorder %s22, 0
      %p152 = por %p150, %p151
      %p153 = scmp.ne.s32.totalorder %s145, %s147
      %p154 = scmp.eq.s32.totalorder %s27, 1
      %p155 = por %p153, %p154
      %p156 = scmp.ne.s32.totalorder %s147, %s148
      %p157 = scmp.eq.s32.totalorder %s27, 0
      %p158 = por %p156, %p157
      %p159 = scmp.ne.s32.totalorder %s147, %s148
      %p160 = scmp.eq.s32.totalorder %s28, 1
      %p161 = por %p159, %p160
      %p163 = scmp.ne.s32.totalorder %s148, %s162
      %p164 = scmp.eq.s32.totalorder %s28, 0
      %p165 = por %p163, %p164
      %s166 = ssub.s32 %s22, %s29
      %p167 = scmp.eq.s32.totalorder %s166, 0
      %s169 = sadd.s32 %s168, 1
      %s170 = scalar_select %p167, %s168, %s169
      %p173 = pneg %p167
      %p174 = scmp.eq.s32.totalorder %s22, 1
      %p175 = por %p173, %p174
      %p176 = scmp.ne.s32.totalorder %s168, %s171
      %p177 = scmp.eq.s32.totalorder %s22, 0
      %p178 = por %p176, %p177
      %p179 = scmp.ne.s32.totalorder %s168, %s171
      %p180 = scmp.eq.s32.totalorder %s27, 1
      %p181 = por %p179, %p180
      %p182 = scmp.ne.s32.totalorder %s171, %s172
      %p183 = scmp.eq.s32.totalorder %s27, 0
      %p184 = por %p182, %p183
      %p185 = scmp.ne.s32.totalorder %s171, %s172
      %p186 = scmp.eq.s32.totalorder %s28, 1
      %p187 = por %p185, %p186
      %p189 = scmp.ne.s32.totalorder %s172, %s188
      %p190 = scmp.eq.s32.totalorder %s28, 0
      %p191 = por %p189, %p190
      %p192 = scmp.le.s32.totalorder 1, %s22
      %p193 = scmp.lt.s32.totalorder %s22, 3
      %p194 = pnand %p192, %p193
      %p195 = pneg %p194
      // Predicated region
      $region9: #{tpu_custom_call.1} parent=5 // pred_check
        _
      $region10: #{tpu_custom_call.1} parent=5 // pred_check_branch
        %197 = sbr.rel (%p194) target = $region12
      $region11: #{tpu_custom_call.1} parent=5 // pred_region
        %s198 = ssub.s32 %s22, 1
        // Predicated region
        $region13: #{tpu_custom_call.1} parent=11 // pred_check
          %p199 = pneg %p43
        $region14: #{tpu_custom_call.1} parent=11 // pred_check_branch
          %201 = sbr.rel (%p199) target = $region16
        $region15: #{tpu_custom_call.1} parent=11 // pred_region
          %203 = vsyncadd [#allocation6], 0
          %s205 = sshll.u32 %s0, 4
          %s206 = int_to_ptr.vmem [resolvable:$true] %s205
          %208 = dma.vmem_to_smem %s206, 16, [#allocation3], [#allocation6]
        $region16: #{tpu_custom_call.1} parent=11 // pred_fallthru
          _
        // Predicated region
        $region17: #{tpu_custom_call.1} parent=11 // pred_check
          %p209 = pneg %p116
        $region18: #{tpu_custom_call.1} parent=11 // pred_check_branch
          %211 = sbr.rel (%p209) target = $region20
        $region19: #{tpu_custom_call.1} parent=11 // pred_region
          _
        $region20: #{tpu_custom_call.1} parent=11 // pred_fallthru
          _
        // Predicated region
        $region21: #{tpu_custom_call.1} parent=11 // pred_check
          %p212 = pneg %p137
        $region22: #{tpu_custom_call.1} parent=11 // pred_check_branch
          %214 = sbr.rel (%p212) target = $region24
        $region23: #{tpu_custom_call.1} parent=11 // pred_region
          %216 = vsyncadd [#allocation9], 0
          %s217 = sshll.u32 %s4, 4
          %s218 = int_to_ptr.hbm [resolvable:$true] %s217
          %s219 = sshll.u32 [#allocation10], 4
          %s220 = int_to_ptr.vmem [resolvable:$true] %s219
          %225 = dma.hbm_to_vmem [thread:$0]  %s218, 9216, %s220, [#allocation9], 64, 64, 4
        $region24: #{tpu_custom_call.1} parent=11 // pred_fallthru
          _
        // Predicated region
        $region25: #{tpu_custom_call.1} parent=11 // pred_check
          %p226 = pneg %p158
        $region26: #{tpu_custom_call.1} parent=11 // pred_check_branch
          %228 = sbr.rel (%p226) target = $region28
        $region27: #{tpu_custom_call.1} parent=11 // pred_region
          _
        $region28: #{tpu_custom_call.1} parent=11 // pred_fallthru
          _
      $region12: #{tpu_custom_call.1} parent=5 // pred_fallthru
        _
      %p229 = scmp.lt.s32.totalorder %s22, 2
      // Predicated region
      $region29: #{tpu_custom_call.1} parent=5 // pred_check
        %p230 = pneg %p229
      $region30: #{tpu_custom_call.1} parent=5 // pred_check_branch
        %232 = sbr.rel (%p230) target = $region32
      $region31: #{tpu_custom_call.1} parent=5 // pred_region
        // Predicated region
        $region33: #{tpu_custom_call.1} parent=31 // pred_check
          %p233 = pneg %p63
        $region34: #{tpu_custom_call.1} parent=31 // pred_check_branch
          %235 = sbr.rel (%p233) target = $region36
        $region35: #{tpu_custom_call.1} parent=31 // pred_region
          %s236 = sand.u32 %s53, 1
          %s237 = scalar_lea.sflag [#allocation4], %s236
          %s238 = sand.u32 %s53, 1
          %s239 = smul.addr %s238, 64
          %s240 = scalar_lea.vmem [#allocation7], %s239
          %242 = vsyncadd %s237, 0
          %s243 = smul.addr %s22, 8
          %s244 = smul.addr %s243, 8
          %s245 = scalar_lea.hbm %s1, %s244
          %s246 = sshll.u32 %s245, 4
          %s247 = int_to_ptr.hbm [resolvable:$true] %s246
          %s248 = sshll.u32 %s240, 4
          %s249 = int_to_ptr.vmem [resolvable:$true] %s248
          %254 = dma.hbm_to_vmem [thread:$0]  %s247, 1024, %s249, %s237, 128, 128, 8
        $region36: #{tpu_custom_call.1} parent=31 // pred_fallthru
          _
        // Predicated region
        $region37: #{tpu_custom_call.1} parent=31 // pred_check
          %p255 = pneg %p89
        $region38: #{tpu_custom_call.1} parent=31 // pred_check_branch
          %257 = sbr.rel (%p255) target = $region40
        $region39: #{tpu_custom_call.1} parent=31 // pred_region
          %s258 = sand.u32 %s22, 1
          %s259 = scalar_lea.sflag [#allocation9], %s258
          %s260 = sand.u32 %s79, 1
          %s261 = smul.addr %s260, 128
          %s262 = scalar_lea.vmem [#allocation8], %s261
          %264 = vsyncadd %s259, 0
          %s265 = smul.addr %s22, 16
          %s266 = smul.addr %s265, 8
          %s267 = scalar_lea.hbm %s2, %s266
          %s268 = sshll.u32 %s267, 4
          %s269 = int_to_ptr.hbm [resolvable:$true] %s268
          %s270 = sshll.u32 %s262, 4
          %s271 = int_to_ptr.vmem [resolvable:$true] %s270
          %276 = dma.hbm_to_vmem [thread:$0]  %s269, 2048, %s271, %s259, 128, 128, 8
        $region40: #{tpu_custom_call.1} parent=31 // pred_fallthru
          _
      $region32: #{tpu_custom_call.1} parent=5 // pred_fallthru
        _
      %p277 = scmp.le.s32.totalorder 1, %s22
      %p278 = scmp.lt.s32.totalorder %s22, 3
      %p279 = pnand %p277, %p278
      %p280 = pneg %p279
      // Predicated region
      $region41: #{tpu_custom_call.1} parent=5 // pred_check
        _
      $region42: #{tpu_custom_call.1} parent=5 // pred_check_branch
        %282 = sbr.rel (%p279) target = $region44
      $region43: #{tpu_custom_call.1} parent=5 // pred_region
        %s283 = ssub.s32 %s22, 1
        // Predicated region
        $region45: #{tpu_custom_call.1} parent=43 // pred_check
          %p284 = pneg %p43
        $region46: #{tpu_custom_call.1} parent=43 // pred_check_branch
          %286 = sbr.rel (%p284) target = $region48
        $region47: #{tpu_custom_call.1} parent=43 // pred_region
          %288 = dma.done [#allocation6], 16
        $region48: #{tpu_custom_call.1} parent=43 // pred_fallthru
          _
        %s289 = sand.u32 %s56, 1
        %s290 = scalar_lea.sflag [#allocation4], %s289
        %s291 = sand.u32 %s56, 1
        %s292 = smul.addr %s291, 64
        %s293 = scalar_lea.vmem [#allocation7], %s292
        // Predicated region
        $region49: #{tpu_custom_call.1} parent=43 // pred_check
          %p294 = pneg %p69
        $region50: #{tpu_custom_call.1} parent=43 // pred_check_branch
          %296 = sbr.rel (%p294) target = $region52
        $region51: #{tpu_custom_call.1} parent=43 // pred_region
          %298 = dma.done %s290, 1024
        $region52: #{tpu_custom_call.1} parent=43 // pred_fallthru
          _
        %s299 = sand.u32 %s27, 1
        %s300 = scalar_lea.sflag [#allocation9], %s299
        %s301 = sand.u32 %s82, 1
        %s302 = smul.addr %s301, 128
        %s303 = scalar_lea.vmem [#allocation8], %s302
        // Predicated region
        $region53: #{tpu_custom_call.1} parent=43 // pred_check
          %p304 = pneg %p95
        $region54: #{tpu_custom_call.1} parent=43 // pred_check_branch
          %306 = sbr.rel (%p304) target = $region56
        $region55: #{tpu_custom_call.1} parent=43 // pred_region
          %308 = dma.done %s300, 2048
        $region56: #{tpu_custom_call.1} parent=43 // pred_fallthru
          _
        // Predicated region
        $region57: #{tpu_custom_call.1} parent=43 // pred_check
          %p309 = pneg %p137
        $region58: #{tpu_custom_call.1} parent=43 // pred_check_branch
          %311 = sbr.rel (%p309) target = $region60
        $region59: #{tpu_custom_call.1} parent=43 // pred_region
          %313 = dma.done [#allocation9], 9216
        $region60: #{tpu_custom_call.1} parent=43 // pred_fallthru
          _
        %314 = sfence
        %p315 = pneg %p43
        %p316 = pneg %p40
        %s317 = sand.u32 %s56, 1
        %s318 = scalar_lea.sflag [#allocation4], %s317
        %s319 = sand.u32 %s56, 1
        %s320 = smul.addr %s319, 64
        %s321 = scalar_lea.vmem [#allocation7], %s320
        %p322 = pneg %p69
        %p323 = pneg %p66
        %s324 = sand.u32 %s27, 1
        %s325 = scalar_lea.sflag [#allocation9], %s324
        %s326 = sand.u32 %s82, 1
        %s327 = smul.addr %s326, 128
        %s328 = scalar_lea.vmem [#allocation8], %s327
        %p329 = pneg %p95
        %p330 = pneg %p92
        %p331 = pneg %p116
        %p332 = pneg %p113
        %p333 = pneg %p137
        %p334 = pneg %p134
        %p335 = pneg %p158
        %p336 = pneg %p155
        %p337 = pneg %p184
        %p338 = pneg %p181
        %s339 = sand.u32 %s171, 1
        %s340 = scalar_lea.sflag [#allocation5], %s339
        %s341 = sand.u32 %s171, 1
        %s342 = smul.addr %s341, 128
        %s343 = scalar_lea.vmem [#allocation11], %s342
        %s345 = sld [smem:[#allocation3]]
        %s346 = smax.f32 %s345, 0.0
        %s347 = sld [smem:[#allocation3 + $0x1]]
        %s348 = smax.f32 %s347, 0.0
        %s349 = sadd.f32 %s346, %s348
        %s350 = sadd.f32 %s349, 1e-08
        %v351 = vstv %s350
        %v352 = vrcp.pop %v351
        %v353 = vmul.f32 %v351, %v352
        %v354 = vsub.f32 1.0, %v353
        %v355 = vmul.f32 %v352, %v354
        %v356 = vadd.f32 %v352, %v355
        %vm357 = vweird.f32 %v351
        %vm358 = vweird.f32 %v352
        %vm359 = vmor %vm357, %vm358
        %v360 = vsel %vm359, %v352, %v356
        %v361 = vand.u32 2147483647, %v351
        %vm362 = vcmp.eq.f32.partialorder %v361, 8.507059e+37
        %v363 = vand.u32 %v351, 2147483648
        %v364 = vor.u32 1.1754944e-38, %v363
        %v365 = vsel %vm362, %v364, %v360
        %s366 = vtos %v365
        %s367 = smul.f32 %s346, %s366
        %p369 = scmp.ne.f32.partialorder %s367, %s367
        %s370 = sshrl.u32 %s367, 16
        %s371 = sand.u32 %s370, 1
        %s372 = sadd.s32 32767, %s371
        %s373 = sadd.s32 %s367, %s372
        %s374 = sand.u32 %s373, 4294901760
        %s375 = scalar_select %p369, 2143289344, %s374
        %s377 = sshrl.u32 %s375, 16
        %s378 = smul.f32 %s348, %s366
        %p380 = scmp.ne.f32.partialorder %s378, %s378
        %s381 = sshrl.u32 %s378, 16
        %s382 = sand.u32 %s381, 1
        %s383 = sadd.s32 32767, %s382
        %s384 = sadd.s32 %s378, %s383
        %s385 = sand.u32 %s384, 4294901760
        %s386 = scalar_select %p380, 2143289344, %s385
        %s388 = sshrl.u32 %s386, 16
        %389 = vst [vmem:[#allocation2] sm:$0xf] 0
        %390 = vst [vmem:[#allocation2 + $0x4] sm:$0x1] 0
        %s391 = scalar_lea.vmem [#allocation2], 136
        %392 = vst [vmem:[%s391] sm:$0xf] 0
        %393 = vst [vmem:[%s391 + $0x4] sm:$0x1] 0
        %vm394 = vcmask 1040384
        %vm395 = vsmask.f32 256
        %vm396 = vmand %vm394, %vm395
        %v397 = vld [vmem:[#allocation2] sm:$0x1]
        %v398 = vsel %vm396, 0, %v397
        %399 = vst [vmem:[#allocation2] sm:$0x1] %v398
        %v400 = vld [vmem:[#allocation2 + $0x8] sm:$0x1]
        %v401 = vsel %vm396, 0, %v400
        %402 = vst [vmem:[#allocation2 + $0x8] sm:$0x1] %v401
        %v403 = vld [vmem:[#allocation2 + $0x10] sm:$0x1]
        %v404 = vsel %vm396, 0, %v403
        %405 = vst [vmem:[#allocation2 + $0x10] sm:$0x1] %v404
        %v406 = vld [vmem:[#allocation2 + $0x18] sm:$0x1]
        %v407 = vsel %vm396, 0, %v406
        %408 = vst [vmem:[#allocation2 + $0x18] sm:$0x1] %v407
        %v409 = vld [vmem:[#allocation2 + $0x20] sm:$0x1]
        %v410 = vsel %vm396, 0, %v409
        %411 = vst [vmem:[#allocation2 + $0x20] sm:$0x1] %v410
        %v412 = vld [vmem:[#allocation2 + $0x28] sm:$0x1]
        %v413 = vsel %vm396, 0, %v412
        %414 = vst [vmem:[#allocation2 + $0x28] sm:$0x1] %v413
        %v415 = vld [vmem:[#allocation2 + $0x30] sm:$0x1]
        %v416 = vsel %vm396, 0, %v415
        %417 = vst [vmem:[#allocation2 + $0x30] sm:$0x1] %v416
        %v418 = vld [vmem:[#allocation2 + $0x38] sm:$0x1]
        %v419 = vsel %vm396, 0, %v418
        %420 = vst [vmem:[#allocation2 + $0x38] sm:$0x1] %v419
        %v421 = vld [vmem:[#allocation2 + $0x40] sm:$0x1]
        %v422 = vsel %vm396, 0, %v421
        %423 = vst [vmem:[#allocation2 + $0x40] sm:$0x1] %v422
        %v424 = vld [vmem:[#allocation2 + $0x48] sm:$0x1]
        %v425 = vsel %vm396, 0, %v424
        %426 = vst [vmem:[#allocation2 + $0x48] sm:$0x1] %v425
        %v427 = vld [vmem:[#allocation2 + $0x50] sm:$0x1]
        %v428 = vsel %vm396, 0, %v427
        %429 = vst [vmem:[#allocation2 + $0x50] sm:$0x1] %v428
        %v430 = vld [vmem:[#allocation2 + $0x58] sm:$0x1]
        %v431 = vsel %vm396, 0, %v430
        %432 = vst [vmem:[#allocation2 + $0x58] sm:$0x1] %v431
        %v433 = vld [vmem:[#allocation2 + $0x60] sm:$0x1]
        %v434 = vsel %vm396, 0, %v433
        %435 = vst [vmem:[#allocation2 + $0x60] sm:$0x1] %v434
        %v436 = vld [vmem:[#allocation2 + $0x68] sm:$0x1]
        %v437 = vsel %vm396, 0, %v436
        %438 = vst [vmem:[#allocation2 + $0x68] sm:$0x1] %v437
        %v439 = vld [vmem:[#allocation2 + $0x70] sm:$0x1]
        %v440 = vsel %vm396, 0, %v439
        %441 = vst [vmem:[#allocation2 + $0x70] sm:$0x1] %v440
        %v442 = vld [vmem:[#allocation2 + $0x78] sm:$0x1]
        %v443 = vsel %vm396, 0, %v442
        %444 = vst [vmem:[#allocation2 + $0x78] sm:$0x1] %v443
        %v445 = vld [vmem:[#allocation2 + $0x80] sm:$0x1]
        %v446 = vsel %vm396, 0, %v445
        %447 = vst [vmem:[#allocation2 + $0x80] sm:$0x1] %v446
        %v448 = vld [vmem:[#allocation2 + $0x88] sm:$0x1]
        %v449 = vsel %vm396, 0, %v448
        %450 = vst [vmem:[#allocation2 + $0x88] sm:$0x1] %v449
        %vm451 = vsmask.f32 7938
        %vm452 = vmand %vm394, %vm451
        %v453 = vld [vmem:[#allocation2 + $0x4] sm:$0x1]
        %v454 = vsel %vm452, 0, %v453
        %455 = vst [vmem:[#allocation2 + $0x4] sm:$0x1] %v454
        %v456 = vld [vmem:[#allocation2 + $0xc] sm:$0x1]
        %v457 = vsel %vm452, 0, %v456
        %458 = vst [vmem:[#allocation2 + $0xc] sm:$0x1] %v457
        %v459 = vld [vmem:[#allocation2 + $0x14] sm:$0x1]
        %v460 = vsel %vm452, 0, %v459
        %461 = vst [vmem:[#allocation2 + $0x14] sm:$0x1] %v460
        %v462 = vld [vmem:[#allocation2 + $0x1c] sm:$0x1]
        %v463 = vsel %vm452, 0, %v462
        %464 = vst [vmem:[#allocation2 + $0x1c] sm:$0x1] %v463
        %v465 = vld [vmem:[#allocation2 + $0x24] sm:$0x1]
        %v466 = vsel %vm452, 0, %v465
        %467 = vst [vmem:[#allocation2 + $0x24] sm:$0x1] %v466
        %v468 = vld [vmem:[#allocation2 + $0x2c] sm:$0x1]
        %v469 = vsel %vm452, 0, %v468
        %470 = vst [vmem:[#allocation2 + $0x2c] sm:$0x1] %v469
        %v471 = vld [vmem:[#allocation2 + $0x34] sm:$0x1]
        %v472 = vsel %vm452, 0, %v471
        %473 = vst [vmem:[#allocation2 + $0x34] sm:$0x1] %v472
        %v474 = vld [vmem:[#allocation2 + $0x3c] sm:$0x1]
        %v475 = vsel %vm452, 0, %v474
        %476 = vst [vmem:[#allocation2 + $0x3c] sm:$0x1] %v475
        %v477 = vld [vmem:[#allocation2 + $0x44] sm:$0x1]
        %v478 = vsel %vm452, 0, %v477
        %479 = vst [vmem:[#allocation2 + $0x44] sm:$0x1] %v478
        %v480 = vld [vmem:[#allocation2 + $0x4c] sm:$0x1]
        %v481 = vsel %vm452, 0, %v480
        %482 = vst [vmem:[#allocation2 + $0x4c] sm:$0x1] %v481
        %v483 = vld [vmem:[#allocation2 + $0x54] sm:$0x1]
        %v484 = vsel %vm452, 0, %v483
        %485 = vst [vmem:[#allocation2 + $0x54] sm:$0x1] %v484
        %v486 = vld [vmem:[#allocation2 + $0x5c] sm:$0x1]
        %v487 = vsel %vm452, 0, %v486
        %488 = vst [vmem:[#allocation2 + $0x5c] sm:$0x1] %v487
        %v489 = vld [vmem:[#allocation2 + $0x64] sm:$0x1]
        %v490 = vsel %vm452, 0, %v489
        %491 = vst [vmem:[#allocation2 + $0x64] sm:$0x1] %v490
        %v492 = vld [vmem:[#allocation2 + $0x6c] sm:$0x1]
        %v493 = vsel %vm452, 0, %v492
        %494 = vst [vmem:[#allocation2 + $0x6c] sm:$0x1] %v493
        %v495 = vld [vmem:[#allocation2 + $0x74] sm:$0x1]
        %v496 = vsel %vm452, 0, %v495
        %497 = vst [vmem:[#allocation2 + $0x74] sm:$0x1] %v496
        %v498 = vld [vmem:[#allocation2 + $0x7c] sm:$0x1]
        %v499 = vsel %vm452, 0, %v498
        %500 = vst [vmem:[#allocation2 + $0x7c] sm:$0x1] %v499
        %v501 = vld [vmem:[#allocation2 + $0x84] sm:$0x1]
        %v502 = vsel %vm452, 0, %v501
        %503 = vst [vmem:[#allocation2 + $0x84] sm:$0x1] %v502
        %v504 = vld [vmem:[#allocation2 + $0x8c] sm:$0x1]
        %v505 = vsel %vm452, 0, %v504
        %506 = vst [vmem:[#allocation2 + $0x8c] sm:$0x1] %v505
        %v507 = vld [vmem:[%s293] sm:$0xff]
        %v508 = vld [vmem:[%s293 + $0x8] sm:$0xff]
        %v509 = vld [vmem:[%s293 + $0x10] sm:$0xff]
        %v510 = vld [vmem:[%s293 + $0x18] sm:$0xff]
        %v511 = vld [vmem:[%s293 + $0x20] sm:$0xff]
        %v512 = vld [vmem:[%s293 + $0x28] sm:$0xff]
        %v513 = vld [vmem:[%s293 + $0x30] sm:$0xff]
        %v514 = vld [vmem:[%s293 + $0x38] sm:$0xff]
        %v515 = vpack.c.bf16 %v508, %v507
        %v516 = vpack.c.bf16 %v510, %v509
        %v517 = vpack.c.bf16 %v512, %v511
        %v518 = vpack.c.bf16 %v514, %v513
        %v519 = vld [vmem:[%s3] sm:$0xf]
        %v520 = vld [vmem:[%s3 + $0x4] sm:$0xf]
        %v521 = vld [vmem:[%s3 + $0x8] sm:$0xf]
        %v522 = vld [vmem:[%s3 + $0xc] sm:$0xf]
        %v523 = vld [vmem:[%s3 + $0x10] sm:$0xf]
        %v524 = vld [vmem:[%s3 + $0x14] sm:$0xf]
        %v525 = vld [vmem:[%s3 + $0x18] sm:$0xf]
        %v526 = vld [vmem:[%s3 + $0x1c] sm:$0xf]
        %v527 = vld [vmem:[%s3 + $0x20] sm:$0xf]
        %v528 = vld [vmem:[%s3 + $0x24] sm:$0xf]
        %v529 = vld [vmem:[%s3 + $0x28] sm:$0xf]
        %v530 = vld [vmem:[%s3 + $0x2c] sm:$0xf]
        %v531 = vld [vmem:[%s3 + $0x30] sm:$0xf]
        %v532 = vld [vmem:[%s3 + $0x34] sm:$0xf]
        %v533 = vld [vmem:[%s3 + $0x38] sm:$0xf]
        %v534 = vld [vmem:[%s3 + $0x3c] sm:$0xf]
        %v551 = vunpack.c.l.b16 %v519
        %v552 = vunpack.c.l.b16 %v520
        %v553 = vunpack.c.l.b16 %v521
        %v554 = vunpack.c.l.b16 %v522
        %v555 = vunpack.c.l.b16 %v523
        %v556 = vunpack.c.l.b16 %v524
        %v557 = vunpack.c.l.b16 %v525
        %v558 = vunpack.c.l.b16 %v526
        %v559 = vunpack.c.l.b16 %v527
        %v560 = vunpack.c.l.b16 %v528
        %v561 = vunpack.c.l.b16 %v529
        %v562 = vunpack.c.l.b16 %v530
        %v563 = vunpack.c.l.b16 %v531
        %v564 = vunpack.c.l.b16 %v532
        %v565 = vunpack.c.l.b16 %v533
        %v566 = vunpack.c.l.b16 %v534
        %v567 = vpack.c.b16 %v552, %v551
        %v568 = vpack.c.b16 %v554, %v553
        %v569 = vpack.c.b16 %v556, %v555
        %v570 = vpack.c.b16 %v558, %v557
        %v571 = vpack.c.b16 %v560, %v559
        %v572 = vpack.c.b16 %v562, %v561
        %v573 = vpack.c.b16 %v564, %v563
        %v574 = vpack.c.b16 %v566, %v565
        %583 = vmatpush.bf16.msra.mxu0 %v574
        %584 = vmatpush.bf16.msra.mxu0 %v573
        %585 = vmatpush.bf16.msra.mxu0 %v572
        %586 = vmatpush.bf16.msra.mxu0 %v571
        %587 = vmatpush.bf16.msra.mxu0 %v570
        %588 = vmatpush.bf16.msra.mxu0 %v569
        %589 = vmatpush.bf16.msra.mxu0 %v568
        %590 = vmatpush.bf16.msra.mxu0 %v567
        %591 = vmatmul.bf16.gmra.mxu0 %v515
        %v592 = vpop.f32.mrf.mxu0
        %v593 = vadd.f32 0.0, %v592
        %v594 = vpop.f32.mrf.mxu0
        %v595 = vadd.f32 0.0, %v594
        %596 = vmatmul.bf16.gmra.mxu0 %v516
        %v597 = vpop.f32.mrf.mxu0
        %v598 = vadd.f32 0.0, %v597
        %v599 = vpop.f32.mrf.mxu0
        %v600 = vadd.f32 0.0, %v599
        %601 = vmatmul.bf16.gmra.mxu0 %v517
        %v602 = vpop.f32.mrf.mxu0
        %v603 = vadd.f32 0.0, %v602
        %v604 = vpop.f32.mrf.mxu0
        %v605 = vadd.f32 0.0, %v604
        %606 = vmatmul.bf16.gmra.mxu0 %v518
        %v607 = vpop.f32.mrf.mxu0
        %v608 = vadd.f32 0.0, %v607
        %v609 = vpop.f32.mrf.mxu0
        %v610 = vadd.f32 0.0, %v609
        %611 = vdwg.mxu0
        %v612 = vlaneseq
        %v613 = vshrl.u32 %v612, 7
        %vm614 = vcmp.eq.s32.totalorder %v613, 0
        %v615 = vrot.slane %v593, 7
        %v616 = vrot.slane %v595, 7
        %v617 = vrot.slane %v598, 7
        %v618 = vrot.slane %v600, 7
        %v619 = vrot.slane %v603, 7
        %v620 = vrot.slane %v605, 7
        %v621 = vrot.slane %v608, 7
        %v622 = vrot.slane %v610, 7
        %v623 = vsel %vm614, 1, 0
        %vm624 = vcmp.eq.s32.totalorder %v623, 1
        %v625 = vsel %vm624, %v593, %v615
        %v626 = vsel %vm624, %v595, %v616
        %v627 = vsel %vm624, %v598, %v617
        %v628 = vsel %vm624, %v600, %v618
        %v629 = vsel %vm624, %v603, %v619
        %v630 = vsel %vm624, %v605, %v620
        %v631 = vsel %vm624, %v608, %v621
        %v632 = vsel %vm624, %v610, %v622
        %vm633 = vcmp.eq.s32.totalorder %v613, 7
        %v634 = vrot.slane %v593, 1
        %v635 = vrot.slane %v595, 1
        %v636 = vrot.slane %v598, 1
        %v637 = vrot.slane %v600, 1
        %v638 = vrot.slane %v603, 1
        %v639 = vrot.slane %v605, 1
        %v640 = vrot.slane %v608, 1
        %v641 = vrot.slane %v610, 1
        %v642 = vsel %vm633, 1, 0
        %vm643 = vcmp.eq.s32.totalorder %v642, 1
        %v644 = vsel %vm643, %v593, %v634
        %v645 = vsel %vm643, %v595, %v635
        %v646 = vsel %vm643, %v598, %v636
        %v647 = vsel %vm643, %v600, %v637
        %v648 = vsel %vm643, %v603, %v638
        %v649 = vsel %vm643, %v605, %v639
        %v650 = vsel %vm643, %v608, %v640
        %v651 = vsel %vm643, %v610, %v641
        %v652 = vmul.f32 %v593, 0.75
        %v653 = vmul.f32 %v595, 0.75
        %v654 = vmul.f32 %v598, 0.75
        %v655 = vmul.f32 %v600, 0.75
        %v656 = vmul.f32 %v603, 0.75
        %v657 = vmul.f32 %v605, 0.75
        %v658 = vmul.f32 %v608, 0.75
        %v659 = vmul.f32 %v610, 0.75
        %v660 = vmul.f32 %v625, 0.25
        %v661 = vmul.f32 %v626, 0.25
        %v662 = vmul.f32 %v627, 0.25
        %v663 = vmul.f32 %v628, 0.25
        %v664 = vmul.f32 %v629, 0.25
        %v665 = vmul.f32 %v630, 0.25
        %v666 = vmul.f32 %v631, 0.25
        %v667 = vmul.f32 %v632, 0.25
        %v668 = vadd.f32 %v652, %v660
        %v669 = vadd.f32 %v653, %v661
        %v670 = vadd.f32 %v654, %v662
        %v671 = vadd.f32 %v655, %v663
        %v672 = vadd.f32 %v656, %v664
        %v673 = vadd.f32 %v657, %v665
        %v674 = vadd.f32 %v658, %v666
        %v675 = vadd.f32 %v659, %v667
        %v676 = vmul.f32 %v644, 0.25
        %v677 = vmul.f32 %v645, 0.25
        %v678 = vmul.f32 %v646, 0.25
        %v679 = vmul.f32 %v647, 0.25
        %v680 = vmul.f32 %v648, 0.25
        %v681 = vmul.f32 %v649, 0.25
        %v682 = vmul.f32 %v650, 0.25
        %v683 = vmul.f32 %v651, 0.25
        %v684 = vadd.f32 %v652, %v676
        %v685 = vadd.f32 %v653, %v677
        %v686 = vadd.f32 %v654, %v678
        %v687 = vadd.f32 %v655, %v679
        %v688 = vadd.f32 %v656, %v680
        %v689 = vadd.f32 %v657, %v681
        %v690 = vadd.f32 %v658, %v682
        %v691 = vadd.f32 %v659, %v683
        %700 = vrot.lane.b32.xlu0 %v684, 64
        %v701 = vpop.permute.xlu0 %700
        %702 = vrot.lane.b32.xlu0 %v685, 64
        %v703 = vpop.permute.xlu0 %702
        %704 = vrot.lane.b32.xlu0 %v686, 64
        %v705 = vpop.permute.xlu0 %704
        %706 = vrot.lane.b32.xlu0 %v687, 64
        %v707 = vpop.permute.xlu0 %706
        %708 = vrot.lane.b32.xlu0 %v688, 64
        %v709 = vpop.permute.xlu0 %708
        %710 = vrot.lane.b32.xlu0 %v689, 64
        %v711 = vpop.permute.xlu0 %710
        %712 = vrot.lane.b32.xlu0 %v690, 64
        %v713 = vpop.permute.xlu0 %712
        %714 = vrot.lane.b32.xlu0 %v691, 64
        %v715 = vpop.permute.xlu0 %714
        %vm724 = vcmask 523264
        %v725 = vsel %vm724, %v668, %v701
        %v726 = vsel %vm724, %v669, %v703
        %v727 = vsel %vm724, %v670, %v705
        %v728 = vsel %vm724, %v671, %v707
        %v729 = vsel %vm724, %v672, %v709
        %v730 = vsel %vm724, %v673, %v711
        %v731 = vsel %vm724, %v674, %v713
        %v732 = vsel %vm724, %v675, %v715
        %v733 = vpack.c.bf16 %v725, %v725
        %v734 = vpack.c.bf16 %v726, %v726
        %v735 = vpack.c.bf16 %v727, %v727
        %v736 = vpack.c.bf16 %v728, %v728
        %v737 = vpack.c.bf16 %v729, %v729
        %v738 = vpack.c.bf16 %v730, %v730
        %v739 = vpack.c.bf16 %v731, %v731
        %v740 = vpack.c.bf16 %v732, %v732
        %v741 = vunpack.c.l.bf16 %v733
        %v742 = vunpack.c.l.bf16 %v734
        %v743 = vunpack.c.l.bf16 %v735
        %v744 = vunpack.c.l.bf16 %v736
        %v745 = vunpack.c.l.bf16 %v737
        %v746 = vunpack.c.l.bf16 %v738
        %v747 = vunpack.c.l.bf16 %v739
        %v748 = vunpack.c.l.bf16 %v740
        %v749 = vmul.f32 %v741, 0.75
        %v750 = vmul.f32 %v742, 0.75
        %v751 = vmul.f32 %v743, 0.75
        %v752 = vmul.f32 %v744, 0.75
        %v753 = vmul.f32 %v745, 0.75
        %v754 = vmul.f32 %v746, 0.75
        %v755 = vmul.f32 %v747, 0.75
        %v756 = vmul.f32 %v748, 0.75
        %v757 = vpack.c.bf16 %v749, %v749
        %v758 = vpack.c.bf16 %v750, %v750
        %v759 = vpack.c.bf16 %v751, %v751
        %v760 = vpack.c.bf16 %v752, %v752
        %v761 = vpack.c.bf16 %v753, %v753
        %v762 = vpack.c.bf16 %v754, %v754
        %v763 = vpack.c.bf16 %v755, %v755
        %v764 = vpack.c.bf16 %v756, %v756
        %v765 = vmul.f32 %v741, 0.25
        %v766 = vmul.f32 %v742, 0.25
        %v767 = vmul.f32 %v743, 0.25
        %v768 = vmul.f32 %v744, 0.25
        %v769 = vmul.f32 %v745, 0.25
        %v770 = vmul.f32 %v746, 0.25
        %v771 = vmul.f32 %v747, 0.25
        %v772 = vpack.c.bf16 %v765, %v765
        %v773 = vpack.c.bf16 %v766, %v766
        %v774 = vpack.c.bf16 %v767, %v767
        %v775 = vpack.c.bf16 %v768, %v768
        %v776 = vpack.c.bf16 %v769, %v769
        %v777 = vpack.c.bf16 %v770, %v770
        %v778 = vpack.c.bf16 %v771, %v771
        %v779 = vunpack.c.l.bf16 %v757
        %v780 = vunpack.c.l.bf16 %v758
        %v781 = vunpack.c.l.bf16 %v759
        %v782 = vunpack.c.l.bf16 %v760
        %v783 = vunpack.c.l.bf16 %v761
        %v784 = vunpack.c.l.bf16 %v762
        %v785 = vunpack.c.l.bf16 %v763
        %v786 = vunpack.c.l.bf16 %v764
        %v787 = vunpack.c.l.bf16 %v772
        %v788 = vunpack.c.l.bf16 %v773
        %v789 = vunpack.c.l.bf16 %v774
        %v790 = vunpack.c.l.bf16 %v775
        %v791 = vunpack.c.l.bf16 %v776
        %v792 = vunpack.c.l.bf16 %v777
        %v793 = vunpack.c.l.bf16 %v778
        %v794 = vadd.f32 %v779, %v787
        %v795 = vadd.f32 %v780, %v787
        %v796 = vadd.f32 %v781, %v788
        %v797 = vadd.f32 %v782, %v789
        %v798 = vadd.f32 %v783, %v790
        %v799 = vadd.f32 %v784, %v791
        %v800 = vadd.f32 %v785, %v792
        %v801 = vadd.f32 %v786, %v793
        %v802 = vpack.c.bf16 %v794, %v794
        %v803 = vpack.c.bf16 %v795, %v795
        %v804 = vpack.c.bf16 %v796, %v796
        %v805 = vpack.c.bf16 %v797, %v797
        %v806 = vpack.c.bf16 %v798, %v798
        %v807 = vpack.c.bf16 %v799, %v799
        %v808 = vpack.c.bf16 %v800, %v800
        %v809 = vpack.c.bf16 %v801, %v801
        %v810 = vmul.f32 %v748, 0.25
        %v811 = vpack.c.bf16 %v810, %v810
        %v812 = vunpack.c.l.bf16 %v811
        %v813 = vadd.f32 %v779, %v788
        %v814 = vadd.f32 %v780, %v789
        %v815 = vadd.f32 %v781, %v790
        %v816 = vadd.f32 %v782, %v791
        %v817 = vadd.f32 %v783, %v792
        %v818 = vadd.f32 %v784, %v793
        %v819 = vadd.f32 %v785, %v812
        %v820 = vadd.f32 %v786, %v812
        %v821 = vpack.c.bf16 %v813, %v813
        %v822 = vpack.c.bf16 %v814, %v814
        %v823 = vpack.c.bf16 %v815, %v815
        %v824 = vpack.c.bf16 %v816, %v816
        %v825 = vpack.c.bf16 %v817, %v817
        %v826 = vpack.c.bf16 %v818, %v818
        %v827 = vpack.c.bf16 %v819, %v819
        %v828 = vpack.c.bf16 %v820, %v820
        %v829 = vld [vmem:[%s303] sm:$0xff]
        %v830 = vld [vmem:[%s303 + $0x8] sm:$0xff]
        %v831 = vld [vmem:[%s303 + $0x10] sm:$0xff]
        %v832 = vld [vmem:[%s303 + $0x18] sm:$0xff]
        %v833 = vld [vmem:[%s303 + $0x20] sm:$0xff]
        %v834 = vld [vmem:[%s303 + $0x28] sm:$0xff]
        %v835 = vld [vmem:[%s303 + $0x30] sm:$0xff]
        %v836 = vld [vmem:[%s303 + $0x38] sm:$0xff]
        %v837 = vld [vmem:[%s303 + $0x40] sm:$0xff]
        %v838 = vld [vmem:[%s303 + $0x48] sm:$0xff]
        %v839 = vld [vmem:[%s303 + $0x50] sm:$0xff]
        %v840 = vld [vmem:[%s303 + $0x58] sm:$0xff]
        %v841 = vld [vmem:[%s303 + $0x60] sm:$0xff]
        %v842 = vld [vmem:[%s303 + $0x68] sm:$0xff]
        %v843 = vld [vmem:[%s303 + $0x70] sm:$0xff]
        %v844 = vld [vmem:[%s303 + $0x78] sm:$0xff]
        %v845 = vpack.c.bf16 %v829, %v829
        %v846 = vpack.c.bf16 %v830, %v830
        %v847 = vpack.c.bf16 %v831, %v831
        %v848 = vpack.c.bf16 %v832, %v832
        %v849 = vpack.c.bf16 %v833, %v833
        %v850 = vpack.c.bf16 %v834, %v834
        %v851 = vpack.c.bf16 %v835, %v835
        %v852 = vpack.c.bf16 %v836, %v836
        %v853 = vpack.c.bf16 %v837, %v837
        %v854 = vpack.c.bf16 %v838, %v838
        %v855 = vpack.c.bf16 %v839, %v839
        %v856 = vpack.c.bf16 %v840, %v840
        %v857 = vpack.c.bf16 %v841, %v841
        %v858 = vpack.c.bf16 %v842, %v842
        %v859 = vpack.c.bf16 %v843, %v843
        %v860 = vpack.c.bf16 %v844, %v844
        %s861 = sshll.u32 %s377, 16
        %s862 = sor.u32 %s377, %s861
        %v863 = vstv %s862
        %v865 = vunpack.c.l.bf16 %v863
        %v866 = vunpack.c.l.bf16 %v845
        %v867 = vunpack.c.l.bf16 %v846
        %v868 = vunpack.c.l.bf16 %v847
        %v869 = vunpack.c.l.bf16 %v848
        %v870 = vunpack.c.l.bf16 %v849
        %v871 = vunpack.c.l.bf16 %v850
        %v872 = vunpack.c.l.bf16 %v851
        %v873 = vunpack.c.l.bf16 %v852
        %v874 = vunpack.c.l.bf16 %v853
        %v875 = vunpack.c.l.bf16 %v854
        %v876 = vunpack.c.l.bf16 %v855
        %v877 = vunpack.c.l.bf16 %v856
        %v878 = vunpack.c.l.bf16 %v857
        %v879 = vunpack.c.l.bf16 %v858
        %v880 = vunpack.c.l.bf16 %v859
        %v881 = vunpack.c.l.bf16 %v860
        %v882 = vmul.f32 %v865, %v866
        %v883 = vmul.f32 %v865, %v867
        %v884 = vmul.f32 %v865, %v868
        %v885 = vmul.f32 %v865, %v869
        %v886 = vmul.f32 %v865, %v870
        %v887 = vmul.f32 %v865, %v871
        %v888 = vmul.f32 %v865, %v872
        %v889 = vmul.f32 %v865, %v873
        %v890 = vmul.f32 %v865, %v874
        %v891 = vmul.f32 %v865, %v875
        %v892 = vmul.f32 %v865, %v876
        %v893 = vmul.f32 %v865, %v877
        %v894 = vmul.f32 %v865, %v878
        %v895 = vmul.f32 %v865, %v879
        %v896 = vmul.f32 %v865, %v880
        %v897 = vmul.f32 %v865, %v881
        %v898 = vpack.c.bf16 %v882, %v882
        %v899 = vpack.c.bf16 %v883, %v883
        %v900 = vpack.c.bf16 %v884, %v884
        %v901 = vpack.c.bf16 %v885, %v885
        %v902 = vpack.c.bf16 %v886, %v886
        %v903 = vpack.c.bf16 %v887, %v887
        %v904 = vpack.c.bf16 %v888, %v888
        %v905 = vpack.c.bf16 %v889, %v889
        %v906 = vpack.c.bf16 %v890, %v890
        %v907 = vpack.c.bf16 %v891, %v891
        %v908 = vpack.c.bf16 %v892, %v892
        %v909 = vpack.c.bf16 %v893, %v893
        %v910 = vpack.c.bf16 %v894, %v894
        %v911 = vpack.c.bf16 %v895, %v895
        %v912 = vpack.c.bf16 %v896, %v896
        %v913 = vpack.c.bf16 %v897, %v897
        %s914 = sshll.u32 %s388, 16
        %s915 = sor.u32 %s388, %s914
        %v916 = vstv %s915
        %v918 = vunpack.c.l.bf16 %v916
        %v919 = vunpack.c.l.bf16 %v802
        %v920 = vunpack.c.l.bf16 %v821
        %v921 = vunpack.c.l.bf16 %v803
        %v922 = vunpack.c.l.bf16 %v822
        %v923 = vunpack.c.l.bf16 %v804
        %v924 = vunpack.c.l.bf16 %v823
        %v925 = vunpack.c.l.bf16 %v805
        %v926 = vunpack.c.l.bf16 %v824
        %v927 = vunpack.c.l.bf16 %v806
        %v928 = vunpack.c.l.bf16 %v825
        %v929 = vunpack.c.l.bf16 %v807
        %v930 = vunpack.c.l.bf16 %v826
        %v931 = vunpack.c.l.bf16 %v808
        %v932 = vunpack.c.l.bf16 %v827
        %v933 = vunpack.c.l.bf16 %v809
        %v934 = vunpack.c.l.bf16 %v828
        %v935 = vmul.f32 %v918, %v919
        %v936 = vmul.f32 %v918, %v920
        %v937 = vmul.f32 %v918, %v921
        %v938 = vmul.f32 %v918, %v922
        %v939 = vmul.f32 %v918, %v923
        %v940 = vmul.f32 %v918, %v924
        %v941 = vmul.f32 %v918, %v925
        %v942 = vmul.f32 %v918, %v926
        %v943 = vmul.f32 %v918, %v927
        %v944 = vmul.f32 %v918, %v928
        %v945 = vmul.f32 %v918, %v929
        %v946 = vmul.f32 %v918, %v930
        %v947 = vmul.f32 %v918, %v931
        %v948 = vmul.f32 %v918, %v932
        %v949 = vmul.f32 %v918, %v933
        %v950 = vmul.f32 %v918, %v934
        %v951 = vpack.c.bf16 %v935, %v935
        %v952 = vpack.c.bf16 %v936, %v936
        %v953 = vpack.c.bf16 %v937, %v937
        %v954 = vpack.c.bf16 %v938, %v938
        %v955 = vpack.c.bf16 %v939, %v939
        %v956 = vpack.c.bf16 %v940, %v940
        %v957 = vpack.c.bf16 %v941, %v941
        %v958 = vpack.c.bf16 %v942, %v942
        %v959 = vpack.c.bf16 %v943, %v943
        %v960 = vpack.c.bf16 %v944, %v944
        %v961 = vpack.c.bf16 %v945, %v945
        %v962 = vpack.c.bf16 %v946, %v946
        %v963 = vpack.c.bf16 %v947, %v947
        %v964 = vpack.c.bf16 %v948, %v948
        %v965 = vpack.c.bf16 %v949, %v949
        %v966 = vpack.c.bf16 %v950, %v950
        %v967 = vunpack.c.l.bf16 %v898
        %v968 = vunpack.c.l.bf16 %v899
        %v969 = vunpack.c.l.bf16 %v900
        %v970 = vunpack.c.l.bf16 %v901
        %v971 = vunpack.c.l.bf16 %v902
        %v972 = vunpack.c.l.bf16 %v903
        %v973 = vunpack.c.l.bf16 %v904
        %v974 = vunpack.c.l.bf16 %v905
        %v975 = vunpack.c.l.bf16 %v906
        %v976 = vunpack.c.l.bf16 %v907
        %v977 = vunpack.c.l.bf16 %v908
        %v978 = vunpack.c.l.bf16 %v909
        %v979 = vunpack.c.l.bf16 %v910
        %v980 = vunpack.c.l.bf16 %v911
        %v981 = vunpack.c.l.bf16 %v912
        %v982 = vunpack.c.l.bf16 %v913
        %v983 = vunpack.c.l.bf16 %v951
        %v984 = vunpack.c.l.bf16 %v952
        %v985 = vunpack.c.l.bf16 %v953
        %v986 = vunpack.c.l.bf16 %v954
        %v987 = vunpack.c.l.bf16 %v955
        %v988 = vunpack.c.l.bf16 %v956
        %v989 = vunpack.c.l.bf16 %v957
        %v990 = vunpack.c.l.bf16 %v958
        %v991 = vunpack.c.l.bf16 %v959
        %v992 = vunpack.c.l.bf16 %v960
        %v993 = vunpack.c.l.bf16 %v961
        %v994 = vunpack.c.l.bf16 %v962
        %v995 = vunpack.c.l.bf16 %v963
        %v996 = vunpack.c.l.bf16 %v964
        %v997 = vunpack.c.l.bf16 %v965
        %v998 = vunpack.c.l.bf16 %v966
        %v999 = vadd.f32 %v967, %v983
        %v1000 = vadd.f32 %v968, %v984
        %v1001 = vadd.f32 %v969, %v985
        %v1002 = vadd.f32 %v970, %v986
        %v1003 = vadd.f32 %v971, %v987
        %v1004 = vadd.f32 %v972, %v988
        %v1005 = vadd.f32 %v973, %v989
        %v1006 = vadd.f32 %v974, %v990
        %v1007 = vadd.f32 %v975, %v991
        %v1008 = vadd.f32 %v976, %v992
        %v1009 = vadd.f32 %v977, %v993
        %v1010 = vadd.f32 %v978, %v994
        %v1011 = vadd.f32 %v979, %v995
        %v1012 = vadd.f32 %v980, %v996
        %v1013 = vadd.f32 %v981, %v997
        %v1014 = vadd.f32 %v982, %v998
        %v1015 = vpack.c.bf16 %v999, %v999
        %v1016 = vpack.c.bf16 %v1000, %v1000
        %v1017 = vpack.c.bf16 %v1001, %v1001
        %v1018 = vpack.c.bf16 %v1002, %v1002
        %v1019 = vpack.c.bf16 %v1003, %v1003
        %v1020 = vpack.c.bf16 %v1004, %v1004
        %v1021 = vpack.c.bf16 %v1005, %v1005
        %v1022 = vpack.c.bf16 %v1006, %v1006
        %v1023 = vpack.c.bf16 %v1007, %v1007
        %v1024 = vpack.c.bf16 %v1008, %v1008
        %v1025 = vpack.c.bf16 %v1009, %v1009
        %v1026 = vpack.c.bf16 %v1010, %v1010
        %v1027 = vpack.c.bf16 %v1011, %v1011
        %v1028 = vpack.c.bf16 %v1012, %v1012
        %v1029 = vpack.c.bf16 %v1013, %v1013
        %v1030 = vpack.c.bf16 %v1014, %v1014
        %v1032 = vshrl.u32 %v1015, 16
        %v1034 = vrot.slane %v1032, 7
        %v1035 = vshll.u32 %v1015, 16
        %v1037 = vor.u32 %v1034, %v1035
        %v1038 = vrot.slane %v1034, 4
        %v1040 = vshrl.u32 %v1016, 16
        %v1042 = vrot.slane %v1040, 7
        %v1043 = vshll.u32 %v1016, 16
        %v1045 = vor.u32 %v1042, %v1043
        %v1046 = vrot.slane %v1042, 4
        %v1048 = vshrl.u32 %v1017, 16
        %v1050 = vrot.slane %v1048, 7
        %v1051 = vshll.u32 %v1017, 16
        %v1053 = vor.u32 %v1050, %v1051
        %v1054 = vrot.slane %v1050, 4
        %v1056 = vshrl.u32 %v1018, 16
        %v1058 = vrot.slane %v1056, 7
        %v1059 = vshll.u32 %v1018, 16
        %v1061 = vor.u32 %v1058, %v1059
        %v1062 = vrot.slane %v1058, 4
        %v1064 = vshrl.u32 %v1019, 16
        %v1066 = vrot.slane %v1064, 7
        %v1067 = vshll.u32 %v1019, 16
        %v1069 = vor.u32 %v1066, %v1067
        %v1070 = vrot.slane %v1066, 4
        %v1072 = vshrl.u32 %v1020, 16
        %v1074 = vrot.slane %v1072, 7
        %v1075 = vshll.u32 %v1020, 16
        %v1077 = vor.u32 %v1074, %v1075
        %v1078 = vrot.slane %v1074, 4
        %v1080 = vshrl.u32 %v1021, 16
        %v1082 = vrot.slane %v1080, 7
        %v1083 = vshll.u32 %v1021, 16
        %v1085 = vor.u32 %v1082, %v1083
        %v1086 = vrot.slane %v1082, 4
        %v1088 = vshrl.u32 %v1022, 16
        %v1090 = vrot.slane %v1088, 7
        %v1091 = vshll.u32 %v1022, 16
        %v1093 = vor.u32 %v1090, %v1091
        %v1094 = vrot.slane %v1090, 4
        %v1096 = vshrl.u32 %v1023, 16
        %v1098 = vrot.slane %v1096, 7
        %v1099 = vshll.u32 %v1023, 16
        %v1101 = vor.u32 %v1098, %v1099
        %v1102 = vrot.slane %v1098, 4
        %v1104 = vshrl.u32 %v1024, 16
        %v1106 = vrot.slane %v1104, 7
        %v1107 = vshll.u32 %v1024, 16
        %v1109 = vor.u32 %v1106, %v1107
        %v1110 = vrot.slane %v1106, 4
        %v1112 = vshrl.u32 %v1025, 16
        %v1114 = vrot.slane %v1112, 7
        %v1115 = vshll.u32 %v1025, 16
        %v1117 = vor.u32 %v1114, %v1115
        %v1118 = vrot.slane %v1114, 4
        %v1120 = vshrl.u32 %v1026, 16
        %v1122 = vrot.slane %v1120, 7
        %v1123 = vshll.u32 %v1026, 16
        %v1125 = vor.u32 %v1122, %v1123
        %v1126 = vrot.slane %v1122, 4
        %v1128 = vshrl.u32 %v1027, 16
        %v1130 = vrot.slane %v1128, 7
        %v1131 = vshll.u32 %v1027, 16
        %v1133 = vor.u32 %v1130, %v1131
        %v1134 = vrot.slane %v1130, 4
        %v1136 = vshrl.u32 %v1028, 16
        %v1138 = vrot.slane %v1136, 7
        %v1139 = vshll.u32 %v1028, 16
        %v1141 = vor.u32 %v1138, %v1139
        %v1142 = vrot.slane %v1138, 4
        %v1144 = vshrl.u32 %v1029, 16
        %v1146 = vrot.slane %v1144, 7
        %v1147 = vshll.u32 %v1029, 16
        %v1149 = vor.u32 %v1146, %v1147
        %v1150 = vrot.slane %v1146, 4
        %v1152 = vshrl.u32 %v1030, 16
        %v1154 = vrot.slane %v1152, 7
        %v1155 = vshll.u32 %v1030, 16
        %v1157 = vor.u32 %v1154, %v1155
        %v1158 = vrot.slane %v1154, 4
        %s1191 = scalar_lea.vmem [#allocation2], 8
        %vm1192 = vcmask 1043456
        %vm1193 = vmand %vm1192, %vm451
        %v1194 = vld [vmem:[%s1191] sm:$0xf]
        %v1195 = vsel %vm1193, %v1037, %v1194
        %1196 = vst [vmem:[%s1191] sm:$0xf] %v1195
        %v1197 = vld [vmem:[%s1191 + $0x4] sm:$0x1]
        %v1198 = vsel %vm396, %v1038, %v1197
        %1199 = vst [vmem:[%s1191 + $0x4] sm:$0x1] %v1198
        %v1200 = vld [vmem:[%s1191 + $0x8] sm:$0xf]
        %v1201 = vsel %vm1193, %v1045, %v1200
        %1202 = vst [vmem:[%s1191 + $0x8] sm:$0xf] %v1201
        %v1203 = vld [vmem:[%s1191 + $0xc] sm:$0x1]
        %v1204 = vsel %vm396, %v1046, %v1203
        %1205 = vst [vmem:[%s1191 + $0xc] sm:$0x1] %v1204
        %v1206 = vld [vmem:[%s1191 + $0x10] sm:$0xf]
        %v1207 = vsel %vm1193, %v1053, %v1206
        %1208 = vst [vmem:[%s1191 + $0x10] sm:$0xf] %v1207
        %v1209 = vld [vmem:[%s1191 + $0x14] sm:$0x1]
        %v1210 = vsel %vm396, %v1054, %v1209
        %1211 = vst [vmem:[%s1191 + $0x14] sm:$0x1] %v1210
        %v1212 = vld [vmem:[%s1191 + $0x18] sm:$0xf]
        %v1213 = vsel %vm1193, %v1061, %v1212
        %1214 = vst [vmem:[%s1191 + $0x18] sm:$0xf] %v1213
        %v1215 = vld [vmem:[%s1191 + $0x1c] sm:$0x1]
        %v1216 = vsel %vm396, %v1062, %v1215
        %1217 = vst [vmem:[%s1191 + $0x1c] sm:$0x1] %v1216
        %v1218 = vld [vmem:[%s1191 + $0x20] sm:$0xf]
        %v1219 = vsel %vm1193, %v1069, %v1218
        %1220 = vst [vmem:[%s1191 + $0x20] sm:$0xf] %v1219
        %v1221 = vld [vmem:[%s1191 + $0x24] sm:$0x1]
        %v1222 = vsel %vm396, %v1070, %v1221
        %1223 = vst [vmem:[%s1191 + $0x24] sm:$0x1] %v1222
        %v1224 = vld [vmem:[%s1191 + $0x28] sm:$0xf]
        %v1225 = vsel %vm1193, %v1077, %v1224
        %1226 = vst [vmem:[%s1191 + $0x28] sm:$0xf] %v1225
        %v1227 = vld [vmem:[%s1191 + $0x2c] sm:$0x1]
        %v1228 = vsel %vm396, %v1078, %v1227
        %1229 = vst [vmem:[%s1191 + $0x2c] sm:$0x1] %v1228
        %v1230 = vld [vmem:[%s1191 + $0x30] sm:$0xf]
        %v1231 = vsel %vm1193, %v1085, %v1230
        %1232 = vst [vmem:[%s1191 + $0x30] sm:$0xf] %v1231
        %v1233 = vld [vmem:[%s1191 + $0x34] sm:$0x1]
        %v1234 = vsel %vm396, %v1086, %v1233
        %1235 = vst [vmem:[%s1191 + $0x34] sm:$0x1] %v1234
        %v1236 = vld [vmem:[%s1191 + $0x38] sm:$0xf]
        %v1237 = vsel %vm1193, %v1093, %v1236
        %1238 = vst [vmem:[%s1191 + $0x38] sm:$0xf] %v1237
        %v1239 = vld [vmem:[%s1191 + $0x3c] sm:$0x1]
        %v1240 = vsel %vm396, %v1094, %v1239
        %1241 = vst [vmem:[%s1191 + $0x3c] sm:$0x1] %v1240
        %v1242 = vld [vmem:[%s1191 + $0x40] sm:$0xf]
        %v1243 = vsel %vm1193, %v1101, %v1242
        %1244 = vst [vmem:[%s1191 + $0x40] sm:$0xf] %v1243
        %v1245 = vld [vmem:[%s1191 + $0x44] sm:$0x1]
        %v1246 = vsel %vm396, %v1102, %v1245
        %1247 = vst [vmem:[%s1191 + $0x44] sm:$0x1] %v1246
        %v1248 = vld [vmem:[%s1191 + $0x48] sm:$0xf]
        %v1249 = vsel %vm1193, %v1109, %v1248
        %1250 = vst [vmem:[%s1191 + $0x48] sm:$0xf] %v1249
        %v1251 = vld [vmem:[%s1191 + $0x4c] sm:$0x1]
        %v1252 = vsel %vm396, %v1110, %v1251
        %1253 = vst [vmem:[%s1191 + $0x4c] sm:$0x1] %v1252
        %v1254 = vld [vmem:[%s1191 + $0x50] sm:$0xf]
        %v1255 = vsel %vm1193, %v1117, %v1254
        %1256 = vst [vmem:[%s1191 + $0x50] sm:$0xf] %v1255
        %v1257 = vld [vmem:[%s1191 + $0x54] sm:$0x1]
        %v1258 = vsel %vm396, %v1118, %v1257
        %1259 = vst [vmem:[%s1191 + $0x54] sm:$0x1] %v1258
        %v1260 = vld [vmem:[%s1191 + $0x58] sm:$0xf]
        %v1261 = vsel %vm1193, %v1125, %v1260
        %1262 = vst [vmem:[%s1191 + $0x58] sm:$0xf] %v1261
        %v1263 = vld [vmem:[%s1191 + $0x5c] sm:$0x1]
        %v1264 = vsel %vm396, %v1126, %v1263
        %1265 = vst [vmem:[%s1191 + $0x5c] sm:$0x1] %v1264
        %v1266 = vld [vmem:[%s1191 + $0x60] sm:$0xf]
        %v1267 = vsel %vm1193, %v1133, %v1266
        %1268 = vst [vmem:[%s1191 + $0x60] sm:$0xf] %v1267
        %v1269 = vld [vmem:[%s1191 + $0x64] sm:$0x1]
        %v1270 = vsel %vm396, %v1134, %v1269
        %1271 = vst [vmem:[%s1191 + $0x64] sm:$0x1] %v1270
        %v1272 = vld [vmem:[%s1191 + $0x68] sm:$0xf]
        %v1273 = vsel %vm1193, %v1141, %v1272
        %1274 = vst [vmem:[%s1191 + $0x68] sm:$0xf] %v1273
        %v1275 = vld [vmem:[%s1191 + $0x6c] sm:$0x1]
        %v1276 = vsel %vm396, %v1142, %v1275
        %1277 = vst [vmem:[%s1191 + $0x6c] sm:$0x1] %v1276
        %v1278 = vld [vmem:[%s1191 + $0x70] sm:$0xf]
        %v1279 = vsel %vm1193, %v1149, %v1278
        %1280 = vst [vmem:[%s1191 + $0x70] sm:$0xf] %v1279
        %v1281 = vld [vmem:[%s1191 + $0x74] sm:$0x1]
        %v1282 = vsel %vm396, %v1150, %v1281
        %1283 = vst [vmem:[%s1191 + $0x74] sm:$0x1] %v1282
        %v1284 = vld [vmem:[%s1191 + $0x78] sm:$0xf]
        %v1285 = vsel %vm1193, %v1157, %v1284
        %1286 = vst [vmem:[%s1191 + $0x78] sm:$0xf] %v1285
        %v1287 = vld [vmem:[%s1191 + $0x7c] sm:$0x1]
        %v1288 = vsel %vm396, %v1158, %v1287
        %1289 = vst [vmem:[%s1191 + $0x7c] sm:$0x1] %v1288
        %v1290 = vld [vmem:[#allocation2] sm:$0xf]
        %v1291 = vld [vmem:[#allocation2 + $0x8] sm:$0xf]
        %v1292 = vld [vmem:[#allocation2 + $0x10] sm:$0xf]
        %v1293 = vld [vmem:[#allocation2 + $0x18] sm:$0xf]
        %v1294 = vld [vmem:[#allocation2 + $0x20] sm:$0xf]
        %v1295 = vld [vmem:[#allocation2 + $0x28] sm:$0xf]
        %v1296 = vld [vmem:[#allocation2 + $0x30] sm:$0xf]
        %v1297 = vld [vmem:[#allocation2 + $0x38] sm:$0xf]
        %v1298 = vld [vmem:[#allocation2 + $0x40] sm:$0xf]
        %v1299 = vld [vmem:[#allocation2 + $0x48] sm:$0xf]
        %v1300 = vld [vmem:[#allocation2 + $0x50] sm:$0xf]
        %v1301 = vld [vmem:[#allocation2 + $0x58] sm:$0xf]
        %v1302 = vld [vmem:[#allocation2 + $0x60] sm:$0xf]
        %v1303 = vld [vmem:[#allocation2 + $0x68] sm:$0xf]
        %v1304 = vld [vmem:[#allocation2 + $0x70] sm:$0xf]
        %v1305 = vld [vmem:[#allocation2 + $0x78] sm:$0xf]
        %v1306 = vld [vmem:[#allocation2 + $0x4] sm:$0x1]
        %v1307 = vld [vmem:[#allocation2 + $0xc] sm:$0x1]
        %v1308 = vld [vmem:[#allocation2 + $0x14] sm:$0x1]
        %v1309 = vld [vmem:[#allocation2 + $0x1c] sm:$0x1]
        %v1310 = vld [vmem:[#allocation2 + $0x24] sm:$0x1]
        %v1311 = vld [vmem:[#allocation2 + $0x2c] sm:$0x1]
        %v1312 = vld [vmem:[#allocation2 + $0x34] sm:$0x1]
        %v1313 = vld [vmem:[#allocation2 + $0x3c] sm:$0x1]
        %v1314 = vld [vmem:[#allocation2 + $0x44] sm:$0x1]
        %v1315 = vld [vmem:[#allocation2 + $0x4c] sm:$0x1]
        %v1316 = vld [vmem:[#allocation2 + $0x54] sm:$0x1]
        %v1317 = vld [vmem:[#allocation2 + $0x5c] sm:$0x1]
        %v1318 = vld [vmem:[#allocation2 + $0x64] sm:$0x1]
        %v1319 = vld [vmem:[#allocation2 + $0x6c] sm:$0x1]
        %v1320 = vld [vmem:[#allocation2 + $0x74] sm:$0x1]
        %v1321 = vld [vmem:[#allocation2 + $0x7c] sm:$0x1]
        %v1322 = vld [vmem:[#allocation2] sm:$0xe]
        %v1323 = vld [vmem:[#allocation2 + $0x8] sm:$0xe]
        %v1324 = vld [vmem:[#allocation2 + $0x10] sm:$0xe]
        %v1325 = vld [vmem:[#allocation2 + $0x18] sm:$0xe]
        %v1326 = vld [vmem:[#allocation2 + $0x20] sm:$0xe]
        %v1327 = vld [vmem:[#allocation2 + $0x28] sm:$0xe]
        %v1328 = vld [vmem:[#allocation2 + $0x30] sm:$0xe]
        %v1329 = vld [vmem:[#allocation2 + $0x38] sm:$0xe]
        %v1330 = vld [vmem:[#allocation2 + $0x40] sm:$0xe]
        %v1331 = vld [vmem:[#allocation2 + $0x48] sm:$0xe]
        %v1332 = vld [vmem:[#allocation2 + $0x50] sm:$0xe]
        %v1333 = vld [vmem:[#allocation2 + $0x58] sm:$0xe]
        %v1334 = vld [vmem:[#allocation2 + $0x60] sm:$0xe]
        %v1335 = vld [vmem:[#allocation2 + $0x68] sm:$0xe]
        %v1336 = vld [vmem:[#allocation2 + $0x70] sm:$0xe]
        %v1337 = vld [vmem:[#allocation2 + $0x78] sm:$0xe]
        %v1370 = vunpack.c.l.b16 %v1290
        %v1371 = vunpack.c.l.b16 %v1306
        %v1372 = vunpack.c.l.b16 %v1291
        %v1373 = vunpack.c.l.b16 %v1307
        %v1374 = vunpack.c.l.b16 %v1292
        %v1375 = vunpack.c.l.b16 %v1308
        %v1376 = vunpack.c.l.b16 %v1293
        %v1377 = vunpack.c.l.b16 %v1309
        %v1378 = vunpack.c.l.b16 %v1294
        %v1379 = vunpack.c.l.b16 %v1310
        %v1380 = vunpack.c.l.b16 %v1295
        %v1381 = vunpack.c.l.b16 %v1311
        %v1382 = vunpack.c.l.b16 %v1296
        %v1383 = vunpack.c.l.b16 %v1312
        %v1384 = vunpack.c.l.b16 %v1297
        %v1385 = vunpack.c.l.b16 %v1313
        %v1386 = vunpack.c.l.b16 %v1298
        %v1387 = vunpack.c.l.b16 %v1314
        %v1388 = vunpack.c.l.b16 %v1299
        %v1389 = vunpack.c.l.b16 %v1315
        %v1390 = vunpack.c.l.b16 %v1300
        %v1391 = vunpack.c.l.b16 %v1316
        %v1392 = vunpack.c.l.b16 %v1301
        %v1393 = vunpack.c.l.b16 %v1317
        %v1394 = vunpack.c.l.b16 %v1302
        %v1395 = vunpack.c.l.b16 %v1318
        %v1396 = vunpack.c.l.b16 %v1303
        %v1397 = vunpack.c.l.b16 %v1319
        %v1398 = vunpack.c.l.b16 %v1304
        %v1399 = vunpack.c.l.b16 %v1320
        %v1400 = vunpack.c.l.b16 %v1305
        %v1401 = vunpack.c.l.b16 %v1321
        %v1402 = vpack.c.b16 %v1371, %v1370
        %v1403 = vpack.c.b16 %v1373, %v1372
        %v1404 = vpack.c.b16 %v1375, %v1374
        %v1405 = vpack.c.b16 %v1377, %v1376
        %v1406 = vpack.c.b16 %v1379, %v1378
        %v1407 = vpack.c.b16 %v1381, %v1380
        %v1408 = vpack.c.b16 %v1383, %v1382
        %v1409 = vpack.c.b16 %v1385, %v1384
        %v1410 = vpack.c.b16 %v1387, %v1386
        %v1411 = vpack.c.b16 %v1389, %v1388
        %v1412 = vpack.c.b16 %v1391, %v1390
        %v1413 = vpack.c.b16 %v1393, %v1392
        %v1414 = vpack.c.b16 %v1395, %v1394
        %v1415 = vpack.c.b16 %v1397, %v1396
        %v1416 = vpack.c.b16 %v1399, %v1398
        %v1417 = vpack.c.b16 %v1401, %v1400
        %v1419 = vshrl.u32 %v1402, 16
        %v1421 = vshll.u32 %v1402, 16
        %v1423 = vrot.slane %v1421, 1
        %v1424 = vor.u32 %v1419, %v1423
        %v1426 = vshrl.u32 %v1403, 16
        %v1428 = vshll.u32 %v1403, 16
        %v1430 = vrot.slane %v1428, 1
        %v1431 = vor.u32 %v1426, %v1430
        %v1433 = vshrl.u32 %v1404, 16
        %v1435 = vshll.u32 %v1404, 16
        %v1437 = vrot.slane %v1435, 1
        %v1438 = vor.u32 %v1433, %v1437
        %v1440 = vshrl.u32 %v1405, 16
        %v1442 = vshll.u32 %v1405, 16
        %v1444 = vrot.slane %v1442, 1
        %v1445 = vor.u32 %v1440, %v1444
        %v1447 = vshrl.u32 %v1406, 16
        %v1449 = vshll.u32 %v1406, 16
        %v1451 = vrot.slane %v1449, 1
        %v1452 = vor.u32 %v1447, %v1451
        %v1454 = vshrl.u32 %v1407, 16
        %v1456 = vshll.u32 %v1407, 16
        %v1458 = vrot.slane %v1456, 1
        %v1459 = vor.u32 %v1454, %v1458
        %v1461 = vshrl.u32 %v1408, 16
        %v1463 = vshll.u32 %v1408, 16
        %v1465 = vrot.slane %v1463, 1
        %v1466 = vor.u32 %v1461, %v1465
        %v1468 = vshrl.u32 %v1409, 16
        %v1470 = vshll.u32 %v1409, 16
        %v1472 = vrot.slane %v1470, 1
        %v1473 = vor.u32 %v1468, %v1472
        %v1475 = vshrl.u32 %v1410, 16
        %v1477 = vshll.u32 %v1410, 16
        %v1479 = vrot.slane %v1477, 1
        %v1480 = vor.u32 %v1475, %v1479
        %v1482 = vshrl.u32 %v1411, 16
        %v1484 = vshll.u32 %v1411, 16
        %v1486 = vrot.slane %v1484, 1
        %v1487 = vor.u32 %v1482, %v1486
        %v1489 = vshrl.u32 %v1412, 16
        %v1491 = vshll.u32 %v1412, 16
        %v1493 = vrot.slane %v1491, 1
        %v1494 = vor.u32 %v1489, %v1493
        %v1496 = vshrl.u32 %v1413, 16
        %v1498 = vshll.u32 %v1413, 16
        %v1500 = vrot.slane %v1498, 1
        %v1501 = vor.u32 %v1496, %v1500
        %v1503 = vshrl.u32 %v1414, 16
        %v1505 = vshll.u32 %v1414, 16
        %v1507 = vrot.slane %v1505, 1
        %v1508 = vor.u32 %v1503, %v1507
        %v1510 = vshrl.u32 %v1415, 16
        %v1512 = vshll.u32 %v1415, 16
        %v1514 = vrot.slane %v1512, 1
        %v1515 = vor.u32 %v1510, %v1514
        %v1517 = vshrl.u32 %v1416, 16
        %v1519 = vshll.u32 %v1416, 16
        %v1521 = vrot.slane %v1519, 1
        %v1522 = vor.u32 %v1517, %v1521
        %v1524 = vshrl.u32 %v1417, 16
        %v1526 = vshll.u32 %v1417, 16
        %v1528 = vrot.slane %v1526, 1
        %v1529 = vor.u32 %v1524, %v1528
        %v1546 = vunpack.c.l.b16 %v1322
        %v1547 = vunpack.c.l.b16 %v1323
        %v1548 = vunpack.c.l.b16 %v1324
        %v1549 = vunpack.c.l.b16 %v1325
        %v1550 = vunpack.c.l.b16 %v1326
        %v1551 = vunpack.c.l.b16 %v1327
        %v1552 = vunpack.c.l.b16 %v1328
        %v1553 = vunpack.c.l.b16 %v1329
        %v1554 = vunpack.c.l.b16 %v1330
        %v1555 = vunpack.c.l.b16 %v1331
        %v1556 = vunpack.c.l.b16 %v1332
        %v1557 = vunpack.c.l.b16 %v1333
        %v1558 = vunpack.c.l.b16 %v1334
        %v1559 = vunpack.c.l.b16 %v1335
        %v1560 = vunpack.c.l.b16 %v1336
        %v1561 = vunpack.c.l.b16 %v1337
        %v1562 = vpack.c.b16 %v1371, %v1546
        %v1563 = vpack.c.b16 %v1373, %v1547
        %v1564 = vpack.c.b16 %v1375, %v1548
        %v1565 = vpack.c.b16 %v1377, %v1549
        %v1566 = vpack.c.b16 %v1379, %v1550
        %v1567 = vpack.c.b16 %v1381, %v1551
        %v1568 = vpack.c.b16 %v1383, %v1552
        %v1569 = vpack.c.b16 %v1385, %v1553
        %v1570 = vpack.c.b16 %v1387, %v1554
        %v1571 = vpack.c.b16 %v1389, %v1555
        %v1572 = vpack.c.b16 %v1391, %v1556
        %v1573 = vpack.c.b16 %v1393, %v1557
        %v1574 = vpack.c.b16 %v1395, %v1558
        %v1575 = vpack.c.b16 %v1397, %v1559
        %v1576 = vpack.c.b16 %v1399, %v1560
        %v1577 = vpack.c.b16 %v1401, %v1561
        %v1578 = vrot.slane %v1562, 1
        %v1579 = vrot.slane %v1563, 1
        %v1580 = vrot.slane %v1564, 1
        %v1581 = vrot.slane %v1565, 1
        %v1582 = vrot.slane %v1566, 1
        %v1583 = vrot.slane %v1567, 1
        %v1584 = vrot.slane %v1568, 1
        %v1585 = vrot.slane %v1569, 1
        %v1586 = vrot.slane %v1570, 1
        %v1587 = vrot.slane %v1571, 1
        %v1588 = vrot.slane %v1572, 1
        %v1589 = vrot.slane %v1573, 1
        %v1590 = vrot.slane %v1574, 1
        %v1591 = vrot.slane %v1575, 1
        %v1592 = vrot.slane %v1576, 1
        %v1593 = vrot.slane %v1577, 1
        %v1594 = vunpack.c.l.b16 %v1424
        %v1595 = vunpack.c.l.b16 %v1578
        %v1596 = vunpack.c.l.b16 %v1431
        %v1597 = vunpack.c.l.b16 %v1579
        %v1598 = vunpack.c.l.b16 %v1438
        %v1599 = vunpack.c.l.b16 %v1580
        %v1600 = vunpack.c.l.b16 %v1445
        %v1601 = vunpack.c.l.b16 %v1581
        %v1602 = vunpack.c.l.b16 %v1452
        %v1603 = vunpack.c.l.b16 %v1582
        %v1604 = vunpack.c.l.b16 %v1459
        %v1605 = vunpack.c.l.b16 %v1583
        %v1606 = vunpack.c.l.b16 %v1466
        %v1607 = vunpack.c.l.b16 %v1584
        %v1608 = vunpack.c.l.b16 %v1473
        %v1609 = vunpack.c.l.b16 %v1585
        %v1610 = vunpack.c.l.b16 %v1480
        %v1611 = vunpack.c.l.b16 %v1586
        %v1612 = vunpack.c.l.b16 %v1487
        %v1613 = vunpack.c.l.b16 %v1587
        %v1614 = vunpack.c.l.b16 %v1494
        %v1615 = vunpack.c.l.b16 %v1588
        %v1616 = vunpack.c.l.b16 %v1501
        %v1617 = vunpack.c.l.b16 %v1589
        %v1618 = vunpack.c.l.b16 %v1508
        %v1619 = vunpack.c.l.b16 %v1590
        %v1620 = vunpack.c.l.b16 %v1515
        %v1621 = vunpack.c.l.b16 %v1591
        %v1622 = vunpack.c.l.b16 %v1522
        %v1623 = vunpack.c.l.b16 %v1592
        %v1624 = vunpack.c.l.b16 %v1529
        %v1625 = vunpack.c.l.b16 %v1593
        %v1626 = vld [vmem:[#allocation10] sm:$0xf]
        %v1627 = vld [vmem:[#allocation10 + $0x4] sm:$0xf]
        %v1628 = vld [vmem:[#allocation10 + $0x8] sm:$0xf]
        %v1629 = vld [vmem:[#allocation10 + $0xc] sm:$0xf]
        %v1630 = vld [vmem:[#allocation10 + $0x10] sm:$0xf]
        %v1631 = vld [vmem:[#allocation10 + $0x14] sm:$0xf]
        %v1632 = vld [vmem:[#allocation10 + $0x18] sm:$0xf]
        %v1633 = vld [vmem:[#allocation10 + $0x1c] sm:$0xf]
        %v1634 = vld [vmem:[#allocation10 + $0x20] sm:$0xf]
        %v1635 = vld [vmem:[#allocation10 + $0x24] sm:$0xf]
        %v1636 = vld [vmem:[#allocation10 + $0x28] sm:$0xf]
        %v1637 = vld [vmem:[#allocation10 + $0x2c] sm:$0xf]
        %v1638 = vld [vmem:[#allocation10 + $0x30] sm:$0xf]
        %v1639 = vld [vmem:[#allocation10 + $0x34] sm:$0xf]
        %v1640 = vld [vmem:[#allocation10 + $0x38] sm:$0xf]
        %v1641 = vld [vmem:[#allocation10 + $0x3c] sm:$0xf]
        %v1642 = vld [vmem:[#allocation10 + $0x40] sm:$0xf]
        %v1643 = vld [vmem:[#allocation10 + $0x44] sm:$0xf]
        %v1644 = vld [vmem:[#allocation10 + $0x48] sm:$0xf]
        %v1645 = vld [vmem:[#allocation10 + $0x4c] sm:$0xf]
        %v1646 = vld [vmem:[#allocation10 + $0x50] sm:$0xf]
        %v1647 = vld [vmem:[#allocation10 + $0x54] sm:$0xf]
        %v1648 = vld [vmem:[#allocation10 + $0x58] sm:$0xf]
        %v1649 = vld [vmem:[#allocation10 + $0x5c] sm:$0xf]
        %v1650 = vld [vmem:[#allocation10 + $0x60] sm:$0xf]
        %v1651 = vld [vmem:[#allocation10 + $0x64] sm:$0xf]
        %v1652 = vld [vmem:[#allocation10 + $0x68] sm:$0xf]
        %v1653 = vld [vmem:[#allocation10 + $0x6c] sm:$0xf]
        %v1654 = vld [vmem:[#allocation10 + $0x70] sm:$0xf]
        %v1655 = vld [vmem:[#allocation10 + $0x74] sm:$0xf]
        %v1656 = vld [vmem:[#allocation10 + $0x78] sm:$0xf]
        %v1657 = vld [vmem:[#allocation10 + $0x7c] sm:$0xf]
        %v1658 = vld [vmem:[#allocation10 + $0x80] sm:$0xf]
        %v1659 = vld [vmem:[#allocation10 + $0x84] sm:$0xf]
        %v1660 = vld [vmem:[#allocation10 + $0x88] sm:$0xf]
        %v1661 = vld [vmem:[#allocation10 + $0x8c] sm:$0xf]
        %v1662 = vld [vmem:[#allocation10 + $0x90] sm:$0xf]
        %v1663 = vld [vmem:[#allocation10 + $0x94] sm:$0xf]
        %v1664 = vld [vmem:[#allocation10 + $0x98] sm:$0xf]
        %v1665 = vld [vmem:[#allocation10 + $0x9c] sm:$0xf]
        %v1666 = vld [vmem:[#allocation10 + $0xa0] sm:$0xf]
        %v1667 = vld [vmem:[#allocation10 + $0xa4] sm:$0xf]
        %v1668 = vld [vmem:[#allocation10 + $0xa8] sm:$0xf]
        %v1669 = vld [vmem:[#allocation10 + $0xac] sm:$0xf]
        %v1670 = vld [vmem:[#allocation10 + $0xb0] sm:$0xf]
        %v1671 = vld [vmem:[#allocation10 + $0xb4] sm:$0xf]
        %v1672 = vld [vmem:[#allocation10 + $0xb8] sm:$0xf]
        %v1673 = vld [vmem:[#allocation10 + $0xbc] sm:$0xf]
        %v1674 = vld [vmem:[%s1191] sm:$0xf]
        %v1675 = vld [vmem:[%s1191 + $0x8] sm:$0xf]
        %v1676 = vld [vmem:[%s1191 + $0x10] sm:$0xf]
        %v1677 = vld [vmem:[%s1191 + $0x18] sm:$0xf]
        %v1678 = vld [vmem:[%s1191 + $0x20] sm:$0xf]
        %v1679 = vld [vmem:[%s1191 + $0x28] sm:$0xf]
        %v1680 = vld [vmem:[%s1191 + $0x30] sm:$0xf]
        %v1681 = vld [vmem:[%s1191 + $0x38] sm:$0xf]
        %v1682 = vld [vmem:[%s1191 + $0x40] sm:$0xf]
        %v1683 = vld [vmem:[%s1191 + $0x48] sm:$0xf]
        %v1684 = vld [vmem:[%s1191 + $0x50] sm:$0xf]
        %v1685 = vld [vmem:[%s1191 + $0x58] sm:$0xf]
        %v1686 = vld [vmem:[%s1191 + $0x60] sm:$0xf]
        %v1687 = vld [vmem:[%s1191 + $0x68] sm:$0xf]
        %v1688 = vld [vmem:[%s1191 + $0x70] sm:$0xf]
        %v1689 = vld [vmem:[%s1191 + $0x78] sm:$0xf]
        %v1690 = vld [vmem:[%s1191 + $0x4] sm:$0x1]
        %v1691 = vld [vmem:[%s1191 + $0xc] sm:$0x1]
        %v1692 = vld [vmem:[%s1191 + $0x14] sm:$0x1]
        %v1693 = vld [vmem:[%s1191 + $0x1c] sm:$0x1]
        %v1694 = vld [vmem:[%s1191 + $0x24] sm:$0x1]
        %v1695 = vld [vmem:[%s1191 + $0x2c] sm:$0x1]
        %v1696 = vld [vmem:[%s1191 + $0x34] sm:$0x1]
        %v1697 = vld [vmem:[%s1191 + $0x3c] sm:$0x1]
        %v1698 = vld [vmem:[%s1191 + $0x44] sm:$0x1]
        %v1699 = vld [vmem:[%s1191 + $0x4c] sm:$0x1]
        %v1700 = vld [vmem:[%s1191 + $0x54] sm:$0x1]
        %v1701 = vld [vmem:[%s1191 + $0x5c] sm:$0x1]
        %v1702 = vld [vmem:[%s1191 + $0x64] sm:$0x1]
        %v1703 = vld [vmem:[%s1191 + $0x6c] sm:$0x1]
        %v1704 = vld [vmem:[%s1191 + $0x74] sm:$0x1]
        %v1705 = vld [vmem:[%s1191 + $0x7c] sm:$0x1]
        %v1706 = vld [vmem:[%s1191] sm:$0xe]
        %v1707 = vld [vmem:[%s1191 + $0x8] sm:$0xe]
        %v1708 = vld [vmem:[%s1191 + $0x10] sm:$0xe]
        %v1709 = vld [vmem:[%s1191 + $0x18] sm:$0xe]
        %v1710 = vld [vmem:[%s1191 + $0x20] sm:$0xe]
        %v1711 = vld [vmem:[%s1191 + $0x28] sm:$0xe]
        %v1712 = vld [vmem:[%s1191 + $0x30] sm:$0xe]
        %v1713 = vld [vmem:[%s1191 + $0x38] sm:$0xe]
        %v1714 = vld [vmem:[%s1191 + $0x40] sm:$0xe]
        %v1715 = vld [vmem:[%s1191 + $0x48] sm:$0xe]
        %v1716 = vld [vmem:[%s1191 + $0x50] sm:$0xe]
        %v1717 = vld [vmem:[%s1191 + $0x58] sm:$0xe]
        %v1718 = vld [vmem:[%s1191 + $0x60] sm:$0xe]
        %v1719 = vld [vmem:[%s1191 + $0x68] sm:$0xe]
        %v1720 = vld [vmem:[%s1191 + $0x70] sm:$0xe]
        %v1721 = vld [vmem:[%s1191 + $0x78] sm:$0xe]
        %v1754 = vunpack.c.l.b16 %v1674
        %v1755 = vunpack.c.l.b16 %v1690
        %v1756 = vunpack.c.l.b16 %v1675
        %v1757 = vunpack.c.l.b16 %v1691
        %v1758 = vunpack.c.l.b16 %v1676
        %v1759 = vunpack.c.l.b16 %v1692
        %v1760 = vunpack.c.l.b16 %v1677
        %v1761 = vunpack.c.l.b16 %v1693
        %v1762 = vunpack.c.l.b16 %v1678
        %v1763 = vunpack.c.l.b16 %v1694
        %v1764 = vunpack.c.l.b16 %v1679
        %v1765 = vunpack.c.l.b16 %v1695
        %v1766 = vunpack.c.l.b16 %v1680
        %v1767 = vunpack.c.l.b16 %v1696
        %v1768 = vunpack.c.l.b16 %v1681
        %v1769 = vunpack.c.l.b16 %v1697
        %v1770 = vunpack.c.l.b16 %v1682
        %v1771 = vunpack.c.l.b16 %v1698
        %v1772 = vunpack.c.l.b16 %v1683
        %v1773 = vunpack.c.l.b16 %v1699
        %v1774 = vunpack.c.l.b16 %v1684
        %v1775 = vunpack.c.l.b16 %v1700
        %v1776 = vunpack.c.l.b16 %v1685
        %v1777 = vunpack.c.l.b16 %v1701
        %v1778 = vunpack.c.l.b16 %v1686
        %v1779 = vunpack.c.l.b16 %v1702
        %v1780 = vunpack.c.l.b16 %v1687
        %v1781 = vunpack.c.l.b16 %v1703
        %v1782 = vunpack.c.l.b16 %v1688
        %v1783 = vunpack.c.l.b16 %v1704
        %v1784 = vunpack.c.l.b16 %v1689
        %v1785 = vunpack.c.l.b16 %v1705
        %v1786 = vpack.c.b16 %v1755, %v1754
        %v1787 = vpack.c.b16 %v1757, %v1756
        %v1788 = vpack.c.b16 %v1759, %v1758
        %v1789 = vpack.c.b16 %v1761, %v1760
        %v1790 = vpack.c.b16 %v1763, %v1762
        %v1791 = vpack.c.b16 %v1765, %v1764
        %v1792 = vpack.c.b16 %v1767, %v1766
        %v1793 = vpack.c.b16 %v1769, %v1768
        %v1794 = vpack.c.b16 %v1771, %v1770
        %v1795 = vpack.c.b16 %v1773, %v1772
        %v1796 = vpack.c.b16 %v1775, %v1774
        %v1797 = vpack.c.b16 %v1777, %v1776
        %v1798 = vpack.c.b16 %v1779, %v1778
        %v1799 = vpack.c.b16 %v1781, %v1780
        %v1800 = vpack.c.b16 %v1783, %v1782
        %v1801 = vpack.c.b16 %v1785, %v1784
        %v1803 = vshrl.u32 %v1786, 16
        %v1805 = vshll.u32 %v1786, 16
        %v1807 = vrot.slane %v1805, 1
        %v1808 = vor.u32 %v1803, %v1807
        %v1810 = vshrl.u32 %v1787, 16
        %v1812 = vshll.u32 %v1787, 16
        %v1814 = vrot.slane %v1812, 1
        %v1815 = vor.u32 %v1810, %v1814
        %v1817 = vshrl.u32 %v1788, 16
        %v1819 = vshll.u32 %v1788, 16
        %v1821 = vrot.slane %v1819, 1
        %v1822 = vor.u32 %v1817, %v1821
        %v1824 = vshrl.u32 %v1789, 16
        %v1826 = vshll.u32 %v1789, 16
        %v1828 = vrot.slane %v1826, 1
        %v1829 = vor.u32 %v1824, %v1828
        %v1831 = vshrl.u32 %v1790, 16
        %v1833 = vshll.u32 %v1790, 16
        %v1835 = vrot.slane %v1833, 1
        %v1836 = vor.u32 %v1831, %v1835
        %v1838 = vshrl.u32 %v1791, 16
        %v1840 = vshll.u32 %v1791, 16
        %v1842 = vrot.slane %v1840, 1
        %v1843 = vor.u32 %v1838, %v1842
        %v1845 = vshrl.u32 %v1792, 16
        %v1847 = vshll.u32 %v1792, 16
        %v1849 = vrot.slane %v1847, 1
        %v1850 = vor.u32 %v1845, %v1849
        %v1852 = vshrl.u32 %v1793, 16
        %v1854 = vshll.u32 %v1793, 16
        %v1856 = vrot.slane %v1854, 1
        %v1857 = vor.u32 %v1852, %v1856
        %v1859 = vshrl.u32 %v1794, 16
        %v1861 = vshll.u32 %v1794, 16
        %v1863 = vrot.slane %v1861, 1
        %v1864 = vor.u32 %v1859, %v1863
        %v1866 = vshrl.u32 %v1795, 16
        %v1868 = vshll.u32 %v1795, 16
        %v1870 = vrot.slane %v1868, 1
        %v1871 = vor.u32 %v1866, %v1870
        %v1873 = vshrl.u32 %v1796, 16
        %v1875 = vshll.u32 %v1796, 16
        %v1877 = vrot.slane %v1875, 1
        %v1878 = vor.u32 %v1873, %v1877
        %v1880 = vshrl.u32 %v1797, 16
        %v1882 = vshll.u32 %v1797, 16
        %v1884 = vrot.slane %v1882, 1
        %v1885 = vor.u32 %v1880, %v1884
        %v1887 = vshrl.u32 %v1798, 16
        %v1889 = vshll.u32 %v1798, 16
        %v1891 = vrot.slane %v1889, 1
        %v1892 = vor.u32 %v1887, %v1891
        %v1894 = vshrl.u32 %v1799, 16
        %v1896 = vshll.u32 %v1799, 16
        %v1898 = vrot.slane %v1896, 1
        %v1899 = vor.u32 %v1894, %v1898
        %v1901 = vshrl.u32 %v1800, 16
        %v1903 = vshll.u32 %v1800, 16
        %v1905 = vrot.slane %v1903, 1
        %v1906 = vor.u32 %v1901, %v1905
        %v1908 = vshrl.u32 %v1801, 16
        %v1910 = vshll.u32 %v1801, 16
        %v1912 = vrot.slane %v1910, 1
        %v1913 = vor.u32 %v1908, %v1912
        %v1930 = vunpack.c.l.b16 %v1706
        %v1931 = vunpack.c.l.b16 %v1707
        %v1932 = vunpack.c.l.b16 %v1708
        %v1933 = vunpack.c.l.b16 %v1709
        %v1934 = vunpack.c.l.b16 %v1710
        %v1935 = vunpack.c.l.b16 %v1711
        %v1936 = vunpack.c.l.b16 %v1712
        %v1937 = vunpack.c.l.b16 %v1713
        %v1938 = vunpack.c.l.b16 %v1714
        %v1939 = vunpack.c.l.b16 %v1715
        %v1940 = vunpack.c.l.b16 %v1716
        %v1941 = vunpack.c.l.b16 %v1717
        %v1942 = vunpack.c.l.b16 %v1718
        %v1943 = vunpack.c.l.b16 %v1719
        %v1944 = vunpack.c.l.b16 %v1720
        %v1945 = vunpack.c.l.b16 %v1721
        %v1946 = vpack.c.b16 %v1755, %v1930
        %v1947 = vpack.c.b16 %v1757, %v1931
        %v1948 = vpack.c.b16 %v1759, %v1932
        %v1949 = vpack.c.b16 %v1761, %v1933
        %v1950 = vpack.c.b16 %v1763, %v1934
        %v1951 = vpack.c.b16 %v1765, %v1935
        %v1952 = vpack.c.b16 %v1767, %v1936
        %v1953 = vpack.c.b16 %v1769, %v1937
        %v1954 = vpack.c.b16 %v1771, %v1938
        %v1955 = vpack.c.b16 %v1773, %v1939
        %v1956 = vpack.c.b16 %v1775, %v1940
        %v1957 = vpack.c.b16 %v1777, %v1941
        %v1958 = vpack.c.b16 %v1779, %v1942
        %v1959 = vpack.c.b16 %v1781, %v1943
        %v1960 = vpack.c.b16 %v1783, %v1944
        %v1961 = vpack.c.b16 %v1785, %v1945
        %v1962 = vrot.slane %v1946, 1
        %v1963 = vrot.slane %v1947, 1
        %v1964 = vrot.slane %v1948, 1
        %v1965 = vrot.slane %v1949, 1
        %v1966 = vrot.slane %v1950, 1
        %v1967 = vrot.slane %v1951, 1
        %v1968 = vrot.slane %v1952, 1
        %v1969 = vrot.slane %v1953, 1
        %v1970 = vrot.slane %v1954, 1
        %v1971 = vrot.slane %v1955, 1
        %v1972 = vrot.slane %v1956, 1
        %v1973 = vrot.slane %v1957, 1
        %v1974 = vrot.slane %v1958, 1
        %v1975 = vrot.slane %v1959, 1
        %v1976 = vrot.slane %v1960, 1
        %v1977 = vrot.slane %v1961, 1
        %v1978 = vunpack.c.l.b16 %v1808
        %v1979 = vunpack.c.l.b16 %v1962
        %v1980 = vunpack.c.l.b16 %v1815
        %v1981 = vunpack.c.l.b16 %v1963
        %v1982 = vunpack.c.l.b16 %v1822
        %v1983 = vunpack.c.l.b16 %v1964
        %v1984 = vunpack.c.l.b16 %v1829
        %v1985 = vunpack.c.l.b16 %v1965
        %v1986 = vunpack.c.l.b16 %v1836
        %v1987 = vunpack.c.l.b16 %v1966
        %v1988 = vunpack.c.l.b16 %v1843
        %v1989 = vunpack.c.l.b16 %v1967
        %v1990 = vunpack.c.l.b16 %v1850
        %v1991 = vunpack.c.l.b16 %v1968
        %v1992 = vunpack.c.l.b16 %v1857
        %v1993 = vunpack.c.l.b16 %v1969
        %v1994 = vunpack.c.l.b16 %v1864
        %v1995 = vunpack.c.l.b16 %v1970
        %v1996 = vunpack.c.l.b16 %v1871
        %v1997 = vunpack.c.l.b16 %v1971
        %v1998 = vunpack.c.l.b16 %v1878
        %v1999 = vunpack.c.l.b16 %v1972
        %v2000 = vunpack.c.l.b16 %v1885
        %v2001 = vunpack.c.l.b16 %v1973
        %v2002 = vunpack.c.l.b16 %v1892
        %v2003 = vunpack.c.l.b16 %v1974
        %v2004 = vunpack.c.l.b16 %v1899
        %v2005 = vunpack.c.l.b16 %v1975
        %v2006 = vunpack.c.l.b16 %v1906
        %v2007 = vunpack.c.l.b16 %v1976
        %v2008 = vunpack.c.l.b16 %v1913
        %v2009 = vunpack.c.l.b16 %v1977
        %s2010 = scalar_lea.vmem [#allocation10], 192
        %v2011 = vld [vmem:[%s2010] sm:$0xf]
        %v2012 = vld [vmem:[%s2010 + $0x4] sm:$0xf]
        %v2013 = vld [vmem:[%s2010 + $0x8] sm:$0xf]
        %v2014 = vld [vmem:[%s2010 + $0xc] sm:$0xf]
        %v2015 = vld [vmem:[%s2010 + $0x10] sm:$0xf]
        %v2016 = vld [vmem:[%s2010 + $0x14] sm:$0xf]
        %v2017 = vld [vmem:[%s2010 + $0x18] sm:$0xf]
        %v2018 = vld [vmem:[%s2010 + $0x1c] sm:$0xf]
        %v2019 = vld [vmem:[%s2010 + $0x20] sm:$0xf]
        %v2020 = vld [vmem:[%s2010 + $0x24] sm:$0xf]
        %v2021 = vld [vmem:[%s2010 + $0x28] sm:$0xf]
        %v2022 = vld [vmem:[%s2010 + $0x2c] sm:$0xf]
        %v2023 = vld [vmem:[%s2010 + $0x30] sm:$0xf]
        %v2024 = vld [vmem:[%s2010 + $0x34] sm:$0xf]
        %v2025 = vld [vmem:[%s2010 + $0x38] sm:$0xf]
        %v2026 = vld [vmem:[%s2010 + $0x3c] sm:$0xf]
        %v2027 = vld [vmem:[%s2010 + $0x40] sm:$0xf]
        %v2028 = vld [vmem:[%s2010 + $0x44] sm:$0xf]
        %v2029 = vld [vmem:[%s2010 + $0x48] sm:$0xf]
        %v2030 = vld [vmem:[%s2010 + $0x4c] sm:$0xf]
        %v2031 = vld [vmem:[%s2010 + $0x50] sm:$0xf]
        %v2032 = vld [vmem:[%s2010 + $0x54] sm:$0xf]
        %v2033 = vld [vmem:[%s2010 + $0x58] sm:$0xf]
        %v2034 = vld [vmem:[%s2010 + $0x5c] sm:$0xf]
        %v2035 = vld [vmem:[%s2010 + $0x60] sm:$0xf]
        %v2036 = vld [vmem:[%s2010 + $0x64] sm:$0xf]
        %v2037 = vld [vmem:[%s2010 + $0x68] sm:$0xf]
        %v2038 = vld [vmem:[%s2010 + $0x6c] sm:$0xf]
        %v2039 = vld [vmem:[%s2010 + $0x70] sm:$0xf]
        %v2040 = vld [vmem:[%s2010 + $0x74] sm:$0xf]
        %v2041 = vld [vmem:[%s2010 + $0x78] sm:$0xf]
        %v2042 = vld [vmem:[%s2010 + $0x7c] sm:$0xf]
        %v2043 = vld [vmem:[%s2010 + $0x80] sm:$0xf]
        %v2044 = vld [vmem:[%s2010 + $0x84] sm:$0xf]
        %v2045 = vld [vmem:[%s2010 + $0x88] sm:$0xf]
        %v2046 = vld [vmem:[%s2010 + $0x8c] sm:$0xf]
        %v2047 = vld [vmem:[%s2010 + $0x90] sm:$0xf]
        %v2048 = vld [vmem:[%s2010 + $0x94] sm:$0xf]
        %v2049 = vld [vmem:[%s2010 + $0x98] sm:$0xf]
        %v2050 = vld [vmem:[%s2010 + $0x9c] sm:$0xf]
        %v2051 = vld [vmem:[%s2010 + $0xa0] sm:$0xf]
        %v2052 = vld [vmem:[%s2010 + $0xa4] sm:$0xf]
        %v2053 = vld [vmem:[%s2010 + $0xa8] sm:$0xf]
        %v2054 = vld [vmem:[%s2010 + $0xac] sm:$0xf]
        %v2055 = vld [vmem:[%s2010 + $0xb0] sm:$0xf]
        %v2056 = vld [vmem:[%s2010 + $0xb4] sm:$0xf]
        %v2057 = vld [vmem:[%s2010 + $0xb8] sm:$0xf]
        %v2058 = vld [vmem:[%s2010 + $0xbc] sm:$0xf]
        %v2059 = vpack.c.b16 %v1756, %v1754
        %v2060 = vpack.c.b16 %v1980, %v1978
        %v2061 = vpack.c.b16 %v1981, %v1979
        %v2062 = vpack.c.b16 %v1760, %v1758
        %v2063 = vpack.c.b16 %v1984, %v1982
        %v2064 = vpack.c.b16 %v1985, %v1983
        %v2065 = vpack.c.b16 %v1764, %v1762
        %v2066 = vpack.c.b16 %v1988, %v1986
        %v2067 = vpack.c.b16 %v1989, %v1987
        %v2068 = vpack.c.b16 %v1768, %v1766
        %v2069 = vpack.c.b16 %v1992, %v1990
        %v2070 = vpack.c.b16 %v1993, %v1991
        %v2071 = vpack.c.b16 %v1772, %v1770
        %v2072 = vpack.c.b16 %v1996, %v1994
        %v2073 = vpack.c.b16 %v1997, %v1995
        %v2074 = vpack.c.b16 %v1776, %v1774
        %v2075 = vpack.c.b16 %v2000, %v1998
        %v2076 = vpack.c.b16 %v2001, %v1999
        %v2077 = vpack.c.b16 %v1780, %v1778
        %v2078 = vpack.c.b16 %v2004, %v2002
        %v2079 = vpack.c.b16 %v2005, %v2003
        %v2080 = vpack.c.b16 %v1784, %v1782
        %v2081 = vpack.c.b16 %v2008, %v2006
        %v2082 = vpack.c.b16 %v2009, %v2007
        %v2155 = vunpack.c.l.b16 %v2011
        %v2156 = vunpack.c.l.b16 %v2012
        %v2157 = vunpack.c.l.b16 %v2013
        %v2158 = vunpack.c.l.b16 %v2014
        %v2159 = vunpack.c.l.b16 %v2015
        %v2160 = vunpack.c.l.b16 %v2016
        %v2161 = vunpack.c.l.b16 %v2017
        %v2162 = vunpack.c.l.b16 %v2018
        %v2163 = vunpack.c.l.b16 %v2019
        %v2164 = vunpack.c.l.b16 %v2020
        %v2165 = vunpack.c.l.b16 %v2021
        %v2166 = vunpack.c.l.b16 %v2022
        %v2167 = vunpack.c.l.b16 %v2023
        %v2168 = vunpack.c.l.b16 %v2024
        %v2169 = vunpack.c.l.b16 %v2025
        %v2170 = vunpack.c.l.b16 %v2026
        %v2171 = vunpack.c.l.b16 %v2027
        %v2172 = vunpack.c.l.b16 %v2028
        %v2173 = vunpack.c.l.b16 %v2029
        %v2174 = vunpack.c.l.b16 %v2030
        %v2175 = vunpack.c.l.b16 %v2031
        %v2176 = vunpack.c.l.b16 %v2032
        %v2177 = vunpack.c.l.b16 %v2033
        %v2178 = vunpack.c.l.b16 %v2034
        %v2179 = vunpack.c.l.b16 %v2035
        %v2180 = vunpack.c.l.b16 %v2036
        %v2181 = vunpack.c.l.b16 %v2037
        %v2182 = vunpack.c.l.b16 %v2038
        %v2183 = vunpack.c.l.b16 %v2039
        %v2184 = vunpack.c.l.b16 %v2040
        %v2185 = vunpack.c.l.b16 %v2041
        %v2186 = vunpack.c.l.b16 %v2042
        %v2187 = vunpack.c.l.b16 %v2043
        %v2188 = vunpack.c.l.b16 %v2044
        %v2189 = vunpack.c.l.b16 %v2045
        %v2190 = vunpack.c.l.b16 %v2046
        %v2191 = vunpack.c.l.b16 %v2047
        %v2192 = vunpack.c.l.b16 %v2048
        %v2193 = vunpack.c.l.b16 %v2049
        %v2194 = vunpack.c.l.b16 %v2050
        %v2195 = vunpack.c.l.b16 %v2051
        %v2196 = vunpack.c.l.b16 %v2052
        %v2197 = vunpack.c.l.b16 %v2053
        %v2198 = vunpack.c.l.b16 %v2054
        %v2199 = vunpack.c.l.b16 %v2055
        %v2200 = vunpack.c.l.b16 %v2056
        %v2201 = vunpack.c.l.b16 %v2057
        %v2202 = vunpack.c.l.b16 %v2058
        %v2203 = vpack.c.b16 %v2156, %v2155
        %v2204 = vpack.c.b16 %v2158, %v2157
        %v2205 = vpack.c.b16 %v2160, %v2159
        %v2206 = vpack.c.b16 %v2162, %v2161
        %v2207 = vpack.c.b16 %v2164, %v2163
        %v2208 = vpack.c.b16 %v2166, %v2165
        %v2209 = vpack.c.b16 %v2168, %v2167
        %v2210 = vpack.c.b16 %v2170, %v2169
        %v2211 = vpack.c.b16 %v2172, %v2171
        %v2212 = vpack.c.b16 %v2174, %v2173
        %v2213 = vpack.c.b16 %v2176, %v2175
        %v2214 = vpack.c.b16 %v2178, %v2177
        %v2215 = vpack.c.b16 %v2180, %v2179
        %v2216 = vpack.c.b16 %v2182, %v2181
        %v2217 = vpack.c.b16 %v2184, %v2183
        %v2218 = vpack.c.b16 %v2186, %v2185
        %v2219 = vpack.c.b16 %v2188, %v2187
        %v2220 = vpack.c.b16 %v2190, %v2189
        %v2221 = vpack.c.b16 %v2192, %v2191
        %v2222 = vpack.c.b16 %v2194, %v2193
        %v2223 = vpack.c.b16 %v2196, %v2195
        %v2224 = vpack.c.b16 %v2198, %v2197
        %v2225 = vpack.c.b16 %v2200, %v2199
        %v2226 = vpack.c.b16 %v2202, %v2201
        %2251 = vmatpush.bf16.msra.mxu0 %v2210
        %2252 = vmatpush.bf16.msra.mxu0 %v2209
        %2253 = vmatpush.bf16.msra.mxu0 %v2208
        %2254 = vmatpush.bf16.msra.mxu0 %v2207
        %2255 = vmatpush.bf16.msra.mxu0 %v2206
        %2256 = vmatpush.bf16.msra.mxu0 %v2205
        %2257 = vmatpush.bf16.msra.mxu0 %v2204
        %2258 = vmatpush.bf16.msra.mxu0 %v2203
        %2259 = vmatmul.bf16.gmra.mxu0 %v2059
        %v2260 = vpop.f32.mrf.mxu0
        %v2261 = vadd.f32 0.0, %v2260
        %v2262 = vpop.f32.mrf.mxu0
        %v2263 = vadd.f32 0.0, %v2262
        %2264 = vmatmul.bf16.gmra.mxu0 %v2062
        %v2265 = vpop.f32.mrf.mxu0
        %v2266 = vadd.f32 0.0, %v2265
        %v2267 = vpop.f32.mrf.mxu0
        %v2268 = vadd.f32 0.0, %v2267
        %2269 = vmatmul.bf16.gmra.mxu0 %v2065
        %v2270 = vpop.f32.mrf.mxu0
        %v2271 = vadd.f32 0.0, %v2270
        %v2272 = vpop.f32.mrf.mxu0
        %v2273 = vadd.f32 0.0, %v2272
        %2274 = vmatmul.bf16.gmra.mxu0 %v2068
        %v2275 = vpop.f32.mrf.mxu0
        %v2276 = vadd.f32 0.0, %v2275
        %v2277 = vpop.f32.mrf.mxu0
        %v2278 = vadd.f32 0.0, %v2277
        %2279 = vmatmul.bf16.gmra.mxu0 %v2071
        %v2280 = vpop.f32.mrf.mxu0
        %v2281 = vadd.f32 0.0, %v2280
        %v2282 = vpop.f32.mrf.mxu0
        %v2283 = vadd.f32 0.0, %v2282
        %2284 = vmatmul.bf16.gmra.mxu0 %v2074
        %v2285 = vpop.f32.mrf.mxu0
        %v2286 = vadd.f32 0.0, %v2285
        %v2287 = vpop.f32.mrf.mxu0
        %v2288 = vadd.f32 0.0, %v2287
        %2289 = vmatmul.bf16.gmra.mxu0 %v2077
        %v2290 = vpop.f32.mrf.mxu0
        %v2291 = vadd.f32 0.0, %v2290
        %v2292 = vpop.f32.mrf.mxu0
        %v2293 = vadd.f32 0.0, %v2292
        %2294 = vmatmul.bf16.gmra.mxu0 %v2080
        %v2295 = vpop.f32.mrf.mxu0
        %v2296 = vadd.f32 0.0, %v2295
        %v2297 = vpop.f32.mrf.mxu0
        %v2298 = vadd.f32 0.0, %v2297
        %2299 = vdwg.mxu0
        %2300 = vmatpush.bf16.msra.mxu0 %v2218
        %2301 = vmatpush.bf16.msra.mxu0 %v2217
        %2302 = vmatpush.bf16.msra.mxu0 %v2216
        %2303 = vmatpush.bf16.msra.mxu0 %v2215
        %2304 = vmatpush.bf16.msra.mxu0 %v2214
        %2305 = vmatpush.bf16.msra.mxu0 %v2213
        %2306 = vmatpush.bf16.msra.mxu0 %v2212
        %2307 = vmatpush.bf16.msra.mxu0 %v2211
        %2308 = vmatmul.bf16.gmra.mxu0 %v2060
        %v2309 = vpop.f32.mrf.mxu0
        %v2310 = vadd.f32 %v2261, %v2309
        %v2311 = vpop.f32.mrf.mxu0
        %v2312 = vadd.f32 %v2263, %v2311
        %2313 = vmatmul.bf16.gmra.mxu0 %v2063
        %v2314 = vpop.f32.mrf.mxu0
        %v2315 = vadd.f32 %v2266, %v2314
        %v2316 = vpop.f32.mrf.mxu0
        %v2317 = vadd.f32 %v2268, %v2316
        %2318 = vmatmul.bf16.gmra.mxu0 %v2066
        %v2319 = vpop.f32.mrf.mxu0
        %v2320 = vadd.f32 %v2271, %v2319
        %v2321 = vpop.f32.mrf.mxu0
        %v2322 = vadd.f32 %v2273, %v2321
        %2323 = vmatmul.bf16.gmra.mxu0 %v2069
        %v2324 = vpop.f32.mrf.mxu0
        %v2325 = vadd.f32 %v2276, %v2324
        %v2326 = vpop.f32.mrf.mxu0
        %v2327 = vadd.f32 %v2278, %v2326
        %2328 = vmatmul.bf16.gmra.mxu0 %v2072
        %v2329 = vpop.f32.mrf.mxu0
        %v2330 = vadd.f32 %v2281, %v2329
        %v2331 = vpop.f32.mrf.mxu0
        %v2332 = vadd.f32 %v2283, %v2331
        %2333 = vmatmul.bf16.gmra.mxu0 %v2075
        %v2334 = vpop.f32.mrf.mxu0
        %v2335 = vadd.f32 %v2286, %v2334
        %v2336 = vpop.f32.mrf.mxu0
        %v2337 = vadd.f32 %v2288, %v2336
        %2338 = vmatmul.bf16.gmra.mxu0 %v2078
        %v2339 = vpop.f32.mrf.mxu0
        %v2340 = vadd.f32 %v2291, %v2339
        %v2341 = vpop.f32.mrf.mxu0
        %v2342 = vadd.f32 %v2293, %v2341
        %2343 = vmatmul.bf16.gmra.mxu0 %v2081
        %v2344 = vpop.f32.mrf.mxu0
        %v2345 = vadd.f32 %v2296, %v2344
        %v2346 = vpop.f32.mrf.mxu0
        %v2347 = vadd.f32 %v2298, %v2346
        %2348 = vdwg.mxu0
        %2349 = vmatpush.bf16.msra.mxu0 %v2226
        %2350 = vmatpush.bf16.msra.mxu0 %v2225
        %2351 = vmatpush.bf16.msra.mxu0 %v2224
        %2352 = vmatpush.bf16.msra.mxu0 %v2223
        %2353 = vmatpush.bf16.msra.mxu0 %v2222
        %2354 = vmatpush.bf16.msra.mxu0 %v2221
        %2355 = vmatpush.bf16.msra.mxu0 %v2220
        %2356 = vmatpush.bf16.msra.mxu0 %v2219
        %2357 = vmatmul.bf16.gmra.mxu0 %v2061
        %v2358 = vpop.f32.mrf.mxu0
        %v2359 = vadd.f32 %v2310, %v2358
        %v2360 = vpop.f32.mrf.mxu0
        %v2361 = vadd.f32 %v2312, %v2360
        %2362 = vmatmul.bf16.gmra.mxu0 %v2064
        %v2363 = vpop.f32.mrf.mxu0
        %v2364 = vadd.f32 %v2315, %v2363
        %v2365 = vpop.f32.mrf.mxu0
        %v2366 = vadd.f32 %v2317, %v2365
        %2367 = vmatmul.bf16.gmra.mxu0 %v2067
        %v2368 = vpop.f32.mrf.mxu0
        %v2369 = vadd.f32 %v2320, %v2368
        %v2370 = vpop.f32.mrf.mxu0
        %v2371 = vadd.f32 %v2322, %v2370
        %2372 = vmatmul.bf16.gmra.mxu0 %v2070
        %v2373 = vpop.f32.mrf.mxu0
        %v2374 = vadd.f32 %v2325, %v2373
        %v2375 = vpop.f32.mrf.mxu0
        %v2376 = vadd.f32 %v2327, %v2375
        %2377 = vmatmul.bf16.gmra.mxu0 %v2073
        %v2378 = vpop.f32.mrf.mxu0
        %v2379 = vadd.f32 %v2330, %v2378
        %v2380 = vpop.f32.mrf.mxu0
        %v2381 = vadd.f32 %v2332, %v2380
        %2382 = vmatmul.bf16.gmra.mxu0 %v2076
        %v2383 = vpop.f32.mrf.mxu0
        %v2384 = vadd.f32 %v2335, %v2383
        %v2385 = vpop.f32.mrf.mxu0
        %v2386 = vadd.f32 %v2337, %v2385
        %2387 = vmatmul.bf16.gmra.mxu0 %v2079
        %v2388 = vpop.f32.mrf.mxu0
        %v2389 = vadd.f32 %v2340, %v2388
        %v2390 = vpop.f32.mrf.mxu0
        %v2391 = vadd.f32 %v2342, %v2390
        %2392 = vmatmul.bf16.gmra.mxu0 %v2082
        %v2393 = vpop.f32.mrf.mxu0
        %v2394 = vadd.f32 %v2345, %v2393
        %v2395 = vpop.f32.mrf.mxu0
        %v2396 = vadd.f32 %v2347, %v2395
        %2397 = vdwg.mxu0
        %v2398 = vpack.c.b16 %v1372, %v1370
        %v2399 = vpack.c.b16 %v1596, %v1594
        %v2400 = vpack.c.b16 %v1597, %v1595
        %v2401 = vpack.c.b16 %v1376, %v1374
        %v2402 = vpack.c.b16 %v1600, %v1598
        %v2403 = vpack.c.b16 %v1601, %v1599
        %v2404 = vpack.c.b16 %v1380, %v1378
        %v2405 = vpack.c.b16 %v1604, %v1602
        %v2406 = vpack.c.b16 %v1605, %v1603
        %v2407 = vpack.c.b16 %v1384, %v1382
        %v2408 = vpack.c.b16 %v1608, %v1606
        %v2409 = vpack.c.b16 %v1609, %v1607
        %v2410 = vpack.c.b16 %v1388, %v1386
        %v2411 = vpack.c.b16 %v1612, %v1610
        %v2412 = vpack.c.b16 %v1613, %v1611
        %v2413 = vpack.c.b16 %v1392, %v1390
        %v2414 = vpack.c.b16 %v1616, %v1614
        %v2415 = vpack.c.b16 %v1617, %v1615
        %v2416 = vpack.c.b16 %v1396, %v1394
        %v2417 = vpack.c.b16 %v1620, %v1618
        %v2418 = vpack.c.b16 %v1621, %v1619
        %v2419 = vpack.c.b16 %v1400, %v1398
        %v2420 = vpack.c.b16 %v1624, %v1622
        %v2421 = vpack.c.b16 %v1625, %v1623
        %v2494 = vunpack.c.l.b16 %v1626
        %v2495 = vunpack.c.l.b16 %v1627
        %v2496 = vunpack.c.l.b16 %v1628
        %v2497 = vunpack.c.l.b16 %v1629
        %v2498 = vunpack.c.l.b16 %v1630
        %v2499 = vunpack.c.l.b16 %v1631
        %v2500 = vunpack.c.l.b16 %v1632
        %v2501 = vunpack.c.l.b16 %v1633
        %v2502 = vunpack.c.l.b16 %v1634
        %v2503 = vunpack.c.l.b16 %v1635
        %v2504 = vunpack.c.l.b16 %v1636
        %v2505 = vunpack.c.l.b16 %v1637
        %v2506 = vunpack.c.l.b16 %v1638
        %v2507 = vunpack.c.l.b16 %v1639
        %v2508 = vunpack.c.l.b16 %v1640
        %v2509 = vunpack.c.l.b16 %v1641
        %v2510 = vunpack.c.l.b16 %v1642
        %v2511 = vunpack.c.l.b16 %v1643
        %v2512 = vunpack.c.l.b16 %v1644
        %v2513 = vunpack.c.l.b16 %v1645
        %v2514 = vunpack.c.l.b16 %v1646
        %v2515 = vunpack.c.l.b16 %v1647
        %v2516 = vunpack.c.l.b16 %v1648
        %v2517 = vunpack.c.l.b16 %v1649
        %v2518 = vunpack.c.l.b16 %v1650
        %v2519 = vunpack.c.l.b16 %v1651
        %v2520 = vunpack.c.l.b16 %v1652
        %v2521 = vunpack.c.l.b16 %v1653
        %v2522 = vunpack.c.l.b16 %v1654
        %v2523 = vunpack.c.l.b16 %v1655
        %v2524 = vunpack.c.l.b16 %v1656
        %v2525 = vunpack.c.l.b16 %v1657
        %v2526 = vunpack.c.l.b16 %v1658
        %v2527 = vunpack.c.l.b16 %v1659
        %v2528 = vunpack.c.l.b16 %v1660
        %v2529 = vunpack.c.l.b16 %v1661
        %v2530 = vunpack.c.l.b16 %v1662
        %v2531 = vunpack.c.l.b16 %v1663
        %v2532 = vunpack.c.l.b16 %v1664
        %v2533 = vunpack.c.l.b16 %v1665
        %v2534 = vunpack.c.l.b16 %v1666
        %v2535 = vunpack.c.l.b16 %v1667
        %v2536 = vunpack.c.l.b16 %v1668
        %v2537 = vunpack.c.l.b16 %v1669
        %v2538 = vunpack.c.l.b16 %v1670
        %v2539 = vunpack.c.l.b16 %v1671
        %v2540 = vunpack.c.l.b16 %v1672
        %v2541 = vunpack.c.l.b16 %v1673
        %v2542 = vpack.c.b16 %v2495, %v2494
        %v2543 = vpack.c.b16 %v2497, %v2496
        %v2544 = vpack.c.b16 %v2499, %v2498
        %v2545 = vpack.c.b16 %v2501, %v2500
        %v2546 = vpack.c.b16 %v2503, %v2502
        %v2547 = vpack.c.b16 %v2505, %v2504
        %v2548 = vpack.c.b16 %v2507, %v2506
        %v2549 = vpack.c.b16 %v2509, %v2508
        %v2550 = vpack.c.b16 %v2511, %v2510
        %v2551 = vpack.c.b16 %v2513, %v2512
        %v2552 = vpack.c.b16 %v2515, %v2514
        %v2553 = vpack.c.b16 %v2517, %v2516
        %v2554 = vpack.c.b16 %v2519, %v2518
        %v2555 = vpack.c.b16 %v2521, %v2520
        %v2556 = vpack.c.b16 %v2523, %v2522
        %v2557 = vpack.c.b16 %v2525, %v2524
        %v2558 = vpack.c.b16 %v2527, %v2526
        %v2559 = vpack.c.b16 %v2529, %v2528
        %v2560 = vpack.c.b16 %v2531, %v2530
        %v2561 = vpack.c.b16 %v2533, %v2532
        %v2562 = vpack.c.b16 %v2535, %v2534
        %v2563 = vpack.c.b16 %v2537, %v2536
        %v2564 = vpack.c.b16 %v2539, %v2538
        %v2565 = vpack.c.b16 %v2541, %v2540
        %2590 = vmatpush.bf16.msra.mxu0 %v2549
        %2591 = vmatpush.bf16.msra.mxu0 %v2548
        %2592 = vmatpush.bf16.msra.mxu0 %v2547
        %2593 = vmatpush.bf16.msra.mxu0 %v2546
        %2594 = vmatpush.bf16.msra.mxu0 %v2545
        %2595 = vmatpush.bf16.msra.mxu0 %v2544
        %2596 = vmatpush.bf16.msra.mxu0 %v2543
        %2597 = vmatpush.bf16.msra.mxu0 %v2542
        %2598 = vmatmul.bf16.gmra.mxu0 %v2398
        %v2599 = vpop.f32.mrf.mxu0
        %v2600 = vadd.f32 %v2359, %v2599
        %v2601 = vpop.f32.mrf.mxu0
        %v2602 = vadd.f32 %v2361, %v2601
        %2603 = vmatmul.bf16.gmra.mxu0 %v2401
        %v2604 = vpop.f32.mrf.mxu0
        %v2605 = vadd.f32 %v2364, %v2604
        %v2606 = vpop.f32.mrf.mxu0
        %v2607 = vadd.f32 %v2366, %v2606
        %2608 = vmatmul.bf16.gmra.mxu0 %v2404
        %v2609 = vpop.f32.mrf.mxu0
        %v2610 = vadd.f32 %v2369, %v2609
        %v2611 = vpop.f32.mrf.mxu0
        %v2612 = vadd.f32 %v2371, %v2611
        %2613 = vmatmul.bf16.gmra.mxu0 %v2407
        %v2614 = vpop.f32.mrf.mxu0
        %v2615 = vadd.f32 %v2374, %v2614
        %v2616 = vpop.f32.mrf.mxu0
        %v2617 = vadd.f32 %v2376, %v2616
        %2618 = vmatmul.bf16.gmra.mxu0 %v2410
        %v2619 = vpop.f32.mrf.mxu0
        %v2620 = vadd.f32 %v2379, %v2619
        %v2621 = vpop.f32.mrf.mxu0
        %v2622 = vadd.f32 %v2381, %v2621
        %2623 = vmatmul.bf16.gmra.mxu0 %v2413
        %v2624 = vpop.f32.mrf.mxu0
        %v2625 = vadd.f32 %v2384, %v2624
        %v2626 = vpop.f32.mrf.mxu0
        %v2627 = vadd.f32 %v2386, %v2626
        %2628 = vmatmul.bf16.gmra.mxu0 %v2416
        %v2629 = vpop.f32.mrf.mxu0
        %v2630 = vadd.f32 %v2389, %v2629
        %v2631 = vpop.f32.mrf.mxu0
        %v2632 = vadd.f32 %v2391, %v2631
        %2633 = vmatmul.bf16.gmra.mxu0 %v2419
        %v2634 = vpop.f32.mrf.mxu0
        %v2635 = vadd.f32 %v2394, %v2634
        %v2636 = vpop.f32.mrf.mxu0
        %v2637 = vadd.f32 %v2396, %v2636
        %2638 = vdwg.mxu0
        %2639 = vmatpush.bf16.msra.mxu0 %v2557
        %2640 = vmatpush.bf16.msra.mxu0 %v2556
        %2641 = vmatpush.bf16.msra.mxu0 %v2555
        %2642 = vmatpush.bf16.msra.mxu0 %v2554
        %2643 = vmatpush.bf16.msra.mxu0 %v2553
        %2644 = vmatpush.bf16.msra.mxu0 %v2552
        %2645 = vmatpush.bf16.msra.mxu0 %v2551
        %2646 = vmatpush.bf16.msra.mxu0 %v2550
        %2647 = vmatmul.bf16.gmra.mxu0 %v2399
        %v2648 = vpop.f32.mrf.mxu0
        %v2649 = vadd.f32 %v2600, %v2648
        %v2650 = vpop.f32.mrf.mxu0
        %v2651 = vadd.f32 %v2602, %v2650
        %2652 = vmatmul.bf16.gmra.mxu0 %v2402
        %v2653 = vpop.f32.mrf.mxu0
        %v2654 = vadd.f32 %v2605, %v2653
        %v2655 = vpop.f32.mrf.mxu0
        %v2656 = vadd.f32 %v2607, %v2655
        %2657 = vmatmul.bf16.gmra.mxu0 %v2405
        %v2658 = vpop.f32.mrf.mxu0
        %v2659 = vadd.f32 %v2610, %v2658
        %v2660 = vpop.f32.mrf.mxu0
        %v2661 = vadd.f32 %v2612, %v2660
        %2662 = vmatmul.bf16.gmra.mxu0 %v2408
        %v2663 = vpop.f32.mrf.mxu0
        %v2664 = vadd.f32 %v2615, %v2663
        %v2665 = vpop.f32.mrf.mxu0
        %v2666 = vadd.f32 %v2617, %v2665
        %2667 = vmatmul.bf16.gmra.mxu0 %v2411
        %v2668 = vpop.f32.mrf.mxu0
        %v2669 = vadd.f32 %v2620, %v2668
        %v2670 = vpop.f32.mrf.mxu0
        %v2671 = vadd.f32 %v2622, %v2670
        %2672 = vmatmul.bf16.gmra.mxu0 %v2414
        %v2673 = vpop.f32.mrf.mxu0
        %v2674 = vadd.f32 %v2625, %v2673
        %v2675 = vpop.f32.mrf.mxu0
        %v2676 = vadd.f32 %v2627, %v2675
        %2677 = vmatmul.bf16.gmra.mxu0 %v2417
        %v2678 = vpop.f32.mrf.mxu0
        %v2679 = vadd.f32 %v2630, %v2678
        %v2680 = vpop.f32.mrf.mxu0
        %v2681 = vadd.f32 %v2632, %v2680
        %2682 = vmatmul.bf16.gmra.mxu0 %v2420
        %v2683 = vpop.f32.mrf.mxu0
        %v2684 = vadd.f32 %v2635, %v2683
        %v2685 = vpop.f32.mrf.mxu0
        %v2686 = vadd.f32 %v2637, %v2685
        %2687 = vdwg.mxu0
        %2688 = vmatpush.bf16.msra.mxu0 %v2565
        %2689 = vmatpush.bf16.msra.mxu0 %v2564
        %2690 = vmatpush.bf16.msra.mxu0 %v2563
        %2691 = vmatpush.bf16.msra.mxu0 %v2562
        %2692 = vmatpush.bf16.msra.mxu0 %v2561
        %2693 = vmatpush.bf16.msra.mxu0 %v2560
        %2694 = vmatpush.bf16.msra.mxu0 %v2559
        %2695 = vmatpush.bf16.msra.mxu0 %v2558
        %2696 = vmatmul.bf16.gmra.mxu0 %v2400
        %v2697 = vpop.f32.mrf.mxu0
        %v2698 = vadd.f32 %v2649, %v2697
        %v2699 = vpop.f32.mrf.mxu0
        %v2700 = vadd.f32 %v2651, %v2699
        %2701 = vmatmul.bf16.gmra.mxu0 %v2403
        %v2702 = vpop.f32.mrf.mxu0
        %v2703 = vadd.f32 %v2654, %v2702
        %v2704 = vpop.f32.mrf.mxu0
        %v2705 = vadd.f32 %v2656, %v2704
        %2706 = vmatmul.bf16.gmra.mxu0 %v2406
        %v2707 = vpop.f32.mrf.mxu0
        %v2708 = vadd.f32 %v2659, %v2707
        %v2709 = vpop.f32.mrf.mxu0
        %v2710 = vadd.f32 %v2661, %v2709
        %2711 = vmatmul.bf16.gmra.mxu0 %v2409
        %v2712 = vpop.f32.mrf.mxu0
        %v2713 = vadd.f32 %v2664, %v2712
        %v2714 = vpop.f32.mrf.mxu0
        %v2715 = vadd.f32 %v2666, %v2714
        %2716 = vmatmul.bf16.gmra.mxu0 %v2412
        %v2717 = vpop.f32.mrf.mxu0
        %v2718 = vadd.f32 %v2669, %v2717
        %v2719 = vpop.f32.mrf.mxu0
        %v2720 = vadd.f32 %v2671, %v2719
        %2721 = vmatmul.bf16.gmra.mxu0 %v2415
        %v2722 = vpop.f32.mrf.mxu0
        %v2723 = vadd.f32 %v2674, %v2722
        %v2724 = vpop.f32.mrf.mxu0
        %v2725 = vadd.f32 %v2676, %v2724
        %2726 = vmatmul.bf16.gmra.mxu0 %v2418
        %v2727 = vpop.f32.mrf.mxu0
        %v2728 = vadd.f32 %v2679, %v2727
        %v2729 = vpop.f32.mrf.mxu0
        %v2730 = vadd.f32 %v2681, %v2729
        %2731 = vmatmul.bf16.gmra.mxu0 %v2421
        %v2732 = vpop.f32.mrf.mxu0
        %v2733 = vadd.f32 %v2684, %v2732
        %v2734 = vpop.f32.mrf.mxu0
        %v2735 = vadd.f32 %v2686, %v2734
        %2736 = vdwg.mxu0
        %s2737 = scalar_lea.vmem [#allocation2], 16
        %v2738 = vld [vmem:[%s2737] sm:$0xf]
        %v2739 = vld [vmem:[%s2737 + $0x8] sm:$0xf]
        %v2740 = vld [vmem:[%s2737 + $0x10] sm:$0xf]
        %v2741 = vld [vmem:[%s2737 + $0x18] sm:$0xf]
        %v2742 = vld [vmem:[%s2737 + $0x20] sm:$0xf]
        %v2743 = vld [vmem:[%s2737 + $0x28] sm:$0xf]
        %v2744 = vld [vmem:[%s2737 + $0x30] sm:$0xf]
        %v2745 = vld [vmem:[%s2737 + $0x38] sm:$0xf]
        %v2746 = vld [vmem:[%s2737 + $0x40] sm:$0xf]
        %v2747 = vld [vmem:[%s2737 + $0x48] sm:$0xf]
        %v2748 = vld [vmem:[%s2737 + $0x50] sm:$0xf]
        %v2749 = vld [vmem:[%s2737 + $0x58] sm:$0xf]
        %v2750 = vld [vmem:[%s2737 + $0x60] sm:$0xf]
        %v2751 = vld [vmem:[%s2737 + $0x68] sm:$0xf]
        %v2752 = vld [vmem:[%s2737 + $0x70] sm:$0xf]
        %v2753 = vld [vmem:[%s2737 + $0x78] sm:$0xf]
        %v2754 = vld [vmem:[%s2737 + $0x4] sm:$0x1]
        %v2755 = vld [vmem:[%s2737 + $0xc] sm:$0x1]
        %v2756 = vld [vmem:[%s2737 + $0x14] sm:$0x1]
        %v2757 = vld [vmem:[%s2737 + $0x1c] sm:$0x1]
        %v2758 = vld [vmem:[%s2737 + $0x24] sm:$0x1]
        %v2759 = vld [vmem:[%s2737 + $0x2c] sm:$0x1]
        %v2760 = vld [vmem:[%s2737 + $0x34] sm:$0x1]
        %v2761 = vld [vmem:[%s2737 + $0x3c] sm:$0x1]
        %v2762 = vld [vmem:[%s2737 + $0x44] sm:$0x1]
        %v2763 = vld [vmem:[%s2737 + $0x4c] sm:$0x1]
        %v2764 = vld [vmem:[%s2737 + $0x54] sm:$0x1]
        %v2765 = vld [vmem:[%s2737 + $0x5c] sm:$0x1]
        %v2766 = vld [vmem:[%s2737 + $0x64] sm:$0x1]
        %v2767 = vld [vmem:[%s2737 + $0x6c] sm:$0x1]
        %v2768 = vld [vmem:[%s2737 + $0x74] sm:$0x1]
        %v2769 = vld [vmem:[%s2737 + $0x7c] sm:$0x1]
        %v2770 = vld [vmem:[%s2737] sm:$0xe]
        %v2771 = vld [vmem:[%s2737 + $0x8] sm:$0xe]
        %v2772 = vld [vmem:[%s2737 + $0x10] sm:$0xe]
        %v2773 = vld [vmem:[%s2737 + $0x18] sm:$0xe]
        %v2774 = vld [vmem:[%s2737 + $0x20] sm:$0xe]
        %v2775 = vld [vmem:[%s2737 + $0x28] sm:$0xe]
        %v2776 = vld [vmem:[%s2737 + $0x30] sm:$0xe]
        %v2777 = vld [vmem:[%s2737 + $0x38] sm:$0xe]
        %v2778 = vld [vmem:[%s2737 + $0x40] sm:$0xe]
        %v2779 = vld [vmem:[%s2737 + $0x48] sm:$0xe]
        %v2780 = vld [vmem:[%s2737 + $0x50] sm:$0xe]
        %v2781 = vld [vmem:[%s2737 + $0x58] sm:$0xe]
        %v2782 = vld [vmem:[%s2737 + $0x60] sm:$0xe]
        %v2783 = vld [vmem:[%s2737 + $0x68] sm:$0xe]
        %v2784 = vld [vmem:[%s2737 + $0x70] sm:$0xe]
        %v2785 = vld [vmem:[%s2737 + $0x78] sm:$0xe]
        %v2818 = vunpack.c.l.b16 %v2738
        %v2819 = vunpack.c.l.b16 %v2754
        %v2820 = vunpack.c.l.b16 %v2739
        %v2821 = vunpack.c.l.b16 %v2755
        %v2822 = vunpack.c.l.b16 %v2740
        %v2823 = vunpack.c.l.b16 %v2756
        %v2824 = vunpack.c.l.b16 %v2741
        %v2825 = vunpack.c.l.b16 %v2757
        %v2826 = vunpack.c.l.b16 %v2742
        %v2827 = vunpack.c.l.b16 %v2758
        %v2828 = vunpack.c.l.b16 %v2743
        %v2829 = vunpack.c.l.b16 %v2759
        %v2830 = vunpack.c.l.b16 %v2744
        %v2831 = vunpack.c.l.b16 %v2760
        %v2832 = vunpack.c.l.b16 %v2745
        %v2833 = vunpack.c.l.b16 %v2761
        %v2834 = vunpack.c.l.b16 %v2746
        %v2835 = vunpack.c.l.b16 %v2762
        %v2836 = vunpack.c.l.b16 %v2747
        %v2837 = vunpack.c.l.b16 %v2763
        %v2838 = vunpack.c.l.b16 %v2748
        %v2839 = vunpack.c.l.b16 %v2764
        %v2840 = vunpack.c.l.b16 %v2749
        %v2841 = vunpack.c.l.b16 %v2765
        %v2842 = vunpack.c.l.b16 %v2750
        %v2843 = vunpack.c.l.b16 %v2766
        %v2844 = vunpack.c.l.b16 %v2751
        %v2845 = vunpack.c.l.b16 %v2767
        %v2846 = vunpack.c.l.b16 %v2752
        %v2847 = vunpack.c.l.b16 %v2768
        %v2848 = vunpack.c.l.b16 %v2753
        %v2849 = vunpack.c.l.b16 %v2769
        %v2850 = vpack.c.b16 %v2819, %v2818
        %v2851 = vpack.c.b16 %v2821, %v2820
        %v2852 = vpack.c.b16 %v2823, %v2822
        %v2853 = vpack.c.b16 %v2825, %v2824
        %v2854 = vpack.c.b16 %v2827, %v2826
        %v2855 = vpack.c.b16 %v2829, %v2828
        %v2856 = vpack.c.b16 %v2831, %v2830
        %v2857 = vpack.c.b16 %v2833, %v2832
        %v2858 = vpack.c.b16 %v2835, %v2834
        %v2859 = vpack.c.b16 %v2837, %v2836
        %v2860 = vpack.c.b16 %v2839, %v2838
        %v2861 = vpack.c.b16 %v2841, %v2840
        %v2862 = vpack.c.b16 %v2843, %v2842
        %v2863 = vpack.c.b16 %v2845, %v2844
        %v2864 = vpack.c.b16 %v2847, %v2846
        %v2865 = vpack.c.b16 %v2849, %v2848
        %v2867 = vshrl.u32 %v2850, 16
        %v2869 = vshll.u32 %v2850, 16
        %v2871 = vrot.slane %v2869, 1
        %v2872 = vor.u32 %v2867, %v2871
        %v2874 = vshrl.u32 %v2851, 16
        %v2876 = vshll.u32 %v2851, 16
        %v2878 = vrot.slane %v2876, 1
        %v2879 = vor.u32 %v2874, %v2878
        %v2881 = vshrl.u32 %v2852, 16
        %v2883 = vshll.u32 %v2852, 16
        %v2885 = vrot.slane %v2883, 1
        %v2886 = vor.u32 %v2881, %v2885
        %v2888 = vshrl.u32 %v2853, 16
        %v2890 = vshll.u32 %v2853, 16
        %v2892 = vrot.slane %v2890, 1
        %v2893 = vor.u32 %v2888, %v2892
        %v2895 = vshrl.u32 %v2854, 16
        %v2897 = vshll.u32 %v2854, 16
        %v2899 = vrot.slane %v2897, 1
        %v2900 = vor.u32 %v2895, %v2899
        %v2902 = vshrl.u32 %v2855, 16
        %v2904 = vshll.u32 %v2855, 16
        %v2906 = vrot.slane %v2904, 1
        %v2907 = vor.u32 %v2902, %v2906
        %v2909 = vshrl.u32 %v2856, 16
        %v2911 = vshll.u32 %v2856, 16
        %v2913 = vrot.slane %v2911, 1
        %v2914 = vor.u32 %v2909, %v2913
        %v2916 = vshrl.u32 %v2857, 16
        %v2918 = vshll.u32 %v2857, 16
        %v2920 = vrot.slane %v2918, 1
        %v2921 = vor.u32 %v2916, %v2920
        %v2923 = vshrl.u32 %v2858, 16
        %v2925 = vshll.u32 %v2858, 16
        %v2927 = vrot.slane %v2925, 1
        %v2928 = vor.u32 %v2923, %v2927
        %v2930 = vshrl.u32 %v2859, 16
        %v2932 = vshll.u32 %v2859, 16
        %v2934 = vrot.slane %v2932, 1
        %v2935 = vor.u32 %v2930, %v2934
        %v2937 = vshrl.u32 %v2860, 16
        %v2939 = vshll.u32 %v2860, 16
        %v2941 = vrot.slane %v2939, 1
        %v2942 = vor.u32 %v2937, %v2941
        %v2944 = vshrl.u32 %v2861, 16
        %v2946 = vshll.u32 %v2861, 16
        %v2948 = vrot.slane %v2946, 1
        %v2949 = vor.u32 %v2944, %v2948
        %v2951 = vshrl.u32 %v2862, 16
        %v2953 = vshll.u32 %v2862, 16
        %v2955 = vrot.slane %v2953, 1
        %v2956 = vor.u32 %v2951, %v2955
        %v2958 = vshrl.u32 %v2863, 16
        %v2960 = vshll.u32 %v2863, 16
        %v2962 = vrot.slane %v2960, 1
        %v2963 = vor.u32 %v2958, %v2962
        %v2965 = vshrl.u32 %v2864, 16
        %v2967 = vshll.u32 %v2864, 16
        %v2969 = vrot.slane %v2967, 1
        %v2970 = vor.u32 %v2965, %v2969
        %v2972 = vshrl.u32 %v2865, 16
        %v2974 = vshll.u32 %v2865, 16
        %v2976 = vrot.slane %v2974, 1
        %v2977 = vor.u32 %v2972, %v2976
        %v2994 = vunpack.c.l.b16 %v2770
        %v2995 = vunpack.c.l.b16 %v2771
        %v2996 = vunpack.c.l.b16 %v2772
        %v2997 = vunpack.c.l.b16 %v2773
        %v2998 = vunpack.c.l.b16 %v2774
        %v2999 = vunpack.c.l.b16 %v2775
        %v3000 = vunpack.c.l.b16 %v2776
        %v3001 = vunpack.c.l.b16 %v2777
        %v3002 = vunpack.c.l.b16 %v2778
        %v3003 = vunpack.c.l.b16 %v2779
        %v3004 = vunpack.c.l.b16 %v2780
        %v3005 = vunpack.c.l.b16 %v2781
        %v3006 = vunpack.c.l.b16 %v2782
        %v3007 = vunpack.c.l.b16 %v2783
        %v3008 = vunpack.c.l.b16 %v2784
        %v3009 = vunpack.c.l.b16 %v2785
        %v3010 = vpack.c.b16 %v2819, %v2994
        %v3011 = vpack.c.b16 %v2821, %v2995
        %v3012 = vpack.c.b16 %v2823, %v2996
        %v3013 = vpack.c.b16 %v2825, %v2997
        %v3014 = vpack.c.b16 %v2827, %v2998
        %v3015 = vpack.c.b16 %v2829, %v2999
        %v3016 = vpack.c.b16 %v2831, %v3000
        %v3017 = vpack.c.b16 %v2833, %v3001
        %v3018 = vpack.c.b16 %v2835, %v3002
        %v3019 = vpack.c.b16 %v2837, %v3003
        %v3020 = vpack.c.b16 %v2839, %v3004
        %v3021 = vpack.c.b16 %v2841, %v3005
        %v3022 = vpack.c.b16 %v2843, %v3006
        %v3023 = vpack.c.b16 %v2845, %v3007
        %v3024 = vpack.c.b16 %v2847, %v3008
        %v3025 = vpack.c.b16 %v2849, %v3009
        %v3026 = vrot.slane %v3010, 1
        %v3027 = vrot.slane %v3011, 1
        %v3028 = vrot.slane %v3012, 1
        %v3029 = vrot.slane %v3013, 1
        %v3030 = vrot.slane %v3014, 1
        %v3031 = vrot.slane %v3015, 1
        %v3032 = vrot.slane %v3016, 1
        %v3033 = vrot.slane %v3017, 1
        %v3034 = vrot.slane %v3018, 1
        %v3035 = vrot.slane %v3019, 1
        %v3036 = vrot.slane %v3020, 1
        %v3037 = vrot.slane %v3021, 1
        %v3038 = vrot.slane %v3022, 1
        %v3039 = vrot.slane %v3023, 1
        %v3040 = vrot.slane %v3024, 1
        %v3041 = vrot.slane %v3025, 1
        %v3042 = vunpack.c.l.b16 %v2872
        %v3043 = vunpack.c.l.b16 %v3026
        %v3044 = vunpack.c.l.b16 %v2879
        %v3045 = vunpack.c.l.b16 %v3027
        %v3046 = vunpack.c.l.b16 %v2886
        %v3047 = vunpack.c.l.b16 %v3028
        %v3048 = vunpack.c.l.b16 %v2893
        %v3049 = vunpack.c.l.b16 %v3029
        %v3050 = vunpack.c.l.b16 %v2900
        %v3051 = vunpack.c.l.b16 %v3030
        %v3052 = vunpack.c.l.b16 %v2907
        %v3053 = vunpack.c.l.b16 %v3031
        %v3054 = vunpack.c.l.b16 %v2914
        %v3055 = vunpack.c.l.b16 %v3032
        %v3056 = vunpack.c.l.b16 %v2921
        %v3057 = vunpack.c.l.b16 %v3033
        %v3058 = vunpack.c.l.b16 %v2928
        %v3059 = vunpack.c.l.b16 %v3034
        %v3060 = vunpack.c.l.b16 %v2935
        %v3061 = vunpack.c.l.b16 %v3035
        %v3062 = vunpack.c.l.b16 %v2942
        %v3063 = vunpack.c.l.b16 %v3036
        %v3064 = vunpack.c.l.b16 %v2949
        %v3065 = vunpack.c.l.b16 %v3037
        %v3066 = vunpack.c.l.b16 %v2956
        %v3067 = vunpack.c.l.b16 %v3038
        %v3068 = vunpack.c.l.b16 %v2963
        %v3069 = vunpack.c.l.b16 %v3039
        %v3070 = vunpack.c.l.b16 %v2970
        %v3071 = vunpack.c.l.b16 %v3040
        %v3072 = vunpack.c.l.b16 %v2977
        %v3073 = vunpack.c.l.b16 %v3041
        %s3074 = scalar_lea.vmem [#allocation10], 384
        %v3075 = vld [vmem:[%s3074] sm:$0xf]
        %v3076 = vld [vmem:[%s3074 + $0x4] sm:$0xf]
        %v3077 = vld [vmem:[%s3074 + $0x8] sm:$0xf]
        %v3078 = vld [vmem:[%s3074 + $0xc] sm:$0xf]
        %v3079 = vld [vmem:[%s3074 + $0x10] sm:$0xf]
        %v3080 = vld [vmem:[%s3074 + $0x14] sm:$0xf]
        %v3081 = vld [vmem:[%s3074 + $0x18] sm:$0xf]
        %v3082 = vld [vmem:[%s3074 + $0x1c] sm:$0xf]
        %v3083 = vld [vmem:[%s3074 + $0x20] sm:$0xf]
        %v3084 = vld [vmem:[%s3074 + $0x24] sm:$0xf]
        %v3085 = vld [vmem:[%s3074 + $0x28] sm:$0xf]
        %v3086 = vld [vmem:[%s3074 + $0x2c] sm:$0xf]
        %v3087 = vld [vmem:[%s3074 + $0x30] sm:$0xf]
        %v3088 = vld [vmem:[%s3074 + $0x34] sm:$0xf]
        %v3089 = vld [vmem:[%s3074 + $0x38] sm:$0xf]
        %v3090 = vld [vmem:[%s3074 + $0x3c] sm:$0xf]
        %v3091 = vld [vmem:[%s3074 + $0x40] sm:$0xf]
        %v3092 = vld [vmem:[%s3074 + $0x44] sm:$0xf]
        %v3093 = vld [vmem:[%s3074 + $0x48] sm:$0xf]
        %v3094 = vld [vmem:[%s3074 + $0x4c] sm:$0xf]
        %v3095 = vld [vmem:[%s3074 + $0x50] sm:$0xf]
        %v3096 = vld [vmem:[%s3074 + $0x54] sm:$0xf]
        %v3097 = vld [vmem:[%s3074 + $0x58] sm:$0xf]
        %v3098 = vld [vmem:[%s3074 + $0x5c] sm:$0xf]
        %v3099 = vld [vmem:[%s3074 + $0x60] sm:$0xf]
        %v3100 = vld [vmem:[%s3074 + $0x64] sm:$0xf]
        %v3101 = vld [vmem:[%s3074 + $0x68] sm:$0xf]
        %v3102 = vld [vmem:[%s3074 + $0x6c] sm:$0xf]
        %v3103 = vld [vmem:[%s3074 + $0x70] sm:$0xf]
        %v3104 = vld [vmem:[%s3074 + $0x74] sm:$0xf]
        %v3105 = vld [vmem:[%s3074 + $0x78] sm:$0xf]
        %v3106 = vld [vmem:[%s3074 + $0x7c] sm:$0xf]
        %v3107 = vld [vmem:[%s3074 + $0x80] sm:$0xf]
        %v3108 = vld [vmem:[%s3074 + $0x84] sm:$0xf]
        %v3109 = vld [vmem:[%s3074 + $0x88] sm:$0xf]
        %v3110 = vld [vmem:[%s3074 + $0x8c] sm:$0xf]
        %v3111 = vld [vmem:[%s3074 + $0x90] sm:$0xf]
        %v3112 = vld [vmem:[%s3074 + $0x94] sm:$0xf]
        %v3113 = vld [vmem:[%s3074 + $0x98] sm:$0xf]
        %v3114 = vld [vmem:[%s3074 + $0x9c] sm:$0xf]
        %v3115 = vld [vmem:[%s3074 + $0xa0] sm:$0xf]
        %v3116 = vld [vmem:[%s3074 + $0xa4] sm:$0xf]
        %v3117 = vld [vmem:[%s3074 + $0xa8] sm:$0xf]
        %v3118 = vld [vmem:[%s3074 + $0xac] sm:$0xf]
        %v3119 = vld [vmem:[%s3074 + $0xb0] sm:$0xf]
        %v3120 = vld [vmem:[%s3074 + $0xb4] sm:$0xf]
        %v3121 = vld [vmem:[%s3074 + $0xb8] sm:$0xf]
        %v3122 = vld [vmem:[%s3074 + $0xbc] sm:$0xf]
        %v3123 = vpack.c.b16 %v2820, %v2818
        %v3124 = vpack.c.b16 %v3044, %v3042
        %v3125 = vpack.c.b16 %v3045, %v3043
        %v3126 = vpack.c.b16 %v2824, %v2822
        %v3127 = vpack.c.b16 %v3048, %v3046
        %v3128 = vpack.c.b16 %v3049, %v3047
        %v3129 = vpack.c.b16 %v2828, %v2826
        %v3130 = vpack.c.b16 %v3052, %v3050
        %v3131 = vpack.c.b16 %v3053, %v3051
        %v3132 = vpack.c.b16 %v2832, %v2830
        %v3133 = vpack.c.b16 %v3056, %v3054
        %v3134 = vpack.c.b16 %v3057, %v3055
        %v3135 = vpack.c.b16 %v2836, %v2834
        %v3136 = vpack.c.b16 %v3060, %v3058
        %v3137 = vpack.c.b16 %v3061, %v3059
        %v3138 = vpack.c.b16 %v2840, %v2838
        %v3139 = vpack.c.b16 %v3064, %v3062
        %v3140 = vpack.c.b16 %v3065, %v3063
        %v3141 = vpack.c.b16 %v2844, %v2842
        %v3142 = vpack.c.b16 %v3068, %v3066
        %v3143 = vpack.c.b16 %v3069, %v3067
        %v3144 = vpack.c.b16 %v2848, %v2846
        %v3145 = vpack.c.b16 %v3072, %v3070
        %v3146 = vpack.c.b16 %v3073, %v3071
        %v3219 = vunpack.c.l.b16 %v3075
        %v3220 = vunpack.c.l.b16 %v3076
        %v3221 = vunpack.c.l.b16 %v3077
        %v3222 = vunpack.c.l.b16 %v3078
        %v3223 = vunpack.c.l.b16 %v3079
        %v3224 = vunpack.c.l.b16 %v3080
        %v3225 = vunpack.c.l.b16 %v3081
        %v3226 = vunpack.c.l.b16 %v3082
        %v3227 = vunpack.c.l.b16 %v3083
        %v3228 = vunpack.c.l.b16 %v3084
        %v3229 = vunpack.c.l.b16 %v3085
        %v3230 = vunpack.c.l.b16 %v3086
        %v3231 = vunpack.c.l.b16 %v3087
        %v3232 = vunpack.c.l.b16 %v3088
        %v3233 = vunpack.c.l.b16 %v3089
        %v3234 = vunpack.c.l.b16 %v3090
        %v3235 = vunpack.c.l.b16 %v3091
        %v3236 = vunpack.c.l.b16 %v3092
        %v3237 = vunpack.c.l.b16 %v3093
        %v3238 = vunpack.c.l.b16 %v3094
        %v3239 = vunpack.c.l.b16 %v3095
        %v3240 = vunpack.c.l.b16 %v3096
        %v3241 = vunpack.c.l.b16 %v3097
        %v3242 = vunpack.c.l.b16 %v3098
        %v3243 = vunpack.c.l.b16 %v3099
        %v3244 = vunpack.c.l.b16 %v3100
        %v3245 = vunpack.c.l.b16 %v3101
        %v3246 = vunpack.c.l.b16 %v3102
        %v3247 = vunpack.c.l.b16 %v3103
        %v3248 = vunpack.c.l.b16 %v3104
        %v3249 = vunpack.c.l.b16 %v3105
        %v3250 = vunpack.c.l.b16 %v3106
        %v3251 = vunpack.c.l.b16 %v3107
        %v3252 = vunpack.c.l.b16 %v3108
        %v3253 = vunpack.c.l.b16 %v3109
        %v3254 = vunpack.c.l.b16 %v3110
        %v3255 = vunpack.c.l.b16 %v3111
        %v3256 = vunpack.c.l.b16 %v3112
        %v3257 = vunpack.c.l.b16 %v3113
        %v3258 = vunpack.c.l.b16 %v3114
        %v3259 = vunpack.c.l.b16 %v3115
        %v3260 = vunpack.c.l.b16 %v3116
        %v3261 = vunpack.c.l.b16 %v3117
        %v3262 = vunpack.c.l.b16 %v3118
        %v3263 = vunpack.c.l.b16 %v3119
        %v3264 = vunpack.c.l.b16 %v3120
        %v3265 = vunpack.c.l.b16 %v3121
        %v3266 = vunpack.c.l.b16 %v3122
        %v3267 = vpack.c.b16 %v3220, %v3219
        %v3268 = vpack.c.b16 %v3222, %v3221
        %v3269 = vpack.c.b16 %v3224, %v3223
        %v3270 = vpack.c.b16 %v3226, %v3225
        %v3271 = vpack.c.b16 %v3228, %v3227
        %v3272 = vpack.c.b16 %v3230, %v3229
        %v3273 = vpack.c.b16 %v3232, %v3231
        %v3274 = vpack.c.b16 %v3234, %v3233
        %v3275 = vpack.c.b16 %v3236, %v3235
        %v3276 = vpack.c.b16 %v3238, %v3237
        %v3277 = vpack.c.b16 %v3240, %v3239
        %v3278 = vpack.c.b16 %v3242, %v3241
        %v3279 = vpack.c.b16 %v3244, %v3243
        %v3280 = vpack.c.b16 %v3246, %v3245
        %v3281 = vpack.c.b16 %v3248, %v3247
        %v3282 = vpack.c.b16 %v3250, %v3249
        %v3283 = vpack.c.b16 %v3252, %v3251
        %v3284 = vpack.c.b16 %v3254, %v3253
        %v3285 = vpack.c.b16 %v3256, %v3255
        %v3286 = vpack.c.b16 %v3258, %v3257
        %v3287 = vpack.c.b16 %v3260, %v3259
        %v3288 = vpack.c.b16 %v3262, %v3261
        %v3289 = vpack.c.b16 %v3264, %v3263
        %v3290 = vpack.c.b16 %v3266, %v3265
        %3315 = vmatpush.bf16.msra.mxu0 %v3274
        %3316 = vmatpush.bf16.msra.mxu0 %v3273
        %3317 = vmatpush.bf16.msra.mxu0 %v3272
        %3318 = vmatpush.bf16.msra.mxu0 %v3271
        %3319 = vmatpush.bf16.msra.mxu0 %v3270
        %3320 = vmatpush.bf16.msra.mxu0 %v3269
        %3321 = vmatpush.bf16.msra.mxu0 %v3268
        %3322 = vmatpush.bf16.msra.mxu0 %v3267
        %3323 = vmatmul.bf16.gmra.mxu0 %v3123
        %v3324 = vpop.f32.mrf.mxu0
        %v3325 = vadd.f32 0.0, %v3324
        %v3326 = vpop.f32.mrf.mxu0
        %v3327 = vadd.f32 0.0, %v3326
        %3328 = vmatmul.bf16.gmra.mxu0 %v3126
        %v3329 = vpop.f32.mrf.mxu0
        %v3330 = vadd.f32 0.0, %v3329
        %v3331 = vpop.f32.mrf.mxu0
        %v3332 = vadd.f32 0.0, %v3331
        %3333 = vmatmul.bf16.gmra.mxu0 %v3129
        %v3334 = vpop.f32.mrf.mxu0
        %v3335 = vadd.f32 0.0, %v3334
        %v3336 = vpop.f32.mrf.mxu0
        %v3337 = vadd.f32 0.0, %v3336
        %3338 = vmatmul.bf16.gmra.mxu0 %v3132
        %v3339 = vpop.f32.mrf.mxu0
        %v3340 = vadd.f32 0.0, %v3339
        %v3341 = vpop.f32.mrf.mxu0
        %v3342 = vadd.f32 0.0, %v3341
        %3343 = vmatmul.bf16.gmra.mxu0 %v3135
        %v3344 = vpop.f32.mrf.mxu0
        %v3345 = vadd.f32 0.0, %v3344
        %v3346 = vpop.f32.mrf.mxu0
        %v3347 = vadd.f32 0.0, %v3346
        %3348 = vmatmul.bf16.gmra.mxu0 %v3138
        %v3349 = vpop.f32.mrf.mxu0
        %v3350 = vadd.f32 0.0, %v3349
        %v3351 = vpop.f32.mrf.mxu0
        %v3352 = vadd.f32 0.0, %v3351
        %3353 = vmatmul.bf16.gmra.mxu0 %v3141
        %v3354 = vpop.f32.mrf.mxu0
        %v3355 = vadd.f32 0.0, %v3354
        %v3356 = vpop.f32.mrf.mxu0
        %v3357 = vadd.f32 0.0, %v3356
        %3358 = vmatmul.bf16.gmra.mxu0 %v3144
        %v3359 = vpop.f32.mrf.mxu0
        %v3360 = vadd.f32 0.0, %v3359
        %v3361 = vpop.f32.mrf.mxu0
        %v3362 = vadd.f32 0.0, %v3361
        %3363 = vdwg.mxu0
        %3364 = vmatpush.bf16.msra.mxu0 %v3282
        %3365 = vmatpush.bf16.msra.mxu0 %v3281
        %3366 = vmatpush.bf16.msra.mxu0 %v3280
        %3367 = vmatpush.bf16.msra.mxu0 %v3279
        %3368 = vmatpush.bf16.msra.mxu0 %v3278
        %3369 = vmatpush.bf16.msra.mxu0 %v3277
        %3370 = vmatpush.bf16.msra.mxu0 %v3276
        %3371 = vmatpush.bf16.msra.mxu0 %v3275
        %3372 = vmatmul.bf16.gmra.mxu0 %v3124
        %v3373 = vpop.f32.mrf.mxu0
        %v3374 = vadd.f32 %v3325, %v3373
        %v3375 = vpop.f32.mrf.mxu0
        %v3376 = vadd.f32 %v3327, %v3375
        %3377 = vmatmul.bf16.gmra.mxu0 %v3127
        %v3378 = vpop.f32.mrf.mxu0
        %v3379 = vadd.f32 %v3330, %v3378
        %v3380 = vpop.f32.mrf.mxu0
        %v3381 = vadd.f32 %v3332, %v3380
        %3382 = vmatmul.bf16.gmra.mxu0 %v3130
        %v3383 = vpop.f32.mrf.mxu0
        %v3384 = vadd.f32 %v3335, %v3383
        %v3385 = vpop.f32.mrf.mxu0
        %v3386 = vadd.f32 %v3337, %v3385
        %3387 = vmatmul.bf16.gmra.mxu0 %v3133
        %v3388 = vpop.f32.mrf.mxu0
        %v3389 = vadd.f32 %v3340, %v3388
        %v3390 = vpop.f32.mrf.mxu0
        %v3391 = vadd.f32 %v3342, %v3390
        %3392 = vmatmul.bf16.gmra.mxu0 %v3136
        %v3393 = vpop.f32.mrf.mxu0
        %v3394 = vadd.f32 %v3345, %v3393
        %v3395 = vpop.f32.mrf.mxu0
        %v3396 = vadd.f32 %v3347, %v3395
        %3397 = vmatmul.bf16.gmra.mxu0 %v3139
        %v3398 = vpop.f32.mrf.mxu0
        %v3399 = vadd.f32 %v3350, %v3398
        %v3400 = vpop.f32.mrf.mxu0
        %v3401 = vadd.f32 %v3352, %v3400
        %3402 = vmatmul.bf16.gmra.mxu0 %v3142
        %v3403 = vpop.f32.mrf.mxu0
        %v3404 = vadd.f32 %v3355, %v3403
        %v3405 = vpop.f32.mrf.mxu0
        %v3406 = vadd.f32 %v3357, %v3405
        %3407 = vmatmul.bf16.gmra.mxu0 %v3145
        %v3408 = vpop.f32.mrf.mxu0
        %v3409 = vadd.f32 %v3360, %v3408
        %v3410 = vpop.f32.mrf.mxu0
        %v3411 = vadd.f32 %v3362, %v3410
        %3412 = vdwg.mxu0
        %3413 = vmatpush.bf16.msra.mxu0 %v3290
        %3414 = vmatpush.bf16.msra.mxu0 %v3289
        %3415 = vmatpush.bf16.msra.mxu0 %v3288
        %3416 = vmatpush.bf16.msra.mxu0 %v3287
        %3417 = vmatpush.bf16.msra.mxu0 %v3286
        %3418 = vmatpush.bf16.msra.mxu0 %v3285
        %3419 = vmatpush.bf16.msra.mxu0 %v3284
        %3420 = vmatpush.bf16.msra.mxu0 %v3283
        %3421 = vmatmul.bf16.gmra.mxu0 %v3125
        %v3422 = vpop.f32.mrf.mxu0
        %v3423 = vadd.f32 %v3374, %v3422
        %v3424 = vpop.f32.mrf.mxu0
        %v3425 = vadd.f32 %v3376, %v3424
        %3426 = vmatmul.bf16.gmra.mxu0 %v3128
        %v3427 = vpop.f32.mrf.mxu0
        %v3428 = vadd.f32 %v3379, %v3427
        %v3429 = vpop.f32.mrf.mxu0
        %v3430 = vadd.f32 %v3381, %v3429
        %3431 = vmatmul.bf16.gmra.mxu0 %v3131
        %v3432 = vpop.f32.mrf.mxu0
        %v3433 = vadd.f32 %v3384, %v3432
        %v3434 = vpop.f32.mrf.mxu0
        %v3435 = vadd.f32 %v3386, %v3434
        %3436 = vmatmul.bf16.gmra.mxu0 %v3134
        %v3437 = vpop.f32.mrf.mxu0
        %v3438 = vadd.f32 %v3389, %v3437
        %v3439 = vpop.f32.mrf.mxu0
        %v3440 = vadd.f32 %v3391, %v3439
        %3441 = vmatmul.bf16.gmra.mxu0 %v3137
        %v3442 = vpop.f32.mrf.mxu0
        %v3443 = vadd.f32 %v3394, %v3442
        %v3444 = vpop.f32.mrf.mxu0
        %v3445 = vadd.f32 %v3396, %v3444
        %3446 = vmatmul.bf16.gmra.mxu0 %v3140
        %v3447 = vpop.f32.mrf.mxu0
        %v3448 = vadd.f32 %v3399, %v3447
        %v3449 = vpop.f32.mrf.mxu0
        %v3450 = vadd.f32 %v3401, %v3449
        %3451 = vmatmul.bf16.gmra.mxu0 %v3143
        %v3452 = vpop.f32.mrf.mxu0
        %v3453 = vadd.f32 %v3404, %v3452
        %v3454 = vpop.f32.mrf.mxu0
        %v3455 = vadd.f32 %v3406, %v3454
        %3456 = vmatmul.bf16.gmra.mxu0 %v3146
        %v3457 = vpop.f32.mrf.mxu0
        %v3458 = vadd.f32 %v3409, %v3457
        %v3459 = vpop.f32.mrf.mxu0
        %v3460 = vadd.f32 %v3411, %v3459
        %3461 = vdwg.mxu0
        %v3462 = vadd.f32 %v2698, %v3423
        %v3463 = vadd.f32 %v2700, %v3425
        %v3464 = vadd.f32 %v2703, %v3428
        %v3465 = vadd.f32 %v2705, %v3430
        %v3466 = vadd.f32 %v2708, %v3433
        %v3467 = vadd.f32 %v2710, %v3435
        %v3468 = vadd.f32 %v2713, %v3438
        %v3469 = vadd.f32 %v2715, %v3440
        %v3470 = vadd.f32 %v2718, %v3443
        %v3471 = vadd.f32 %v2720, %v3445
        %v3472 = vadd.f32 %v2723, %v3448
        %v3473 = vadd.f32 %v2725, %v3450
        %v3474 = vadd.f32 %v2728, %v3453
        %v3475 = vadd.f32 %v2730, %v3455
        %v3476 = vadd.f32 %v2733, %v3458
        %v3477 = vadd.f32 %v2735, %v3460
        %v3478 = vld [vmem:[%s5] sm:$0x1]
        %v3480 = vperm.slane %v3478, 0
        %v3482 = vadd.f32 %v3462, %v3480
        %v3483 = vadd.f32 %v3463, %v3480
        %v3484 = vadd.f32 %v3464, %v3480
        %v3485 = vadd.f32 %v3465, %v3480
        %v3486 = vadd.f32 %v3466, %v3480
        %v3487 = vadd.f32 %v3467, %v3480
        %v3488 = vadd.f32 %v3468, %v3480
        %v3489 = vadd.f32 %v3469, %v3480
        %v3490 = vadd.f32 %v3470, %v3480
        %v3491 = vadd.f32 %v3471, %v3480
        %v3492 = vadd.f32 %v3472, %v3480
        %v3493 = vadd.f32 %v3473, %v3480
        %v3494 = vadd.f32 %v3474, %v3480
        %v3495 = vadd.f32 %v3475, %v3480
        %v3496 = vadd.f32 %v3476, %v3480
        %v3497 = vadd.f32 %v3477, %v3480
        %v3498 = vmax.f32 %v3482, 0.0
        %v3499 = vmax.f32 %v3483, 0.0
        %v3500 = vmax.f32 %v3484, 0.0
        %v3501 = vmax.f32 %v3485, 0.0
        %v3502 = vmax.f32 %v3486, 0.0
        %v3503 = vmax.f32 %v3487, 0.0
        %v3504 = vmax.f32 %v3488, 0.0
        %v3505 = vmax.f32 %v3489, 0.0
        %v3506 = vmax.f32 %v3490, 0.0
        %v3507 = vmax.f32 %v3491, 0.0
        %v3508 = vmax.f32 %v3492, 0.0
        %v3509 = vmax.f32 %v3493, 0.0
        %v3510 = vmax.f32 %v3494, 0.0
        %v3511 = vmax.f32 %v3495, 0.0
        %v3512 = vmax.f32 %v3496, 0.0
        %v3513 = vmax.f32 %v3497, 0.0
        %v3514 = vmin.f32 %v3498, 6.0
        %v3515 = vmin.f32 %v3499, 6.0
        %v3516 = vmin.f32 %v3500, 6.0
        %v3517 = vmin.f32 %v3501, 6.0
        %v3518 = vmin.f32 %v3502, 6.0
        %v3519 = vmin.f32 %v3503, 6.0
        %v3520 = vmin.f32 %v3504, 6.0
        %v3521 = vmin.f32 %v3505, 6.0
        %v3522 = vmin.f32 %v3506, 6.0
        %v3523 = vmin.f32 %v3507, 6.0
        %v3524 = vmin.f32 %v3508, 6.0
        %v3525 = vmin.f32 %v3509, 6.0
        %v3526 = vmin.f32 %v3510, 6.0
        %v3527 = vmin.f32 %v3511, 6.0
        %v3528 = vmin.f32 %v3512, 6.0
        %v3529 = vmin.f32 %v3513, 6.0
        %3530 = vst [vmem:[%s343] sm:$0xff] %v3514
        %3531 = vst [vmem:[%s343 + $0x8] sm:$0xff] %v3515
        %3532 = vst [vmem:[%s343 + $0x10] sm:$0xff] %v3516
        %3533 = vst [vmem:[%s343 + $0x18] sm:$0xff] %v3517
        %3534 = vst [vmem:[%s343 + $0x20] sm:$0xff] %v3518
        %3535 = vst [vmem:[%s343 + $0x28] sm:$0xff] %v3519
        %3536 = vst [vmem:[%s343 + $0x30] sm:$0xff] %v3520
        %3537 = vst [vmem:[%s343 + $0x38] sm:$0xff] %v3521
        %3538 = vst [vmem:[%s343 + $0x40] sm:$0xff] %v3522
        %3539 = vst [vmem:[%s343 + $0x48] sm:$0xff] %v3523
        %3540 = vst [vmem:[%s343 + $0x50] sm:$0xff] %v3524
        %3541 = vst [vmem:[%s343 + $0x58] sm:$0xff] %v3525
        %3542 = vst [vmem:[%s343 + $0x60] sm:$0xff] %v3526
        %3543 = vst [vmem:[%s343 + $0x68] sm:$0xff] %v3527
        %3544 = vst [vmem:[%s343 + $0x70] sm:$0xff] %v3528
        %3545 = vst [vmem:[%s343 + $0x78] sm:$0xff] %v3529
        %s3546 = sand.u32 %s171, 1
        %s3547 = scalar_lea.sflag [#allocation5], %s3546
        %s3548 = sand.u32 %s171, 1
        %s3549 = smul.addr %s3548, 128
        %s3550 = scalar_lea.vmem [#allocation11], %s3549
        // Predicated region
        $region61: #{tpu_custom_call.1} parent=43 // pred_check
          %p3551 = pneg %p181
        $region62: #{tpu_custom_call.1} parent=43 // pred_check_branch
          %3553 = sbr.rel (%p3551) target = $region64
        $region63: #{tpu_custom_call.1} parent=43 // pred_region
          %3555 = vsyncadd %s3547, 0
          %s3556 = smul.addr %s27, 16
          %s3557 = smul.addr %s3556, 8
          %s3558 = scalar_lea.hbm %s6, %s3557
          %s3559 = sshll.u32 %s3550, 4
          %s3560 = int_to_ptr.vmem [resolvable:$true] %s3559
          %s3561 = sshll.u32 %s3558, 4
          %s3562 = int_to_ptr.hbm [resolvable:$true] %s3561
          %3567 = dma.vmem_to_hbm [thread:$0]  %s3560, 2048, %s3562, %s3547, 128, 128, 8
        $region64: #{tpu_custom_call.1} parent=43 // pred_fallthru
          _
      $region44: #{tpu_custom_call.1} parent=5 // pred_fallthru
        _
      %p3568 = scmp.le.s32.totalorder 2, %s22
      // Predicated region
      $region65: #{tpu_custom_call.1} parent=5 // pred_check
        %p3569 = pneg %p3568
      $region66: #{tpu_custom_call.1} parent=5 // pred_check_branch
        %3571 = sbr.rel (%p3569) target = $region68
      $region67: #{tpu_custom_call.1} parent=5 // pred_region
        %s3572 = ssub.s32 %s22, 2
        // Predicated region
        $region69: #{tpu_custom_call.1} parent=67 // pred_check
          %p3573 = pneg %p187
        $region70: #{tpu_custom_call.1} parent=67 // pred_check_branch
          %3575 = sbr.rel (%p3573) target = $region72
        $region71: #{tpu_custom_call.1} parent=67 // pred_region
          %s3576 = sand.u32 %s172, 1
          %s3577 = scalar_lea.sflag [#allocation5], %s3576
          %s3578 = sand.u32 %s172, 1
          %s3579 = smul.addr %s3578, 128
          %s3580 = scalar_lea.vmem [#allocation11], %s3579
          %3582 = dma.done %s3577, 2048
        $region72: #{tpu_custom_call.1} parent=67 // pred_fallthru
          _
      $region68: #{tpu_custom_call.1} parent=5 // pred_fallthru
        _
    $region6: #{tpu_custom_call.1} parent=1 // loop_footer
      %s26 = sadd.s32 1, %s22
    $region7: #{tpu_custom_call.1} parent=1 // loop_footer_branch
      %21 = sbr.rel target = $region3
    $region8: #{tpu_custom_call.1} parent=1 // loop_exit
      _
    %3583 = vsyncpa [#allocation4], 1
    %s3584 = scalar_lea.sflag [#allocation4], 1
    %3585 = vsyncpa %s3584, 1
    %3586 = vsyncpa [#allocation9], 1
    %s3587 = scalar_lea.sflag [#allocation9], 1
    %3588 = vsyncpa %s3587, 1
    %3589 = vsyncpa [#allocation5], 1
    %s3590 = scalar_lea.sflag [#allocation5], 1
    %3591 = vsyncpa %s3590, 1
    %3592 = vsyncpa [#allocation6], 1
    %s3593 = scalar_lea.sflag [#allocation6], 1
    %3594 = vsyncpa %s3593, 1

</llo_original>
